<compile_context>
chip_gen: v7x
topology: tpu7x:2x2x1
jax: 0.10.0
libtpu: 0.0.40
codegen_flags: <defaults>
</compile_context>

<pallas_src>
import math
import functools

import jax
import jax.numpy as jnp
from jax.experimental import pallas as pl
from jax.experimental.pallas import tpu as pltpu

# ----------------------------- config -------------------------------------
CONFIG = dict(
    vocab_size=100,
    max_seq_len=8,
    embedding_dim=32,
    transformer_dim=32,
    transformer_hidden_dim=64,
    num_head=4,
    num_layers=2,
    dropout_prob=0.0,      # inference-mode dropout == identity
    tied_weights=False,
)
LN_EPS = 1e-5
NEG_INF = -1e9


# --------------------------- kernel helpers --------------------------------
def _layernorm(x, g, b):
    # x: (N, D) f32; g, b: (1, D) f32
    mu = jnp.mean(x, axis=-1, keepdims=True)
    xc = x - mu
    var = jnp.mean(xc * xc, axis=-1, keepdims=True)
    return xc * jax.lax.rsqrt(var + LN_EPS) * g + b


def _gelu_exact(x):
    # matches torch.nn.GELU() default (erf form)
    return 0.5 * x * (1.0 + jax.lax.erf(x * (1.0 / math.sqrt(2.0))))


# ------------------------ fused full-forward kernel -------------------------
def fused_forward_kernel(x0_ref, bias_ref, mask_row_ref,
                         ln1g_ref, ln1b_ref, wqkv_ref, bqkv_ref,
                         wo_ref, bo_ref, ln2g_ref, ln2b_ref,
                         w1_ref, b1_ref, w2_ref, b2_ref,
                         fng_ref, fnb_ref, o_ref,
                         *, num_layers, num_heads):
    x = x0_ref[...]                                   # (BS, D) f32, emb+pos
    bias = bias_ref[...]                              # (BS, BS) f32 additive mask
    BS, D = x.shape
    hd = D // num_heads
    scale = 1.0 / math.sqrt(hd)

    for l in range(num_layers):                       # static unroll over layers
        # ---- pre-norm + fused multi-head attention ----
        xn = _layernorm(x, ln1g_ref[l], ln1b_ref[l])
        qkv = jnp.dot(xn.astype(jnp.bfloat16), wqkv_ref[l],
                      preferred_element_type=jnp.float32) + bqkv_ref[l]
        q = qkv[:, 0 * D:1 * D] * scale               # softmax scale folded once
        k = qkv[:, 1 * D:2 * D]
        v = qkv[:, 2 * D:3 * D]

        # (BS, D) -> (H, BS, hd); transpose in f32 then cast operands to bf16
        q3 = q.reshape(BS, num_heads, hd).transpose(1, 0, 2).astype(jnp.bfloat16)
        k3 = k.reshape(BS, num_heads, hd).transpose(1, 0, 2).astype(jnp.bfloat16)
        v3 = v.reshape(BS, num_heads, hd).transpose(1, 0, 2).astype(jnp.bfloat16)

        # one batched scores matmul for all heads (bf16 in, f32 acc)
        s = jnp.einsum('hqd,hkd->hqk', q3, k3,
                       preferred_element_type=jnp.float32)        # (H, BS, BS)
        s = s + bias                                              # broadcast over H
        s = s - jnp.max(s, axis=-1, keepdims=True)
        p = jnp.exp(s)
        p = p * pl.reciprocal(jnp.sum(p, axis=-1, keepdims=True), approx=True)

        # one batched context matmul for all heads
        ctx = jnp.einsum('hqk,hkd->hqd', p.astype(jnp.bfloat16), v3,
                         preferred_element_type=jnp.float32)      # (H, BS, hd)
        ctx = ctx.transpose(1, 0, 2).reshape(BS, D)               # (BS, D) f32

        # single fused output projection (was 4 per-head accumulations)
        attn_out = jnp.dot(ctx.astype(jnp.bfloat16), wo_ref[l],
                           preferred_element_type=jnp.float32) + bo_ref[l]
        x = x + attn_out                                          # dropout1 == id

        # ---- pre-norm + MLP ----
        xn2 = _layernorm(x, ln2g_ref[l], ln2b_ref[l])
        h1 = jnp.dot(xn2.astype(jnp.bfloat16), w1_ref[l],
                     preferred_element_type=jnp.float32) + b1_ref[l]
        h1 = _gelu_exact(h1)
        x = x + jnp.dot(h1.astype(jnp.bfloat16), w2_ref[l],
                        preferred_element_type=jnp.float32) + b2_ref[l]

    # ---- final LayerNorm * mask[:, :, None] ----
    y = _layernorm(x, fng_ref[...], fnb_ref[...])
    o_ref[...] = (y * mask_row_ref[...]).astype(o_ref.dtype)


# ------------------------------ full model ---------------------------------
def model_forward(params, input_ids, mask=None):
    B, S = input_ids.shape
    D = params['word_emb'].shape[-1]
    if mask is None:
        mask = jnp.ones_like(input_ids)
    mask_f = mask.astype(jnp.float32).reshape(B * S)
    ids_flat = input_ids.reshape(B * S).astype(jnp.int32)

    # --- embedding gather + positional add in the wrapper (rides the DMA) ---
    x0 = (params['word_emb'][ids_flat]
          + jnp.tile(params['pos_emb'][:S], (B, 1))).astype(jnp.float32)

    # --- additive attention bias: block-diag over batch + key padding mask ---
    bid = jnp.arange(B * S, dtype=jnp.int32) // S
    valid = (bid[:, None] == bid[None, :]) & (mask_f[None, :] > 0.0)
    bias = jnp.where(valid, jnp.float32(0.0), jnp.float32(NEG_INF))  # (BS, BS)

    mask_row = mask_f.reshape(B * S, 1)      # per-row scaling of final output

    kernel = functools.partial(
        fused_forward_kernel,
        num_layers=CONFIG['num_layers'],
        num_heads=CONFIG['num_head'])

    vmem = pl.BlockSpec(memory_space=pltpu.MemorySpace.VMEM)

    out = pl.pallas_call(
        kernel,
        out_shape=jax.ShapeDtypeStruct((B * S, D), jnp.float32),
        in_specs=[vmem, vmem, vmem,          # x0, bias, mask_row
                  vmem, vmem, vmem, vmem,    # ln1 g/b, Wqkv, bqkv
                  vmem, vmem, vmem, vmem,    # Wo, bo, ln2 g/b
                  vmem, vmem, vmem, vmem,    # W1, b1, W2, b2
                  vmem, vmem],               # final ln g/b
        out_specs=vmem,
    )(x0, bias, mask_row,
      params['ln1_g'], params['ln1_b'], params['wqkv'], params['bqkv'],
      params['wo'], params['bo'], params['ln2_g'], params['ln2_b'],
      params['w1'], params['b1'], params['w2'], params['b2'],
      params['final_ln_g'], params['final_ln_b'])

    x = out.reshape(B, S, D)
    # is_attn=False / mat_lst=[] path of the reference: both lists stay empty.
    # TODO(synk): attn / attn_loss of the (undefined) Attention module are not
    # materialized; CUDA event timing / nvtx ranges have no TPU equivalent.
    return x, [], []


# --------------------------- parameter init --------------------------------
def init_params(key, cfg):
    D = cfg['transformer_dim']
    H = cfg['transformer_hidden_dim']
    V = cfg['vocab_size']
    Smax = cfg['max_seq_len']
    L = cfg['num_layers']

    keys = iter(jax.random.split(key, 64))

    def nrm(shape, std=0.02):
        return jax.random.normal(next(keys), shape, jnp.float32) * std

    params = dict(
        word_emb=nrm((V, D)),                # un-padded table; gathered in XLA
        pos_emb=nrm((Smax, D)),
        ln1_g=jnp.ones((L, 1, D), jnp.float32),
        ln1_b=jnp.zeros((L, 1, D), jnp.float32),
        wqkv=jnp.stack([jnp.concatenate([nrm((D, D)), nrm((D, D)), nrm((D, D))],
                                        axis=1) for _ in range(L)]
                       ).astype(jnp.bfloat16),                 # (L, D, 3D)
        bqkv=jnp.zeros((L, 1, 3 * D), jnp.float32),
        wo=jnp.stack([nrm((D, D)) for _ in range(L)]).astype(jnp.bfloat16),
        bo=jnp.zeros((L, 1, D), jnp.float32),
        ln2_g=jnp.ones((L, 1, D), jnp.float32),
        ln2_b=jnp.zeros((L, 1, D), jnp.float32),
        w1=jnp.stack([nrm((D, H)) for _ in range(L)]).astype(jnp.bfloat16),
        b1=jnp.zeros((L, 1, H), jnp.float32),
        w2=jnp.stack([nrm((H, D)) for _ in range(L)]).astype(jnp.bfloat16),
        b2=jnp.zeros((L, 1, D), jnp.float32),
        final_ln_g=jnp.ones((1, D), jnp.float32),
        final_ln_b=jnp.zeros((1, D), jnp.float32),
    )
    return params


# --------------------------------- main -------------------------------------
if __name__ == "__main__":
    key = jax.random.PRNGKey(0)
    pkey, dkey = jax.random.split(key)
    params = init_params(pkey, CONFIG)

    B, S = 2, CONFIG['max_seq_len']
    input_ids = jax.random.randint(dkey, (B, S), 0, CONFIG['vocab_size'],
                                   dtype=jnp.int32)

    out, attn_loss_lst, attn_lst = model_forward(params, input_ids)
    out = jax.block_until_ready(out)
    assert out.shape == (B, S, CONFIG['transformer_dim'])
    assert bool(jnp.all(jnp.isfinite(out)))
    print("KERNEL_OK")
</pallas_src>

<mosaic_0001>
module attributes {stable_mosaic.version = 11 : i64} {
  func.func @fused_forward_kernel(%arg0: memref<16x32xf32, #tpu.memory_space<vmem>>, %arg1: memref<16x16xf32, #tpu.memory_space<vmem>>, %arg2: memref<16x1xf32, #tpu.memory_space<vmem>>, %arg3: memref<2x1x32xf32, #tpu.memory_space<vmem>>, %arg4: memref<2x1x32xf32, #tpu.memory_space<vmem>>, %arg5: memref<2x32x96xbf16, #tpu.memory_space<vmem>>, %arg6: memref<2x1x96xf32, #tpu.memory_space<vmem>>, %arg7: memref<2x32x32xbf16, #tpu.memory_space<vmem>>, %arg8: memref<2x1x32xf32, #tpu.memory_space<vmem>>, %arg9: memref<2x1x32xf32, #tpu.memory_space<vmem>>, %arg10: memref<2x1x32xf32, #tpu.memory_space<vmem>>, %arg11: memref<2x32x64xbf16, #tpu.memory_space<vmem>>, %arg12: memref<2x1x64xf32, #tpu.memory_space<vmem>>, %arg13: memref<2x64x32xbf16, #tpu.memory_space<vmem>>, %arg14: memref<2x1x32xf32, #tpu.memory_space<vmem>>, %arg15: memref<1x32xf32, #tpu.memory_space<vmem>>, %arg16: memref<1x32xf32, #tpu.memory_space<vmem>>, %arg17: memref<16x32xf32, #tpu.memory_space<vmem>>) attributes {dimension_semantics = [], scalar_prefetch = 0 : i64, scratch_operands = 0 : i64, tpu.core_type = #tpu.core_type<tc>} {
    %c0 = arith.constant 0 : index
    %c0_0 = arith.constant 0 : index
    %0 = vector.load %arg0[%c0, %c0_0] : memref<16x32xf32, #tpu.memory_space<vmem>>, vector<16x32xf32>
    %c0_1 = arith.constant 0 : index
    %c0_2 = arith.constant 0 : index
    %1 = vector.load %arg1[%c0_1, %c0_2] : memref<16x16xf32, #tpu.memory_space<vmem>>, vector<16x16xf32>
    %c0_3 = arith.constant 0 : index
    %c0_4 = arith.constant 0 : index
    %c0_5 = arith.constant 0 : index
    %2 = vector.load %arg3[%c0_3, %c0_4, %c0_5] : memref<2x1x32xf32, #tpu.memory_space<vmem>>, vector<1x1x32xf32>
    %3 = vector.shape_cast %2 : vector<1x1x32xf32> to vector<1x32xf32>
    %c0_6 = arith.constant 0 : index
    %c0_7 = arith.constant 0 : index
    %c0_8 = arith.constant 0 : index
    %4 = vector.load %arg4[%c0_6, %c0_7, %c0_8] : memref<2x1x32xf32, #tpu.memory_space<vmem>>, vector<1x1x32xf32>
    %5 = vector.shape_cast %4 : vector<1x1x32xf32> to vector<1x32xf32>
    %cst = arith.constant dense<0.000000e+00> : vector<16xf32>
    %6 = vector.multi_reduction <add>, %0, %cst [1] : vector<16x32xf32> to vector<16xf32>
    %7 = vector.shape_cast %6 : vector<16xf32> to vector<16x1xf32>
    %cst_9 = arith.constant 3.200000e+01 : f32
    %8 = vector.broadcast %cst_9 : f32 to vector<16x1xf32>
    %9 = arith.divf %7, %8 : vector<16x1xf32>
    %10 = vector.broadcast %9 : vector<16x1xf32> to vector<16x32xf32>
    %11 = arith.subf %0, %10 : vector<16x32xf32>
    %12 = arith.mulf %11, %11 : vector<16x32xf32>
    %cst_10 = arith.constant dense<0.000000e+00> : vector<16xf32>
    %13 = vector.multi_reduction <add>, %12, %cst_10 [1] : vector<16x32xf32> to vector<16xf32>
    %14 = vector.shape_cast %13 : vector<16xf32> to vector<16x1xf32>
    %cst_11 = arith.constant 3.200000e+01 : f32
    %15 = vector.broadcast %cst_11 : f32 to vector<16x1xf32>
    %16 = arith.divf %14, %15 : vector<16x1xf32>
    %cst_12 = arith.constant 9.99999974E-6 : f32
    %17 = vector.broadcast %cst_12 : f32 to vector<16x1xf32>
    %18 = arith.addf %16, %17 : vector<16x1xf32>
    %19 = math.rsqrt %18 : vector<16x1xf32>
    %20 = vector.broadcast %19 : vector<16x1xf32> to vector<16x32xf32>
    %21 = arith.mulf %11, %20 : vector<16x32xf32>
    %22 = vector.broadcast %3 : vector<1x32xf32> to vector<16x32xf32>
    %23 = arith.mulf %21, %22 : vector<16x32xf32>
    %24 = vector.broadcast %5 : vector<1x32xf32> to vector<16x32xf32>
    %25 = arith.addf %23, %24 : vector<16x32xf32>
    %26 = arith.truncf %25 : vector<16x32xf32> to vector<16x32xbf16>
    %c0_13 = arith.constant 0 : index
    %c0_14 = arith.constant 0 : index
    %c0_15 = arith.constant 0 : index
    %27 = vector.load %arg5[%c0_13, %c0_14, %c0_15] : memref<2x32x96xbf16, #tpu.memory_space<vmem>>, vector<1x32x96xbf16>
    %28 = vector.shape_cast %27 : vector<1x32x96xbf16> to vector<32x96xbf16>
    %cst_16 = arith.constant dense<0.000000e+00> : vector<16x96xf32>
    %29 = tpu.matmul %26, %28, %cst_16 {dimension_numbers = #tpu.dot_dimension_numbers<[1], [0], [0], [1], [0, 0, 1, 1], [], []>} : vector<16x32xbf16>, vector<32x96xbf16>, vector<16x96xf32> -> vector<16x96xf32>
    %c0_17 = arith.constant 0 : index
    %c0_18 = arith.constant 0 : index
    %c0_19 = arith.constant 0 : index
    %30 = vector.load %arg6[%c0_17, %c0_18, %c0_19] : memref<2x1x96xf32, #tpu.memory_space<vmem>>, vector<1x1x96xf32>
    %31 = vector.shape_cast %30 : vector<1x1x96xf32> to vector<1x96xf32>
    %32 = vector.broadcast %31 : vector<1x96xf32> to vector<16x96xf32>
    %33 = arith.addf %29, %32 : vector<16x96xf32>
    %34 = vector.extract_strided_slice %33 {offsets = [0, 0], sizes = [16, 32], strides = [1, 1]} : vector<16x96xf32> to vector<16x32xf32>
    %cst_20 = arith.constant 0.353553385 : f32
    %35 = vector.broadcast %cst_20 : f32 to vector<16x32xf32>
    %36 = arith.mulf %34, %35 : vector<16x32xf32>
    %37 = vector.extract_strided_slice %33 {offsets = [0, 32], sizes = [16, 32], strides = [1, 1]} : vector<16x96xf32> to vector<16x32xf32>
    %38 = vector.extract_strided_slice %33 {offsets = [0, 64], sizes = [16, 32], strides = [1, 1]} : vector<16x96xf32> to vector<16x32xf32>
    %39 = vector.shape_cast %36 : vector<16x32xf32> to vector<16x4x8xf32>
    %40 = tpu.transpose %39, [1, 0, 2] : vector<16x4x8xf32> -> vector<4x16x8xf32>
    %41 = arith.truncf %40 : vector<4x16x8xf32> to vector<4x16x8xbf16>
    %42 = vector.shape_cast %37 : vector<16x32xf32> to vector<16x4x8xf32>
    %43 = tpu.transpose %42, [1, 0, 2] : vector<16x4x8xf32> -> vector<4x16x8xf32>
    %44 = arith.truncf %43 : vector<4x16x8xf32> to vector<4x16x8xbf16>
    %45 = vector.shape_cast %38 : vector<16x32xf32> to vector<16x4x8xf32>
    %46 = tpu.transpose %45, [1, 0, 2] : vector<16x4x8xf32> -> vector<4x16x8xf32>
    %47 = arith.truncf %46 : vector<4x16x8xf32> to vector<4x16x8xbf16>
    "tpu.trace_start"() <{level = 10 : i32, message = "hqd,hkd->hqk"}> : () -> ()
    %cst_21 = arith.constant dense<0.000000e+00> : vector<4x16x16xf32>
    %48 = tpu.matmul %41, %44, %cst_21 {dimension_numbers = #tpu.dot_dimension_numbers<[2], [2], [1], [1], [0, 0, 0, 1, 1, 1], [0], [0]>} : vector<4x16x8xbf16>, vector<4x16x8xbf16>, vector<4x16x16xf32> -> vector<4x16x16xf32>
    "tpu.trace_stop"() : () -> ()
    %49 = vector.shape_cast %1 : vector<16x16xf32> to vector<1x16x16xf32>
    %50 = vector.broadcast %49 : vector<1x16x16xf32> to vector<4x16x16xf32>
    %51 = arith.addf %48, %50 : vector<4x16x16xf32>
    %cst_22 = arith.constant dense<0xFF800000> : vector<4x16xf32>
    %52 = vector.multi_reduction <maximumf>, %51, %cst_22 [2] : vector<4x16x16xf32> to vector<4x16xf32>
    %53 = vector.shape_cast %52 : vector<4x16xf32> to vector<4x16x1xf32>
    %54 = vector.broadcast %53 : vector<4x16x1xf32> to vector<4x16x16xf32>
    %55 = arith.subf %51, %54 : vector<4x16x16xf32>
    %56 = math.exp %55 : vector<4x16x16xf32>
    %cst_23 = arith.constant dense<0.000000e+00> : vector<4x16xf32>
    %57 = vector.multi_reduction <add>, %56, %cst_23 [2] : vector<4x16x16xf32> to vector<4x16xf32>
    %58 = vector.shape_cast %57 : vector<4x16xf32> to vector<4x16x1xf32>
    %59 = tpu.reciprocal %58 {approx = true} : vector<4x16x1xf32> -> vector<4x16x1xf32>
    %60 = vector.broadcast %59 : vector<4x16x1xf32> to vector<4x16x16xf32>
    %61 = arith.mulf %56, %60 : vector<4x16x16xf32>
    %62 = arith.truncf %61 : vector<4x16x16xf32> to vector<4x16x16xbf16>
    "tpu.trace_start"() <{level = 10 : i32, message = "hqk,hkd->hqd"}> : () -> ()
    %cst_24 = arith.constant dense<0.000000e+00> : vector<4x16x8xf32>
    %63 = tpu.matmul %62, %47, %cst_24 {dimension_numbers = #tpu.dot_dimension_numbers<[2], [1], [1], [2], [0, 0, 0, 1, 1, 2], [0], [0]>} : vector<4x16x16xbf16>, vector<4x16x8xbf16>, vector<4x16x8xf32> -> vector<4x16x8xf32>
    "tpu.trace_stop"() : () -> ()
    %64 = tpu.transpose %63, [1, 0, 2] : vector<4x16x8xf32> -> vector<16x4x8xf32>
    %65 = vector.shape_cast %64 : vector<16x4x8xf32> to vector<16x32xf32>
    %66 = arith.truncf %65 : vector<16x32xf32> to vector<16x32xbf16>
    %c0_25 = arith.constant 0 : index
    %c0_26 = arith.constant 0 : index
    %c0_27 = arith.constant 0 : index
    %67 = vector.load %arg7[%c0_25, %c0_26, %c0_27] : memref<2x32x32xbf16, #tpu.memory_space<vmem>>, vector<1x32x32xbf16>
    %68 = vector.shape_cast %67 : vector<1x32x32xbf16> to vector<32x32xbf16>
    %cst_28 = arith.constant dense<0.000000e+00> : vector<16x32xf32>
    %69 = tpu.matmul %66, %68, %cst_28 {dimension_numbers = #tpu.dot_dimension_numbers<[1], [0], [0], [1], [0, 0, 1, 1], [], []>} : vector<16x32xbf16>, vector<32x32xbf16>, vector<16x32xf32> -> vector<16x32xf32>
    %c0_29 = arith.constant 0 : index
    %c0_30 = arith.constant 0 : index
    %c0_31 = arith.constant 0 : index
    %70 = vector.load %arg8[%c0_29, %c0_30, %c0_31] : memref<2x1x32xf32, #tpu.memory_space<vmem>>, vector<1x1x32xf32>
    %71 = vector.shape_cast %70 : vector<1x1x32xf32> to vector<1x32xf32>
    %72 = vector.broadcast %71 : vector<1x32xf32> to vector<16x32xf32>
    %73 = arith.addf %69, %72 : vector<16x32xf32>
    %74 = arith.addf %0, %73 : vector<16x32xf32>
    %c0_32 = arith.constant 0 : index
    %c0_33 = arith.constant 0 : index
    %c0_34 = arith.constant 0 : index
    %75 = vector.load %arg9[%c0_32, %c0_33, %c0_34] : memref<2x1x32xf32, #tpu.memory_space<vmem>>, vector<1x1x32xf32>
    %76 = vector.shape_cast %75 : vector<1x1x32xf32> to vector<1x32xf32>
    %c0_35 = arith.constant 0 : index
    %c0_36 = arith.constant 0 : index
    %c0_37 = arith.constant 0 : index
    %77 = vector.load %arg10[%c0_35, %c0_36, %c0_37] : memref<2x1x32xf32, #tpu.memory_space<vmem>>, vector<1x1x32xf32>
    %78 = vector.shape_cast %77 : vector<1x1x32xf32> to vector<1x32xf32>
    %cst_38 = arith.constant dense<0.000000e+00> : vector<16xf32>
    %79 = vector.multi_reduction <add>, %74, %cst_38 [1] : vector<16x32xf32> to vector<16xf32>
    %80 = vector.shape_cast %79 : vector<16xf32> to vector<16x1xf32>
    %cst_39 = arith.constant 3.200000e+01 : f32
    %81 = vector.broadcast %cst_39 : f32 to vector<16x1xf32>
    %82 = arith.divf %80, %81 : vector<16x1xf32>
    %83 = vector.broadcast %82 : vector<16x1xf32> to vector<16x32xf32>
    %84 = arith.subf %74, %83 : vector<16x32xf32>
    %85 = arith.mulf %84, %84 : vector<16x32xf32>
    %cst_40 = arith.constant dense<0.000000e+00> : vector<16xf32>
    %86 = vector.multi_reduction <add>, %85, %cst_40 [1] : vector<16x32xf32> to vector<16xf32>
    %87 = vector.shape_cast %86 : vector<16xf32> to vector<16x1xf32>
    %cst_41 = arith.constant 3.200000e+01 : f32
    %88 = vector.broadcast %cst_41 : f32 to vector<16x1xf32>
    %89 = arith.divf %87, %88 : vector<16x1xf32>
    %cst_42 = arith.constant 9.99999974E-6 : f32
    %90 = vector.broadcast %cst_42 : f32 to vector<16x1xf32>
    %91 = arith.addf %89, %90 : vector<16x1xf32>
    %92 = math.rsqrt %91 : vector<16x1xf32>
    %93 = vector.broadcast %92 : vector<16x1xf32> to vector<16x32xf32>
    %94 = arith.mulf %84, %93 : vector<16x32xf32>
    %95 = vector.broadcast %76 : vector<1x32xf32> to vector<16x32xf32>
    %96 = arith.mulf %94, %95 : vector<16x32xf32>
    %97 = vector.broadcast %78 : vector<1x32xf32> to vector<16x32xf32>
    %98 = arith.addf %96, %97 : vector<16x32xf32>
    %99 = arith.truncf %98 : vector<16x32xf32> to vector<16x32xbf16>
    %c0_43 = arith.constant 0 : index
    %c0_44 = arith.constant 0 : index
    %c0_45 = arith.constant 0 : index
    %100 = vector.load %arg11[%c0_43, %c0_44, %c0_45] : memref<2x32x64xbf16, #tpu.memory_space<vmem>>, vector<1x32x64xbf16>
    %101 = vector.shape_cast %100 : vector<1x32x64xbf16> to vector<32x64xbf16>
    %cst_46 = arith.constant dense<0.000000e+00> : vector<16x64xf32>
    %102 = tpu.matmul %99, %101, %cst_46 {dimension_numbers = #tpu.dot_dimension_numbers<[1], [0], [0], [1], [0, 0, 1, 1], [], []>} : vector<16x32xbf16>, vector<32x64xbf16>, vector<16x64xf32> -> vector<16x64xf32>
    %c0_47 = arith.constant 0 : index
    %c0_48 = arith.constant 0 : index
    %c0_49 = arith.constant 0 : index
    %103 = vector.load %arg12[%c0_47, %c0_48, %c0_49] : memref<2x1x64xf32, #tpu.memory_space<vmem>>, vector<1x1x64xf32>
    %104 = vector.shape_cast %103 : vector<1x1x64xf32> to vector<1x64xf32>
    %105 = vector.broadcast %104 : vector<1x64xf32> to vector<16x64xf32>
    %106 = arith.addf %102, %105 : vector<16x64xf32>
    %cst_50 = arith.constant 5.000000e-01 : f32
    %107 = vector.broadcast %cst_50 : f32 to vector<16x64xf32>
    %108 = arith.mulf %107, %106 : vector<16x64xf32>
    %cst_51 = arith.constant 0.707106769 : f32
    %109 = vector.broadcast %cst_51 : f32 to vector<16x64xf32>
    %110 = arith.mulf %106, %109 : vector<16x64xf32>
    %111 = math.erf %110 : vector<16x64xf32>
    %cst_52 = arith.constant 1.000000e+00 : f32
    %112 = vector.broadcast %cst_52 : f32 to vector<16x64xf32>
    %113 = arith.addf %112, %111 : vector<16x64xf32>
    %114 = arith.mulf %108, %113 : vector<16x64xf32>
    %115 = arith.truncf %114 : vector<16x64xf32> to vector<16x64xbf16>
    %c0_53 = arith.constant 0 : index
    %c0_54 = arith.constant 0 : index
    %c0_55 = arith.constant 0 : index
    %116 = vector.load %arg13[%c0_53, %c0_54, %c0_55] : memref<2x64x32xbf16, #tpu.memory_space<vmem>>, vector<1x64x32xbf16>
    %117 = vector.shape_cast %116 : vector<1x64x32xbf16> to vector<64x32xbf16>
    %cst_56 = arith.constant dense<0.000000e+00> : vector<16x32xf32>
    %118 = tpu.matmul %115, %117, %cst_56 {dimension_numbers = #tpu.dot_dimension_numbers<[1], [0], [0], [1], [0, 0, 1, 1], [], []>} : vector<16x64xbf16>, vector<64x32xbf16>, vector<16x32xf32> -> vector<16x32xf32>
    %119 = arith.addf %74, %118 : vector<16x32xf32>
    %c0_57 = arith.constant 0 : index
    %c0_58 = arith.constant 0 : index
    %c0_59 = arith.constant 0 : index
    %120 = vector.load %arg14[%c0_57, %c0_58, %c0_59] : memref<2x1x32xf32, #tpu.memory_space<vmem>>, vector<1x1x32xf32>
    %121 = vector.shape_cast %120 : vector<1x1x32xf32> to vector<1x32xf32>
    %122 = vector.broadcast %121 : vector<1x32xf32> to vector<16x32xf32>
    %123 = arith.addf %119, %122 : vector<16x32xf32>
    %c1 = arith.constant 1 : index
    %c0_60 = arith.constant 0 : index
    %c0_61 = arith.constant 0 : index
    %124 = vector.load %arg3[%c1, %c0_60, %c0_61] : memref<2x1x32xf32, #tpu.memory_space<vmem>>, vector<1x1x32xf32>
    %125 = vector.shape_cast %124 : vector<1x1x32xf32> to vector<1x32xf32>
    %c1_62 = arith.constant 1 : index
    %c0_63 = arith.constant 0 : index
    %c0_64 = arith.constant 0 : index
    %126 = vector.load %arg4[%c1_62, %c0_63, %c0_64] : memref<2x1x32xf32, #tpu.memory_space<vmem>>, vector<1x1x32xf32>
    %127 = vector.shape_cast %126 : vector<1x1x32xf32> to vector<1x32xf32>
    %cst_65 = arith.constant dense<0.000000e+00> : vector<16xf32>
    %128 = vector.multi_reduction <add>, %123, %cst_65 [1] : vector<16x32xf32> to vector<16xf32>
    %129 = vector.shape_cast %128 : vector<16xf32> to vector<16x1xf32>
    %cst_66 = arith.constant 3.200000e+01 : f32
    %130 = vector.broadcast %cst_66 : f32 to vector<16x1xf32>
    %131 = arith.divf %129, %130 : vector<16x1xf32>
    %132 = vector.broadcast %131 : vector<16x1xf32> to vector<16x32xf32>
    %133 = arith.subf %123, %132 : vector<16x32xf32>
    %134 = arith.mulf %133, %133 : vector<16x32xf32>
    %cst_67 = arith.constant dense<0.000000e+00> : vector<16xf32>
    %135 = vector.multi_reduction <add>, %134, %cst_67 [1] : vector<16x32xf32> to vector<16xf32>
    %136 = vector.shape_cast %135 : vector<16xf32> to vector<16x1xf32>
    %cst_68 = arith.constant 3.200000e+01 : f32
    %137 = vector.broadcast %cst_68 : f32 to vector<16x1xf32>
    %138 = arith.divf %136, %137 : vector<16x1xf32>
    %cst_69 = arith.constant 9.99999974E-6 : f32
    %139 = vector.broadcast %cst_69 : f32 to vector<16x1xf32>
    %140 = arith.addf %138, %139 : vector<16x1xf32>
    %141 = math.rsqrt %140 : vector<16x1xf32>
    %142 = vector.broadcast %141 : vector<16x1xf32> to vector<16x32xf32>
    %143 = arith.mulf %133, %142 : vector<16x32xf32>
    %144 = vector.broadcast %125 : vector<1x32xf32> to vector<16x32xf32>
    %145 = arith.mulf %143, %144 : vector<16x32xf32>
    %146 = vector.broadcast %127 : vector<1x32xf32> to vector<16x32xf32>
    %147 = arith.addf %145, %146 : vector<16x32xf32>
    %148 = arith.truncf %147 : vector<16x32xf32> to vector<16x32xbf16>
    %c1_70 = arith.constant 1 : index
    %c0_71 = arith.constant 0 : index
    %c0_72 = arith.constant 0 : index
    %149 = vector.load %arg5[%c1_70, %c0_71, %c0_72] : memref<2x32x96xbf16, #tpu.memory_space<vmem>>, vector<1x32x96xbf16>
    %150 = vector.shape_cast %149 : vector<1x32x96xbf16> to vector<32x96xbf16>
    %cst_73 = arith.constant dense<0.000000e+00> : vector<16x96xf32>
    %151 = tpu.matmul %148, %150, %cst_73 {dimension_numbers = #tpu.dot_dimension_numbers<[1], [0], [0], [1], [0, 0, 1, 1], [], []>} : vector<16x32xbf16>, vector<32x96xbf16>, vector<16x96xf32> -> vector<16x96xf32>
    %c1_74 = arith.constant 1 : index
    %c0_75 = arith.constant 0 : index
    %c0_76 = arith.constant 0 : index
    %152 = vector.load %arg6[%c1_74, %c0_75, %c0_76] : memref<2x1x96xf32, #tpu.memory_space<vmem>>, vector<1x1x96xf32>
    %153 = vector.shape_cast %152 : vector<1x1x96xf32> to vector<1x96xf32>
    %154 = vector.broadcast %153 : vector<1x96xf32> to vector<16x96xf32>
    %155 = arith.addf %151, %154 : vector<16x96xf32>
    %156 = vector.extract_strided_slice %155 {offsets = [0, 0], sizes = [16, 32], strides = [1, 1]} : vector<16x96xf32> to vector<16x32xf32>
    %cst_77 = arith.constant 0.353553385 : f32
    %157 = vector.broadcast %cst_77 : f32 to vector<16x32xf32>
    %158 = arith.mulf %156, %157 : vector<16x32xf32>
    %159 = vector.extract_strided_slice %155 {offsets = [0, 32], sizes = [16, 32], strides = [1, 1]} : vector<16x96xf32> to vector<16x32xf32>
    %160 = vector.extract_strided_slice %155 {offsets = [0, 64], sizes = [16, 32], strides = [1, 1]} : vector<16x96xf32> to vector<16x32xf32>
    %161 = vector.shape_cast %158 : vector<16x32xf32> to vector<16x4x8xf32>
    %162 = tpu.transpose %161, [1, 0, 2] : vector<16x4x8xf32> -> vector<4x16x8xf32>
    %163 = arith.truncf %162 : vector<4x16x8xf32> to vector<4x16x8xbf16>
    %164 = vector.shape_cast %159 : vector<16x32xf32> to vector<16x4x8xf32>
    %165 = tpu.transpose %164, [1, 0, 2] : vector<16x4x8xf32> -> vector<4x16x8xf32>
    %166 = arith.truncf %165 : vector<4x16x8xf32> to vector<4x16x8xbf16>
    %167 = vector.shape_cast %160 : vector<16x32xf32> to vector<16x4x8xf32>
    %168 = tpu.transpose %167, [1, 0, 2] : vector<16x4x8xf32> -> vector<4x16x8xf32>
    %169 = arith.truncf %168 : vector<4x16x8xf32> to vector<4x16x8xbf16>
    "tpu.trace_start"() <{level = 10 : i32, message = "hqd,hkd->hqk"}> : () -> ()
    %cst_78 = arith.constant dense<0.000000e+00> : vector<4x16x16xf32>
    %170 = tpu.matmul %163, %166, %cst_78 {dimension_numbers = #tpu.dot_dimension_numbers<[2], [2], [1], [1], [0, 0, 0, 1, 1, 1], [0], [0]>} : vector<4x16x8xbf16>, vector<4x16x8xbf16>, vector<4x16x16xf32> -> vector<4x16x16xf32>
    "tpu.trace_stop"() : () -> ()
    %171 = vector.shape_cast %1 : vector<16x16xf32> to vector<1x16x16xf32>
    %172 = vector.broadcast %171 : vector<1x16x16xf32> to vector<4x16x16xf32>
    %173 = arith.addf %170, %172 : vector<4x16x16xf32>
    %cst_79 = arith.constant dense<0xFF800000> : vector<4x16xf32>
    %174 = vector.multi_reduction <maximumf>, %173, %cst_79 [2] : vector<4x16x16xf32> to vector<4x16xf32>
    %175 = vector.shape_cast %174 : vector<4x16xf32> to vector<4x16x1xf32>
    %176 = vector.broadcast %175 : vector<4x16x1xf32> to vector<4x16x16xf32>
    %177 = arith.subf %173, %176 : vector<4x16x16xf32>
    %178 = math.exp %177 : vector<4x16x16xf32>
    %cst_80 = arith.constant dense<0.000000e+00> : vector<4x16xf32>
    %179 = vector.multi_reduction <add>, %178, %cst_80 [2] : vector<4x16x16xf32> to vector<4x16xf32>
    %180 = vector.shape_cast %179 : vector<4x16xf32> to vector<4x16x1xf32>
    %181 = tpu.reciprocal %180 {approx = true} : vector<4x16x1xf32> -> vector<4x16x1xf32>
    %182 = vector.broadcast %181 : vector<4x16x1xf32> to vector<4x16x16xf32>
    %183 = arith.mulf %178, %182 : vector<4x16x16xf32>
    %184 = arith.truncf %183 : vector<4x16x16xf32> to vector<4x16x16xbf16>
    "tpu.trace_start"() <{level = 10 : i32, message = "hqk,hkd->hqd"}> : () -> ()
    %cst_81 = arith.constant dense<0.000000e+00> : vector<4x16x8xf32>
    %185 = tpu.matmul %184, %169, %cst_81 {dimension_numbers = #tpu.dot_dimension_numbers<[2], [1], [1], [2], [0, 0, 0, 1, 1, 2], [0], [0]>} : vector<4x16x16xbf16>, vector<4x16x8xbf16>, vector<4x16x8xf32> -> vector<4x16x8xf32>
    "tpu.trace_stop"() : () -> ()
    %186 = tpu.transpose %185, [1, 0, 2] : vector<4x16x8xf32> -> vector<16x4x8xf32>
    %187 = vector.shape_cast %186 : vector<16x4x8xf32> to vector<16x32xf32>
    %188 = arith.truncf %187 : vector<16x32xf32> to vector<16x32xbf16>
    %c1_82 = arith.constant 1 : index
    %c0_83 = arith.constant 0 : index
    %c0_84 = arith.constant 0 : index
    %189 = vector.load %arg7[%c1_82, %c0_83, %c0_84] : memref<2x32x32xbf16, #tpu.memory_space<vmem>>, vector<1x32x32xbf16>
    %190 = vector.shape_cast %189 : vector<1x32x32xbf16> to vector<32x32xbf16>
    %cst_85 = arith.constant dense<0.000000e+00> : vector<16x32xf32>
    %191 = tpu.matmul %188, %190, %cst_85 {dimension_numbers = #tpu.dot_dimension_numbers<[1], [0], [0], [1], [0, 0, 1, 1], [], []>} : vector<16x32xbf16>, vector<32x32xbf16>, vector<16x32xf32> -> vector<16x32xf32>
    %c1_86 = arith.constant 1 : index
    %c0_87 = arith.constant 0 : index
    %c0_88 = arith.constant 0 : index
    %192 = vector.load %arg8[%c1_86, %c0_87, %c0_88] : memref<2x1x32xf32, #tpu.memory_space<vmem>>, vector<1x1x32xf32>
    %193 = vector.shape_cast %192 : vector<1x1x32xf32> to vector<1x32xf32>
    %194 = vector.broadcast %193 : vector<1x32xf32> to vector<16x32xf32>
    %195 = arith.addf %191, %194 : vector<16x32xf32>
    %196 = arith.addf %123, %195 : vector<16x32xf32>
    %c1_89 = arith.constant 1 : index
    %c0_90 = arith.constant 0 : index
    %c0_91 = arith.constant 0 : index
    %197 = vector.load %arg9[%c1_89, %c0_90, %c0_91] : memref<2x1x32xf32, #tpu.memory_space<vmem>>, vector<1x1x32xf32>
    %198 = vector.shape_cast %197 : vector<1x1x32xf32> to vector<1x32xf32>
    %c1_92 = arith.constant 1 : index
    %c0_93 = arith.constant 0 : index
    %c0_94 = arith.constant 0 : index
    %199 = vector.load %arg10[%c1_92, %c0_93, %c0_94] : memref<2x1x32xf32, #tpu.memory_space<vmem>>, vector<1x1x32xf32>
    %200 = vector.shape_cast %199 : vector<1x1x32xf32> to vector<1x32xf32>
    %cst_95 = arith.constant dense<0.000000e+00> : vector<16xf32>
    %201 = vector.multi_reduction <add>, %196, %cst_95 [1] : vector<16x32xf32> to vector<16xf32>
    %202 = vector.shape_cast %201 : vector<16xf32> to vector<16x1xf32>
    %cst_96 = arith.constant 3.200000e+01 : f32
    %203 = vector.broadcast %cst_96 : f32 to vector<16x1xf32>
    %204 = arith.divf %202, %203 : vector<16x1xf32>
    %205 = vector.broadcast %204 : vector<16x1xf32> to vector<16x32xf32>
    %206 = arith.subf %196, %205 : vector<16x32xf32>
    %207 = arith.mulf %206, %206 : vector<16x32xf32>
    %cst_97 = arith.constant dense<0.000000e+00> : vector<16xf32>
    %208 = vector.multi_reduction <add>, %207, %cst_97 [1] : vector<16x32xf32> to vector<16xf32>
    %209 = vector.shape_cast %208 : vector<16xf32> to vector<16x1xf32>
    %cst_98 = arith.constant 3.200000e+01 : f32
    %210 = vector.broadcast %cst_98 : f32 to vector<16x1xf32>
    %211 = arith.divf %209, %210 : vector<16x1xf32>
    %cst_99 = arith.constant 9.99999974E-6 : f32
    %212 = vector.broadcast %cst_99 : f32 to vector<16x1xf32>
    %213 = arith.addf %211, %212 : vector<16x1xf32>
    %214 = math.rsqrt %213 : vector<16x1xf32>
    %215 = vector.broadcast %214 : vector<16x1xf32> to vector<16x32xf32>
    %216 = arith.mulf %206, %215 : vector<16x32xf32>
    %217 = vector.broadcast %198 : vector<1x32xf32> to vector<16x32xf32>
    %218 = arith.mulf %216, %217 : vector<16x32xf32>
    %219 = vector.broadcast %200 : vector<1x32xf32> to vector<16x32xf32>
    %220 = arith.addf %218, %219 : vector<16x32xf32>
    %221 = arith.truncf %220 : vector<16x32xf32> to vector<16x32xbf16>
    %c1_100 = arith.constant 1 : index
    %c0_101 = arith.constant 0 : index
    %c0_102 = arith.constant 0 : index
    %222 = vector.load %arg11[%c1_100, %c0_101, %c0_102] : memref<2x32x64xbf16, #tpu.memory_space<vmem>>, vector<1x32x64xbf16>
    %223 = vector.shape_cast %222 : vector<1x32x64xbf16> to vector<32x64xbf16>
    %cst_103 = arith.constant dense<0.000000e+00> : vector<16x64xf32>
    %224 = tpu.matmul %221, %223, %cst_103 {dimension_numbers = #tpu.dot_dimension_numbers<[1], [0], [0], [1], [0, 0, 1, 1], [], []>} : vector<16x32xbf16>, vector<32x64xbf16>, vector<16x64xf32> -> vector<16x64xf32>
    %c1_104 = arith.constant 1 : index
    %c0_105 = arith.constant 0 : index
    %c0_106 = arith.constant 0 : index
    %225 = vector.load %arg12[%c1_104, %c0_105, %c0_106] : memref<2x1x64xf32, #tpu.memory_space<vmem>>, vector<1x1x64xf32>
    %226 = vector.shape_cast %225 : vector<1x1x64xf32> to vector<1x64xf32>
    %227 = vector.broadcast %226 : vector<1x64xf32> to vector<16x64xf32>
    %228 = arith.addf %224, %227 : vector<16x64xf32>
    %cst_107 = arith.constant 5.000000e-01 : f32
    %229 = vector.broadcast %cst_107 : f32 to vector<16x64xf32>
    %230 = arith.mulf %229, %228 : vector<16x64xf32>
    %cst_108 = arith.constant 0.707106769 : f32
    %231 = vector.broadcast %cst_108 : f32 to vector<16x64xf32>
    %232 = arith.mulf %228, %231 : vector<16x64xf32>
    %233 = math.erf %232 : vector<16x64xf32>
    %cst_109 = arith.constant 1.000000e+00 : f32
    %234 = vector.broadcast %cst_109 : f32 to vector<16x64xf32>
    %235 = arith.addf %234, %233 : vector<16x64xf32>
    %236 = arith.mulf %230, %235 : vector<16x64xf32>
    %237 = arith.truncf %236 : vector<16x64xf32> to vector<16x64xbf16>
    %c1_110 = arith.constant 1 : index
    %c0_111 = arith.constant 0 : index
    %c0_112 = arith.constant 0 : index
    %238 = vector.load %arg13[%c1_110, %c0_111, %c0_112] : memref<2x64x32xbf16, #tpu.memory_space<vmem>>, vector<1x64x32xbf16>
    %239 = vector.shape_cast %238 : vector<1x64x32xbf16> to vector<64x32xbf16>
    %cst_113 = arith.constant dense<0.000000e+00> : vector<16x32xf32>
    %240 = tpu.matmul %237, %239, %cst_113 {dimension_numbers = #tpu.dot_dimension_numbers<[1], [0], [0], [1], [0, 0, 1, 1], [], []>} : vector<16x64xbf16>, vector<64x32xbf16>, vector<16x32xf32> -> vector<16x32xf32>
    %241 = arith.addf %196, %240 : vector<16x32xf32>
    %c1_114 = arith.constant 1 : index
    %c0_115 = arith.constant 0 : index
    %c0_116 = arith.constant 0 : index
    %242 = vector.load %arg14[%c1_114, %c0_115, %c0_116] : memref<2x1x32xf32, #tpu.memory_space<vmem>>, vector<1x1x32xf32>
    %243 = vector.shape_cast %242 : vector<1x1x32xf32> to vector<1x32xf32>
    %244 = vector.broadcast %243 : vector<1x32xf32> to vector<16x32xf32>
    %245 = arith.addf %241, %244 : vector<16x32xf32>
    %c0_117 = arith.constant 0 : index
    %c0_118 = arith.constant 0 : index
    %246 = vector.load %arg15[%c0_117, %c0_118] : memref<1x32xf32, #tpu.memory_space<vmem>>, vector<1x32xf32>
    %c0_119 = arith.constant 0 : index
    %c0_120 = arith.constant 0 : index
    %247 = vector.load %arg16[%c0_119, %c0_120] : memref<1x32xf32, #tpu.memory_space<vmem>>, vector<1x32xf32>
    %cst_121 = arith.constant dense<0.000000e+00> : vector<16xf32>
    %248 = vector.multi_reduction <add>, %245, %cst_121 [1] : vector<16x32xf32> to vector<16xf32>
    %249 = vector.shape_cast %248 : vector<16xf32> to vector<16x1xf32>
    %cst_122 = arith.constant 3.200000e+01 : f32
    %250 = vector.broadcast %cst_122 : f32 to vector<16x1xf32>
    %251 = arith.divf %249, %250 : vector<16x1xf32>
    %252 = vector.broadcast %251 : vector<16x1xf32> to vector<16x32xf32>
    %253 = arith.subf %245, %252 : vector<16x32xf32>
    %254 = arith.mulf %253, %253 : vector<16x32xf32>
    %cst_123 = arith.constant dense<0.000000e+00> : vector<16xf32>
    %255 = vector.multi_reduction <add>, %254, %cst_123 [1] : vector<16x32xf32> to vector<16xf32>
    %256 = vector.shape_cast %255 : vector<16xf32> to vector<16x1xf32>
    %cst_124 = arith.constant 3.200000e+01 : f32
    %257 = vector.broadcast %cst_124 : f32 to vector<16x1xf32>
    %258 = arith.divf %256, %257 : vector<16x1xf32>
    %cst_125 = arith.constant 9.99999974E-6 : f32
    %259 = vector.broadcast %cst_125 : f32 to vector<16x1xf32>
    %260 = arith.addf %258, %259 : vector<16x1xf32>
    %261 = math.rsqrt %260 : vector<16x1xf32>
    %262 = vector.broadcast %261 : vector<16x1xf32> to vector<16x32xf32>
    %263 = arith.mulf %253, %262 : vector<16x32xf32>
    %264 = vector.broadcast %246 : vector<1x32xf32> to vector<16x32xf32>
    %265 = arith.mulf %263, %264 : vector<16x32xf32>
    %266 = vector.broadcast %247 : vector<1x32xf32> to vector<16x32xf32>
    %267 = arith.addf %265, %266 : vector<16x32xf32>
    %c0_126 = arith.constant 0 : index
    %c0_127 = arith.constant 0 : index
    %268 = vector.load %arg2[%c0_126, %c0_127] : memref<16x1xf32, #tpu.memory_space<vmem>>, vector<16x1xf32>
    %269 = vector.broadcast %268 : vector<16x1xf32> to vector<16x32xf32>
    %270 = arith.mulf %267, %269 : vector<16x32xf32>
    %c0_128 = arith.constant 0 : index
    %c0_129 = arith.constant 0 : index
    %271 = vector.load %arg17[%c0_128, %c0_129] : memref<16x32xf32, #tpu.memory_space<vmem>>, vector<16x32xf32>
    tpu.vector_store %arg17[%c0_128, %c0_129], %270 {strides = array<i32>} : memref<16x32xf32, #tpu.memory_space<vmem>>, vector<16x32xf32>,
    return
  }
}

</mosaic_0001>

<llo_original>
// kernel: tpu_custom_call.1
$region0: #{tpu_custom_call.1}
  #allocation0 [shape = 'u32[]', space=smem, size = 0x4, offset = 0x4, fixed_abs, tag = 'smem constant byte address 0x4 - core index']
  #allocation1 [shape = 'u32[144,128]{1,0:T(1,128)}', space=vmem, size = 0x12000, scoped, tag = 'internal scratch']
  %s0 = inlined_call_operand.vmem [shape: f32[16,32], index: 0, kind: input, shape index: {}]
  %s1 = inlined_call_operand.hbm [shape: f32[16,16], index: 1, kind: input, shape index: {}]
  %s2 = inlined_call_operand.vmem [shape: f32[16,1], index: 2, kind: input, shape index: {}]
  %s3 = inlined_call_operand.vmem [shape: f32[2,1,32], index: 3, kind: input, shape index: {}]
  %s4 = inlined_call_operand.vmem [shape: f32[2,1,32], index: 4, kind: input, shape index: {}]
  %s5 = inlined_call_operand.vmem [shape: bf16[2,32,96], index: 5, kind: input, shape index: {}]
  %s6 = inlined_call_operand.vmem [shape: f32[2,1,96], index: 6, kind: input, shape index: {}]
  %s7 = inlined_call_operand.vmem [shape: bf16[2,32,32], index: 7, kind: input, shape index: {}]
  %s8 = inlined_call_operand.vmem [shape: f32[2,1,32], index: 8, kind: input, shape index: {}]
  %s9 = inlined_call_operand.vmem [shape: f32[2,1,32], index: 9, kind: input, shape index: {}]
  %s10 = inlined_call_operand.vmem [shape: f32[2,1,32], index: 10, kind: input, shape index: {}]
  %s11 = inlined_call_operand.vmem [shape: bf16[2,32,64], index: 11, kind: input, shape index: {}]
  %s12 = inlined_call_operand.vmem [shape: f32[2,1,64], index: 12, kind: input, shape index: {}]
  %s13 = inlined_call_operand.vmem [shape: bf16[2,64,32], index: 13, kind: input, shape index: {}]
  %s14 = inlined_call_operand.vmem [shape: f32[2,1,32], index: 14, kind: input, shape index: {}]
  %s15 = inlined_call_operand.vmem [shape: f32[1,32], index: 15, kind: input, shape index: {}]
  %s16 = inlined_call_operand.vmem [shape: f32[1,32], index: 16, kind: input, shape index: {}]
  %s17 = inlined_call_operand.hbm [shape: f32[16,32], index: 17, kind: output, shape index: {}]
  %s18 = sld [smem:[#allocation0]]
  $region82: #{tpu_custom_call.1} parent=0
    _
  %s20 = ssub.s32 1, %s18
  %s21 = scalar_select 0, %s20, %s18
  $region1: #{tpu_custom_call.1} parent=0
    #allocation2 [shape = 'u8[8192]{0}', space=vmem, size = 0x2000, scoped, tag = 'input window, operand 1, single buffered']
    #allocation3 [shape = 's32[1]{0}', space=sflag, size = 0x4, scoped, tag = 'scoped memory for tpu_custom_call.1']
    #allocation4 [shape = 's32[1]{0}', space=sflag, size = 0x4, scoped, tag = 'scoped memory for tpu_custom_call.1']
    #allocation5 [shape = 'u8[8192]{0}', space=vmem, size = 0x2000, scoped, tag = 'output window, operand 0, single buffered']
    %22 = vsyncpa [#allocation3], 0
    %23 = vsyncpa [#allocation4], 0
    // Predicated region
    $region2: #{tpu_custom_call.1} parent=1 // pred_check
      _
    $region3: #{tpu_custom_call.1} parent=1 // pred_check_branch
      %25 = sbr.rel (0) target = $region5
    $region4: #{tpu_custom_call.1} parent=1 // pred_region
      _
    $region5: #{tpu_custom_call.1} parent=1 // pred_fallthru
      _
    // Predicated region
    $region6: #{tpu_custom_call.1} parent=1 // pred_check
      _
    $region7: #{tpu_custom_call.1} parent=1 // pred_check_branch
      %27 = sbr.rel (0) target = $region9
    $region8: #{tpu_custom_call.1} parent=1 // pred_region
      %s29 = ssub.s32 256, 256
      %30 = vsyncadd [#allocation3], %s29
      %s31 = sshll.u32 [#allocation2], 4
      %s32 = int_to_ptr.vmem [resolvable:$true] %s31
      %37 = dma.hbm_to_vmem [thread:$0]  %s1, 256, %s32, [#allocation3], 128, 128, 8
    $region9: #{tpu_custom_call.1} parent=1 // pred_fallthru
      _
    // Predicated region
    $region10: #{tpu_custom_call.1} parent=1 // pred_check
      _
    $region11: #{tpu_custom_call.1} parent=1 // pred_check_branch
      %39 = sbr.rel (0) target = $region13
    $region12: #{tpu_custom_call.1} parent=1 // pred_region
      _
    $region13: #{tpu_custom_call.1} parent=1 // pred_fallthru
      _
    // Predicated region
    $region14: #{tpu_custom_call.1} parent=1 // pred_check
      _
    $region15: #{tpu_custom_call.1} parent=1 // pred_check_branch
      %41 = sbr.rel (0) target = $region17
    $region16: #{tpu_custom_call.1} parent=1 // pred_region
      _
    $region17: #{tpu_custom_call.1} parent=1 // pred_fallthru
      _
    // Predicated region
    $region18: #{tpu_custom_call.1} parent=1 // pred_check
      _
    $region19: #{tpu_custom_call.1} parent=1 // pred_check_branch
      %43 = sbr.rel (0) target = $region21
    $region20: #{tpu_custom_call.1} parent=1 // pred_region
      _
    $region21: #{tpu_custom_call.1} parent=1 // pred_fallthru
      _
    // Predicated region
    $region22: #{tpu_custom_call.1} parent=1 // pred_check
      _
    $region23: #{tpu_custom_call.1} parent=1 // pred_check_branch
      %45 = sbr.rel (0) target = $region25
    $region24: #{tpu_custom_call.1} parent=1 // pred_region
      _
    $region25: #{tpu_custom_call.1} parent=1 // pred_fallthru
      _
    // Predicated region
    $region26: #{tpu_custom_call.1} parent=1 // pred_check
      _
    $region27: #{tpu_custom_call.1} parent=1 // pred_check_branch
      %47 = sbr.rel (0) target = $region29
    $region28: #{tpu_custom_call.1} parent=1 // pred_region
      _
    $region29: #{tpu_custom_call.1} parent=1 // pred_fallthru
      _
    // Predicated region
    $region30: #{tpu_custom_call.1} parent=1 // pred_check
      _
    $region31: #{tpu_custom_call.1} parent=1 // pred_check_branch
      %49 = sbr.rel (0) target = $region33
    $region32: #{tpu_custom_call.1} parent=1 // pred_region
      _
    $region33: #{tpu_custom_call.1} parent=1 // pred_fallthru
      _
    // Predicated region
    $region34: #{tpu_custom_call.1} parent=1 // pred_check
      _
    $region35: #{tpu_custom_call.1} parent=1 // pred_check_branch
      %51 = sbr.rel (0) target = $region37
    $region36: #{tpu_custom_call.1} parent=1 // pred_region
      _
    $region37: #{tpu_custom_call.1} parent=1 // pred_fallthru
      _
    // Predicated region
    $region38: #{tpu_custom_call.1} parent=1 // pred_check
      _
    $region39: #{tpu_custom_call.1} parent=1 // pred_check_branch
      %53 = sbr.rel (0) target = $region41
    $region40: #{tpu_custom_call.1} parent=1 // pred_region
      _
    $region41: #{tpu_custom_call.1} parent=1 // pred_fallthru
      _
    // Predicated region
    $region42: #{tpu_custom_call.1} parent=1 // pred_check
      _
    $region43: #{tpu_custom_call.1} parent=1 // pred_check_branch
      %55 = sbr.rel (0) target = $region45
    $region44: #{tpu_custom_call.1} parent=1 // pred_region
      _
    $region45: #{tpu_custom_call.1} parent=1 // pred_fallthru
      _
    // Predicated region
    $region46: #{tpu_custom_call.1} parent=1 // pred_check
      _
    $region47: #{tpu_custom_call.1} parent=1 // pred_check_branch
      %57 = sbr.rel (0) target = $region49
    $region48: #{tpu_custom_call.1} parent=1 // pred_region
      _
    $region49: #{tpu_custom_call.1} parent=1 // pred_fallthru
      _
    // Predicated region
    $region50: #{tpu_custom_call.1} parent=1 // pred_check
      _
    $region51: #{tpu_custom_call.1} parent=1 // pred_check_branch
      %59 = sbr.rel (0) target = $region53
    $region52: #{tpu_custom_call.1} parent=1 // pred_region
      _
    $region53: #{tpu_custom_call.1} parent=1 // pred_fallthru
      _
    // Predicated region
    $region54: #{tpu_custom_call.1} parent=1 // pred_check
      _
    $region55: #{tpu_custom_call.1} parent=1 // pred_check_branch
      %61 = sbr.rel (0) target = $region57
    $region56: #{tpu_custom_call.1} parent=1 // pred_region
      _
    $region57: #{tpu_custom_call.1} parent=1 // pred_fallthru
      _
    // Predicated region
    $region58: #{tpu_custom_call.1} parent=1 // pred_check
      _
    $region59: #{tpu_custom_call.1} parent=1 // pred_check_branch
      %63 = sbr.rel (0) target = $region61
    $region60: #{tpu_custom_call.1} parent=1 // pred_region
      _
    $region61: #{tpu_custom_call.1} parent=1 // pred_fallthru
      _
    // Predicated region
    $region62: #{tpu_custom_call.1} parent=1 // pred_check
      _
    $region63: #{tpu_custom_call.1} parent=1 // pred_check_branch
      %65 = sbr.rel (0) target = $region65
    $region64: #{tpu_custom_call.1} parent=1 // pred_region
      _
    $region65: #{tpu_custom_call.1} parent=1 // pred_fallthru
      _
    // Predicated region
    $region66: #{tpu_custom_call.1} parent=1 // pred_check
      _
    $region67: #{tpu_custom_call.1} parent=1 // pred_check_branch
      %67 = sbr.rel (0) target = $region69
    $region68: #{tpu_custom_call.1} parent=1 // pred_region
      _
    $region69: #{tpu_custom_call.1} parent=1 // pred_fallthru
      _
    // Predicated region
    $region70: #{tpu_custom_call.1} parent=1 // pred_check
      _
    $region71: #{tpu_custom_call.1} parent=1 // pred_check_branch
      %69 = sbr.rel (0) target = $region73
    $region72: #{tpu_custom_call.1} parent=1 // pred_region
      %70 = dma.done [#allocation3], 256
    $region73: #{tpu_custom_call.1} parent=1 // pred_fallthru
      _
    %v72 = vld [vmem:[%s0] sm:$0xff]
    %v73 = vld [vmem:[%s0 + $0x8] sm:$0xff]
    %v74 = vld [vmem:[#allocation2] sm:$0xff]
    %v75 = vld [vmem:[#allocation2 + $0x8] sm:$0xff]
    %v76 = vld [vmem:[%s3] sm:$0x1]
    %v77 = vld [vmem:[%s4] sm:$0x1]
    %vm78 = vcmask 261120
    %v79 = vsel %vm78, %v72, 0.0
    %80 = vadd.xlane.f32.xlu0 %v79
    %v81 = vpop.xlane.xlu0 %80
    %v82 = vsel %vm78, %v73, 0.0
    %83 = vadd.xlane.f32.xlu0 %v82
    %v84 = vpop.xlane.xlu0 %83
    %v85 = vrcp.pop 32.0
    %v86 = vmul.f32 %v81, %v85
    %v87 = vmul.f32 %v84, %v85
    %v88 = vsub.f32 %v72, %v86
    %v89 = vsub.f32 %v73, %v87
    %v90 = vmul.f32 %v88, %v88
    %v91 = vmul.f32 %v89, %v89
    %v92 = vsel %vm78, %v90, 0.0
    %93 = vadd.xlane.f32.xlu0 %v92
    %v94 = vpop.xlane.xlu0 %93
    %v95 = vsel %vm78, %v91, 0.0
    %96 = vadd.xlane.f32.xlu0 %v95
    %v97 = vpop.xlane.xlu0 %96
    %v98 = vmul.f32 %v94, %v85
    %v99 = vmul.f32 %v97, %v85
    %v100 = vadd.f32 %v98, 1e-05
    %v101 = vadd.f32 %v99, 1e-05
    %v102 = vrsqrt.pop %v100
    %v103 = vrsqrt.pop %v101
    %v104 = vmul.f32 %v88, %v102
    %v105 = vmul.f32 %v89, %v103
    %v107 = vlaneseq
    %v108 = vshrl.u32 %v107, 7
    %v109 = vsub.s32 0, %v108
    %v110 = vrot.slane %v76, %v109
    %v112 = vmul.f32 %v104, %v110
    %v113 = vmul.f32 %v105, %v110
    %v115 = vlaneseq
    %v116 = vshrl.u32 %v115, 7
    %v117 = vsub.s32 0, %v116
    %v118 = vrot.slane %v77, %v117
    %v120 = vadd.f32 %v112, %v118
    %v121 = vadd.f32 %v113, %v118
    %v122 = vpack.c.bf16 %v121, %v120
    %v123 = vld [vmem:[%s5] sm:$0xf]
    %v124 = vld [vmem:[%s5 + $0x4] sm:$0xf]
    %v125 = vld [vmem:[%s5 + $0x8] sm:$0xf]
    %v126 = vld [vmem:[%s5 + $0xc] sm:$0xf]
    %v127 = vld [vmem:[%s6] sm:$0x1]
    %v129 = vlaneseq
    %v130 = vshrl.u32 %v129, 7
    %v131 = vsub.s32 0, %v130
    %v132 = vrot.slane %v127, %v131
    %v138 = vunpack.c.l.b16 %v123
    %v139 = vunpack.c.l.b16 %v124
    %v140 = vunpack.c.l.b16 %v125
    %v141 = vunpack.c.l.b16 %v126
    %v142 = vpack.c.b16 %v139, %v138
    %v143 = vpack.c.b16 %v141, %v140
    %v147 = vsel %vm78, %v122, 0
    %149 = vmatprep.subr.bf16.mxu0 0
    %150 = vmatpush1.bf16.msra.mxu0 %v142
    %151 = vmatprep.subr.bf16.mxu0 0
    %152 = vmatpush1.bf16.msra.mxu0 %v143
    %153 = vmatprep.subr.bf16.mxu0 0
    %154 = vmatpush1.bf16.msra.mxu0 0
    %155 = vmatprep.subr.bf16.mxu0 0
    %156 = vmatpush1.bf16.msra.mxu0 0
    %157 = vmatprep.subr.bf16.mxu0 0
    %158 = vmatpush1.bf16.msra.mxu0 0
    %159 = vmatprep.subr.bf16.mxu0 0
    %160 = vmatpush1.bf16.msra.mxu0 0
    %161 = vmatprep.subr.bf16.mxu0 0
    %162 = vmatpush1.bf16.msra.mxu0 0
    %163 = vmatprep.subr.bf16.mxu0 0
    %164 = vmatpush1.bf16.msra.mxu0 0
    %165 = vmatprep.subr.bf16.mxu0 0
    %166 = vmatpush1.bf16.msra.mxu0 0
    %167 = vmatprep.subr.bf16.mxu0 0
    %168 = vmatpush1.bf16.msra.mxu0 0
    %169 = vmatprep.subr.bf16.mxu0 0
    %170 = vmatpush1.bf16.msra.mxu0 0
    %171 = vmatprep.subr.bf16.mxu0 0
    %172 = vmatpush1.bf16.msra.mxu0 0
    %173 = vmatprep.subr.bf16.mxu0 0
    %174 = vmatpush1.bf16.msra.mxu0 0
    %175 = vmatprep.subr.bf16.mxu0 0
    %176 = vmatpush1.bf16.msra.mxu0 0
    %177 = vmatprep.subr.bf16.mxu0 0
    %178 = vmatpush1.bf16.msra.mxu0 0
    %179 = vmatprep.subr.bf16.mxu0 0
    %180 = vmatpush1.bf16.msra.mxu0 0
    %181 = vmatprep.mubr.bf16.mxu0 0
    %182 = vmatmul.mubr.bf16.gmra.mrb[0].mxu0 %v147
    %v183 = vpop.f32.mrb[0].mxu0
    %v184 = vadd.f32 %v132, %v183
    %v185 = vpop.f32.mrb[0].mxu0
    %v186 = vpop.f32.mrb[0].mxu0
    %v187 = vadd.f32 %v132, %v186
    %v188 = vpop.f32.mrb[0].mxu0
    %189 = vdwg.mxu0
    %v190 = vmul.f32 %v184, 0.35355338
    %v191 = vmul.f32 %v187, 0.35355338
    %194 = vrot.lane.b32.xlu0 %v190, 120
    %v195 = vpop.permute.xlu0 %194
    %196 = vrot.lane.b32.xlu0 %v191, 120
    %v197 = vpop.permute.xlu0 %196
    %200 = vrot.lane.b32.xlu0 %v190, 112
    %v201 = vpop.permute.xlu0 %200
    %202 = vrot.lane.b32.xlu0 %v191, 112
    %v203 = vpop.permute.xlu0 %202
    %206 = vrot.lane.b32.xlu0 %v190, 104
    %v207 = vpop.permute.xlu0 %206
    %208 = vrot.lane.b32.xlu0 %v191, 104
    %v209 = vpop.permute.xlu0 %208
    %v212 = vcombine.low %v190, %v201
    %v213 = vcombine.high %v190, %v201
    %v215 = vunpack.c.l.s4 1983009808
    %v216 = vunpack.c.0.s8 %v215
    %v217 = vlaneseq
    %v218 = vshrl.u32 %v217, 7
    %v219 = vsub.s32 %v216, %v218
    %v220 = vrot.slane %v212, %v219
    %v222 = vunpack.c.l.s4 1983009808
    %v223 = vunpack.c.0.s8 %v222
    %v224 = vlaneseq
    %v225 = vshrl.u32 %v224, 7
    %v226 = vsub.s32 %v223, %v225
    %v227 = vrot.slane %v213, %v226
    %v228 = vcombine.low %v195, %v207
    %v229 = vcombine.high %v195, %v207
    %v231 = vunpack.c.l.s4 1983009808
    %v232 = vunpack.c.0.s8 %v231
    %v233 = vlaneseq
    %v234 = vshrl.u32 %v233, 7
    %v235 = vsub.s32 %v232, %v234
    %v236 = vrot.slane %v228, %v235
    %v238 = vunpack.c.l.s4 1983009808
    %v239 = vunpack.c.0.s8 %v238
    %v240 = vlaneseq
    %v241 = vshrl.u32 %v240, 7
    %v242 = vsub.s32 %v239, %v241
    %v243 = vrot.slane %v229, %v242
    %v244 = vcombine.low %v220, %v236
    %v245 = vcombine.high %v220, %v236
    %v247 = vunpack.c.l.s4 1934713408
    %v248 = vunpack.c.0.s8 %v247
    %v249 = vlaneseq
    %v250 = vshrl.u32 %v249, 7
    %v251 = vsub.s32 %v248, %v250
    %v252 = vrot.slane %v244, %v251
    %v254 = vunpack.c.l.s4 1934713408
    %v255 = vunpack.c.0.s8 %v254
    %v256 = vlaneseq
    %v257 = vshrl.u32 %v256, 7
    %v258 = vsub.s32 %v255, %v257
    %v259 = vrot.slane %v245, %v258
    %v260 = vcombine.low %v227, %v243
    %v261 = vcombine.high %v227, %v243
    %v263 = vunpack.c.l.s4 1934713408
    %v264 = vunpack.c.0.s8 %v263
    %v265 = vlaneseq
    %v266 = vshrl.u32 %v265, 7
    %v267 = vsub.s32 %v264, %v266
    %v268 = vrot.slane %v260, %v267
    %v270 = vunpack.c.l.s4 1934713408
    %v271 = vunpack.c.0.s8 %v270
    %v272 = vlaneseq
    %v273 = vshrl.u32 %v272, 7
    %v274 = vsub.s32 %v271, %v273
    %v275 = vrot.slane %v261, %v274
    %v276 = vcombine.high %v252, 0.0
    %v277 = vcombine.high %v259, 0.0
    %v278 = vcombine.high %v268, 0.0
    %v279 = vcombine.high %v275, 0.0
    %v280 = vcombine.low %v191, %v203
    %v281 = vcombine.high %v191, %v203
    %v283 = vunpack.c.l.s4 1983009808
    %v284 = vunpack.c.0.s8 %v283
    %v285 = vlaneseq
    %v286 = vshrl.u32 %v285, 7
    %v287 = vsub.s32 %v284, %v286
    %v288 = vrot.slane %v280, %v287
    %v290 = vunpack.c.l.s4 1983009808
    %v291 = vunpack.c.0.s8 %v290
    %v292 = vlaneseq
    %v293 = vshrl.u32 %v292, 7
    %v294 = vsub.s32 %v291, %v293
    %v295 = vrot.slane %v281, %v294
    %v296 = vcombine.low %v197, %v209
    %v297 = vcombine.high %v197, %v209
    %v299 = vunpack.c.l.s4 1983009808
    %v300 = vunpack.c.0.s8 %v299
    %v301 = vlaneseq
    %v302 = vshrl.u32 %v301, 7
    %v303 = vsub.s32 %v300, %v302
    %v304 = vrot.slane %v296, %v303
    %v306 = vunpack.c.l.s4 1983009808
    %v307 = vunpack.c.0.s8 %v306
    %v308 = vlaneseq
    %v309 = vshrl.u32 %v308, 7
    %v310 = vsub.s32 %v307, %v309
    %v311 = vrot.slane %v297, %v310
    %v312 = vcombine.low %v288, %v304
    %v313 = vcombine.high %v288, %v304
    %v315 = vunpack.c.l.s4 1934713408
    %v316 = vunpack.c.0.s8 %v315
    %v317 = vlaneseq
    %v318 = vshrl.u32 %v317, 7
    %v319 = vsub.s32 %v316, %v318
    %v320 = vrot.slane %v312, %v319
    %v322 = vunpack.c.l.s4 1934713408
    %v323 = vunpack.c.0.s8 %v322
    %v324 = vlaneseq
    %v325 = vshrl.u32 %v324, 7
    %v326 = vsub.s32 %v323, %v325
    %v327 = vrot.slane %v313, %v326
    %v328 = vcombine.low %v295, %v311
    %v329 = vcombine.high %v295, %v311
    %v331 = vunpack.c.l.s4 1934713408
    %v332 = vunpack.c.0.s8 %v331
    %v333 = vlaneseq
    %v334 = vshrl.u32 %v333, 7
    %v335 = vsub.s32 %v332, %v334
    %v336 = vrot.slane %v328, %v335
    %v338 = vunpack.c.l.s4 1934713408
    %v339 = vunpack.c.0.s8 %v338
    %v340 = vlaneseq
    %v341 = vshrl.u32 %v340, 7
    %v342 = vsub.s32 %v339, %v341
    %v343 = vrot.slane %v329, %v342
    %v344 = vcombine.high %v320, 0.0
    %v345 = vcombine.high %v327, 0.0
    %v346 = vcombine.high %v336, 0.0
    %v347 = vcombine.high %v343, 0.0
    %v348 = vcombine.low %v252, %v259
    %v350 = vunpack.c.l.s4 1983009808
    %v351 = vunpack.c.0.s8 %v350
    %v352 = vlaneseq
    %v353 = vshrl.u32 %v352, 7
    %v354 = vsub.s32 %v351, %v353
    %v355 = vrot.slane %v348, %v354
    %v356 = vcombine.low %v276, %v277
    %v358 = vunpack.c.l.s4 1983009808
    %v359 = vunpack.c.0.s8 %v358
    %v360 = vlaneseq
    %v361 = vshrl.u32 %v360, 7
    %v362 = vsub.s32 %v359, %v361
    %v363 = vrot.slane %v356, %v362
    %v364 = vcombine.low %v268, %v275
    %v366 = vunpack.c.l.s4 1983009808
    %v367 = vunpack.c.0.s8 %v366
    %v368 = vlaneseq
    %v369 = vshrl.u32 %v368, 7
    %v370 = vsub.s32 %v367, %v369
    %v371 = vrot.slane %v364, %v370
    %v372 = vcombine.low %v278, %v279
    %v374 = vunpack.c.l.s4 1983009808
    %v375 = vunpack.c.0.s8 %v374
    %v376 = vlaneseq
    %v377 = vshrl.u32 %v376, 7
    %v378 = vsub.s32 %v375, %v377
    %v379 = vrot.slane %v372, %v378
    %v380 = vcombine.low %v355, %v363
    %v381 = vcombine.high %v355, %v363
    %v383 = vunpack.c.l.s4 1934713408
    %v384 = vunpack.c.0.s8 %v383
    %v385 = vlaneseq
    %v386 = vshrl.u32 %v385, 7
    %v387 = vsub.s32 %v384, %v386
    %v388 = vrot.slane %v380, %v387
    %v390 = vunpack.c.l.s4 1934713408
    %v391 = vunpack.c.0.s8 %v390
    %v392 = vlaneseq
    %v393 = vshrl.u32 %v392, 7
    %v394 = vsub.s32 %v391, %v393
    %v395 = vrot.slane %v381, %v394
    %v396 = vcombine.low %v371, %v379
    %v397 = vcombine.high %v371, %v379
    %v399 = vunpack.c.l.s4 1934713408
    %v400 = vunpack.c.0.s8 %v399
    %v401 = vlaneseq
    %v402 = vshrl.u32 %v401, 7
    %v403 = vsub.s32 %v400, %v402
    %v404 = vrot.slane %v396, %v403
    %v406 = vunpack.c.l.s4 1934713408
    %v407 = vunpack.c.0.s8 %v406
    %v408 = vlaneseq
    %v409 = vshrl.u32 %v408, 7
    %v410 = vsub.s32 %v407, %v409
    %v411 = vrot.slane %v397, %v410
    %v412 = vcombine.low %v388, %v404
    %v413 = vcombine.high %v388, %v404
    %v414 = vcombine.low %v395, %v411
    %v415 = vcombine.high %v395, %v411
    %v416 = vcombine.low %v320, %v327
    %v418 = vunpack.c.l.s4 1983009808
    %v419 = vunpack.c.0.s8 %v418
    %v420 = vlaneseq
    %v421 = vshrl.u32 %v420, 7
    %v422 = vsub.s32 %v419, %v421
    %v423 = vrot.slane %v416, %v422
    %v424 = vcombine.low %v344, %v345
    %v426 = vunpack.c.l.s4 1983009808
    %v427 = vunpack.c.0.s8 %v426
    %v428 = vlaneseq
    %v429 = vshrl.u32 %v428, 7
    %v430 = vsub.s32 %v427, %v429
    %v431 = vrot.slane %v424, %v430
    %v432 = vcombine.low %v336, %v343
    %v434 = vunpack.c.l.s4 1983009808
    %v435 = vunpack.c.0.s8 %v434
    %v436 = vlaneseq
    %v437 = vshrl.u32 %v436, 7
    %v438 = vsub.s32 %v435, %v437
    %v439 = vrot.slane %v432, %v438
    %v440 = vcombine.low %v346, %v347
    %v442 = vunpack.c.l.s4 1983009808
    %v443 = vunpack.c.0.s8 %v442
    %v444 = vlaneseq
    %v445 = vshrl.u32 %v444, 7
    %v446 = vsub.s32 %v443, %v445
    %v447 = vrot.slane %v440, %v446
    %v448 = vcombine.low %v423, %v431
    %v449 = vcombine.high %v423, %v431
    %v451 = vunpack.c.l.s4 1934713408
    %v452 = vunpack.c.0.s8 %v451
    %v453 = vlaneseq
    %v454 = vshrl.u32 %v453, 7
    %v455 = vsub.s32 %v452, %v454
    %v456 = vrot.slane %v448, %v455
    %v458 = vunpack.c.l.s4 1934713408
    %v459 = vunpack.c.0.s8 %v458
    %v460 = vlaneseq
    %v461 = vshrl.u32 %v460, 7
    %v462 = vsub.s32 %v459, %v461
    %v463 = vrot.slane %v449, %v462
    %v464 = vcombine.low %v439, %v447
    %v465 = vcombine.high %v439, %v447
    %v467 = vunpack.c.l.s4 1934713408
    %v468 = vunpack.c.0.s8 %v467
    %v469 = vlaneseq
    %v470 = vshrl.u32 %v469, 7
    %v471 = vsub.s32 %v468, %v470
    %v472 = vrot.slane %v464, %v471
    %v474 = vunpack.c.l.s4 1934713408
    %v475 = vunpack.c.0.s8 %v474
    %v476 = vlaneseq
    %v477 = vshrl.u32 %v476, 7
    %v478 = vsub.s32 %v475, %v477
    %v479 = vrot.slane %v465, %v478
    %v480 = vcombine.low %v456, %v472
    %v481 = vcombine.high %v456, %v472
    %v482 = vcombine.low %v463, %v479
    %v483 = vcombine.high %v463, %v479
    %v484 = vpack.c.bf16 %v480, %v412
    %v485 = vpack.c.bf16 %v481, %v413
    %v486 = vpack.c.bf16 %v482, %v414
    %v487 = vpack.c.bf16 %v483, %v415
    %490 = vrot.lane.b32.xlu0 %v184, 120
    %v491 = vpop.permute.xlu0 %490
    %492 = vrot.lane.b32.xlu0 %v187, 120
    %v493 = vpop.permute.xlu0 %492
    %494 = vrot.lane.b32.xlu0 %v184, 112
    %v495 = vpop.permute.xlu0 %494
    %496 = vrot.lane.b32.xlu0 %v187, 112
    %v497 = vpop.permute.xlu0 %496
    %498 = vrot.lane.b32.xlu0 %v184, 104
    %v499 = vpop.permute.xlu0 %498
    %500 = vrot.lane.b32.xlu0 %v187, 104
    %v501 = vpop.permute.xlu0 %500
    %502 = vrot.lane.b32.xlu0 %v184, 96
    %v503 = vpop.permute.xlu0 %502
    %504 = vrot.lane.b32.xlu0 %v187, 96
    %v505 = vpop.permute.xlu0 %504
    %506 = vrot.lane.b32.xlu0 %v491, 96
    %v507 = vpop.permute.xlu0 %506
    %508 = vrot.lane.b32.xlu0 %v493, 96
    %v509 = vpop.permute.xlu0 %508
    %510 = vrot.lane.b32.xlu0 %v495, 96
    %v511 = vpop.permute.xlu0 %510
    %512 = vrot.lane.b32.xlu0 %v497, 96
    %v513 = vpop.permute.xlu0 %512
    %514 = vrot.lane.b32.xlu0 %v499, 96
    %v515 = vpop.permute.xlu0 %514
    %516 = vrot.lane.b32.xlu0 %v501, 96
    %v517 = vpop.permute.xlu0 %516
    %v526 = vcombine.low %v503, %v511
    %v527 = vcombine.high %v503, %v511
    %v529 = vunpack.c.l.s4 1983009808
    %v530 = vunpack.c.0.s8 %v529
    %v531 = vlaneseq
    %v532 = vshrl.u32 %v531, 7
    %v533 = vsub.s32 %v530, %v532
    %v534 = vrot.slane %v526, %v533
    %v536 = vunpack.c.l.s4 1983009808
    %v537 = vunpack.c.0.s8 %v536
    %v538 = vlaneseq
    %v539 = vshrl.u32 %v538, 7
    %v540 = vsub.s32 %v537, %v539
    %v541 = vrot.slane %v527, %v540
    %v542 = vcombine.low %v507, %v515
    %v543 = vcombine.high %v507, %v515
    %v545 = vunpack.c.l.s4 1983009808
    %v546 = vunpack.c.0.s8 %v545
    %v547 = vlaneseq
    %v548 = vshrl.u32 %v547, 7
    %v549 = vsub.s32 %v546, %v548
    %v550 = vrot.slane %v542, %v549
    %v552 = vunpack.c.l.s4 1983009808
    %v553 = vunpack.c.0.s8 %v552
    %v554 = vlaneseq
    %v555 = vshrl.u32 %v554, 7
    %v556 = vsub.s32 %v553, %v555
    %v557 = vrot.slane %v543, %v556
    %v558 = vcombine.low %v534, %v550
    %v559 = vcombine.high %v534, %v550
    %v561 = vunpack.c.l.s4 1934713408
    %v562 = vunpack.c.0.s8 %v561
    %v563 = vlaneseq
    %v564 = vshrl.u32 %v563, 7
    %v565 = vsub.s32 %v562, %v564
    %v566 = vrot.slane %v558, %v565
    %v568 = vunpack.c.l.s4 1934713408
    %v569 = vunpack.c.0.s8 %v568
    %v570 = vlaneseq
    %v571 = vshrl.u32 %v570, 7
    %v572 = vsub.s32 %v569, %v571
    %v573 = vrot.slane %v559, %v572
    %v574 = vcombine.low %v541, %v557
    %v575 = vcombine.high %v541, %v557
    %v577 = vunpack.c.l.s4 1934713408
    %v578 = vunpack.c.0.s8 %v577
    %v579 = vlaneseq
    %v580 = vshrl.u32 %v579, 7
    %v581 = vsub.s32 %v578, %v580
    %v582 = vrot.slane %v574, %v581
    %v584 = vunpack.c.l.s4 1934713408
    %v585 = vunpack.c.0.s8 %v584
    %v586 = vlaneseq
    %v587 = vshrl.u32 %v586, 7
    %v588 = vsub.s32 %v585, %v587
    %v589 = vrot.slane %v575, %v588
    %v590 = vcombine.high %v566, 0.0
    %v591 = vcombine.high %v573, 0.0
    %v592 = vcombine.high %v582, 0.0
    %v593 = vcombine.high %v589, 0.0
    %v594 = vcombine.low %v505, %v513
    %v595 = vcombine.high %v505, %v513
    %v597 = vunpack.c.l.s4 1983009808
    %v598 = vunpack.c.0.s8 %v597
    %v599 = vlaneseq
    %v600 = vshrl.u32 %v599, 7
    %v601 = vsub.s32 %v598, %v600
    %v602 = vrot.slane %v594, %v601
    %v604 = vunpack.c.l.s4 1983009808
    %v605 = vunpack.c.0.s8 %v604
    %v606 = vlaneseq
    %v607 = vshrl.u32 %v606, 7
    %v608 = vsub.s32 %v605, %v607
    %v609 = vrot.slane %v595, %v608
    %v610 = vcombine.low %v509, %v517
    %v611 = vcombine.high %v509, %v517
    %v613 = vunpack.c.l.s4 1983009808
    %v614 = vunpack.c.0.s8 %v613
    %v615 = vlaneseq
    %v616 = vshrl.u32 %v615, 7
    %v617 = vsub.s32 %v614, %v616
    %v618 = vrot.slane %v610, %v617
    %v620 = vunpack.c.l.s4 1983009808
    %v621 = vunpack.c.0.s8 %v620
    %v622 = vlaneseq
    %v623 = vshrl.u32 %v622, 7
    %v624 = vsub.s32 %v621, %v623
    %v625 = vrot.slane %v611, %v624
    %v626 = vcombine.low %v602, %v618
    %v627 = vcombine.high %v602, %v618
    %v629 = vunpack.c.l.s4 1934713408
    %v630 = vunpack.c.0.s8 %v629
    %v631 = vlaneseq
    %v632 = vshrl.u32 %v631, 7
    %v633 = vsub.s32 %v630, %v632
    %v634 = vrot.slane %v626, %v633
    %v636 = vunpack.c.l.s4 1934713408
    %v637 = vunpack.c.0.s8 %v636
    %v638 = vlaneseq
    %v639 = vshrl.u32 %v638, 7
    %v640 = vsub.s32 %v637, %v639
    %v641 = vrot.slane %v627, %v640
    %v642 = vcombine.low %v609, %v625
    %v643 = vcombine.high %v609, %v625
    %v645 = vunpack.c.l.s4 1934713408
    %v646 = vunpack.c.0.s8 %v645
    %v647 = vlaneseq
    %v648 = vshrl.u32 %v647, 7
    %v649 = vsub.s32 %v646, %v648
    %v650 = vrot.slane %v642, %v649
    %v652 = vunpack.c.l.s4 1934713408
    %v653 = vunpack.c.0.s8 %v652
    %v654 = vlaneseq
    %v655 = vshrl.u32 %v654, 7
    %v656 = vsub.s32 %v653, %v655
    %v657 = vrot.slane %v643, %v656
    %v658 = vcombine.high %v634, 0.0
    %v659 = vcombine.high %v641, 0.0
    %v660 = vcombine.high %v650, 0.0
    %v661 = vcombine.high %v657, 0.0
    %v662 = vcombine.low %v566, %v573
    %v664 = vunpack.c.l.s4 1983009808
    %v665 = vunpack.c.0.s8 %v664
    %v666 = vlaneseq
    %v667 = vshrl.u32 %v666, 7
    %v668 = vsub.s32 %v665, %v667
    %v669 = vrot.slane %v662, %v668
    %v670 = vcombine.low %v590, %v591
    %v672 = vunpack.c.l.s4 1983009808
    %v673 = vunpack.c.0.s8 %v672
    %v674 = vlaneseq
    %v675 = vshrl.u32 %v674, 7
    %v676 = vsub.s32 %v673, %v675
    %v677 = vrot.slane %v670, %v676
    %v678 = vcombine.low %v582, %v589
    %v680 = vunpack.c.l.s4 1983009808
    %v681 = vunpack.c.0.s8 %v680
    %v682 = vlaneseq
    %v683 = vshrl.u32 %v682, 7
    %v684 = vsub.s32 %v681, %v683
    %v685 = vrot.slane %v678, %v684
    %v686 = vcombine.low %v592, %v593
    %v688 = vunpack.c.l.s4 1983009808
    %v689 = vunpack.c.0.s8 %v688
    %v690 = vlaneseq
    %v691 = vshrl.u32 %v690, 7
    %v692 = vsub.s32 %v689, %v691
    %v693 = vrot.slane %v686, %v692
    %v694 = vcombine.low %v669, %v677
    %v695 = vcombine.high %v669, %v677
    %v697 = vunpack.c.l.s4 1934713408
    %v698 = vunpack.c.0.s8 %v697
    %v699 = vlaneseq
    %v700 = vshrl.u32 %v699, 7
    %v701 = vsub.s32 %v698, %v700
    %v702 = vrot.slane %v694, %v701
    %v704 = vunpack.c.l.s4 1934713408
    %v705 = vunpack.c.0.s8 %v704
    %v706 = vlaneseq
    %v707 = vshrl.u32 %v706, 7
    %v708 = vsub.s32 %v705, %v707
    %v709 = vrot.slane %v695, %v708
    %v710 = vcombine.low %v685, %v693
    %v711 = vcombine.high %v685, %v693
    %v713 = vunpack.c.l.s4 1934713408
    %v714 = vunpack.c.0.s8 %v713
    %v715 = vlaneseq
    %v716 = vshrl.u32 %v715, 7
    %v717 = vsub.s32 %v714, %v716
    %v718 = vrot.slane %v710, %v717
    %v720 = vunpack.c.l.s4 1934713408
    %v721 = vunpack.c.0.s8 %v720
    %v722 = vlaneseq
    %v723 = vshrl.u32 %v722, 7
    %v724 = vsub.s32 %v721, %v723
    %v725 = vrot.slane %v711, %v724
    %v726 = vcombine.low %v702, %v718
    %v727 = vcombine.high %v702, %v718
    %v728 = vcombine.low %v709, %v725
    %v729 = vcombine.high %v709, %v725
    %v730 = vcombine.low %v634, %v641
    %v732 = vunpack.c.l.s4 1983009808
    %v733 = vunpack.c.0.s8 %v732
    %v734 = vlaneseq
    %v735 = vshrl.u32 %v734, 7
    %v736 = vsub.s32 %v733, %v735
    %v737 = vrot.slane %v730, %v736
    %v738 = vcombine.low %v658, %v659
    %v740 = vunpack.c.l.s4 1983009808
    %v741 = vunpack.c.0.s8 %v740
    %v742 = vlaneseq
    %v743 = vshrl.u32 %v742, 7
    %v744 = vsub.s32 %v741, %v743
    %v745 = vrot.slane %v738, %v744
    %v746 = vcombine.low %v650, %v657
    %v748 = vunpack.c.l.s4 1983009808
    %v749 = vunpack.c.0.s8 %v748
    %v750 = vlaneseq
    %v751 = vshrl.u32 %v750, 7
    %v752 = vsub.s32 %v749, %v751
    %v753 = vrot.slane %v746, %v752
    %v754 = vcombine.low %v660, %v661
    %v756 = vunpack.c.l.s4 1983009808
    %v757 = vunpack.c.0.s8 %v756
    %v758 = vlaneseq
    %v759 = vshrl.u32 %v758, 7
    %v760 = vsub.s32 %v757, %v759
    %v761 = vrot.slane %v754, %v760
    %v762 = vcombine.low %v737, %v745
    %v763 = vcombine.high %v737, %v745
    %v765 = vunpack.c.l.s4 1934713408
    %v766 = vunpack.c.0.s8 %v765
    %v767 = vlaneseq
    %v768 = vshrl.u32 %v767, 7
    %v769 = vsub.s32 %v766, %v768
    %v770 = vrot.slane %v762, %v769
    %v772 = vunpack.c.l.s4 1934713408
    %v773 = vunpack.c.0.s8 %v772
    %v774 = vlaneseq
    %v775 = vshrl.u32 %v774, 7
    %v776 = vsub.s32 %v773, %v775
    %v777 = vrot.slane %v763, %v776
    %v778 = vcombine.low %v753, %v761
    %v779 = vcombine.high %v753, %v761
    %v781 = vunpack.c.l.s4 1934713408
    %v782 = vunpack.c.0.s8 %v781
    %v783 = vlaneseq
    %v784 = vshrl.u32 %v783, 7
    %v785 = vsub.s32 %v782, %v784
    %v786 = vrot.slane %v778, %v785
    %v788 = vunpack.c.l.s4 1934713408
    %v789 = vunpack.c.0.s8 %v788
    %v790 = vlaneseq
    %v791 = vshrl.u32 %v790, 7
    %v792 = vsub.s32 %v789, %v791
    %v793 = vrot.slane %v779, %v792
    %v794 = vcombine.low %v770, %v786
    %v795 = vcombine.high %v770, %v786
    %v796 = vcombine.low %v777, %v793
    %v797 = vcombine.high %v777, %v793
    %v798 = vpack.c.bf16 %v794, %v726
    %v799 = vpack.c.bf16 %v795, %v727
    %v800 = vpack.c.bf16 %v796, %v728
    %v801 = vpack.c.bf16 %v797, %v729
    %802 = vrot.lane.b32.xlu0 %v184, 64
    %v803 = vpop.permute.xlu0 %802
    %804 = vrot.lane.b32.xlu0 %v187, 64
    %v805 = vpop.permute.xlu0 %804
    %806 = vrot.lane.b32.xlu0 %v491, 64
    %v807 = vpop.permute.xlu0 %806
    %808 = vrot.lane.b32.xlu0 %v493, 64
    %v809 = vpop.permute.xlu0 %808
    %810 = vrot.lane.b32.xlu0 %v495, 64
    %v811 = vpop.permute.xlu0 %810
    %812 = vrot.lane.b32.xlu0 %v497, 64
    %v813 = vpop.permute.xlu0 %812
    %814 = vrot.lane.b32.xlu0 %v499, 64
    %v815 = vpop.permute.xlu0 %814
    %816 = vrot.lane.b32.xlu0 %v501, 64
    %v817 = vpop.permute.xlu0 %816
    %v826 = vcombine.low %v803, %v811
    %v827 = vcombine.high %v803, %v811
    %v829 = vunpack.c.l.s4 1983009808
    %v830 = vunpack.c.0.s8 %v829
    %v831 = vlaneseq
    %v832 = vshrl.u32 %v831, 7
    %v833 = vsub.s32 %v830, %v832
    %v834 = vrot.slane %v826, %v833
    %v836 = vunpack.c.l.s4 1983009808
    %v837 = vunpack.c.0.s8 %v836
    %v838 = vlaneseq
    %v839 = vshrl.u32 %v838, 7
    %v840 = vsub.s32 %v837, %v839
    %v841 = vrot.slane %v827, %v840
    %v842 = vcombine.low %v807, %v815
    %v843 = vcombine.high %v807, %v815
    %v845 = vunpack.c.l.s4 1983009808
    %v846 = vunpack.c.0.s8 %v845
    %v847 = vlaneseq
    %v848 = vshrl.u32 %v847, 7
    %v849 = vsub.s32 %v846, %v848
    %v850 = vrot.slane %v842, %v849
    %v852 = vunpack.c.l.s4 1983009808
    %v853 = vunpack.c.0.s8 %v852
    %v854 = vlaneseq
    %v855 = vshrl.u32 %v854, 7
    %v856 = vsub.s32 %v853, %v855
    %v857 = vrot.slane %v843, %v856
    %v858 = vcombine.low %v834, %v850
    %v859 = vcombine.high %v834, %v850
    %v861 = vunpack.c.l.s4 1934713408
    %v862 = vunpack.c.0.s8 %v861
    %v863 = vlaneseq
    %v864 = vshrl.u32 %v863, 7
    %v865 = vsub.s32 %v862, %v864
    %v866 = vrot.slane %v858, %v865
    %v868 = vunpack.c.l.s4 1934713408
    %v869 = vunpack.c.0.s8 %v868
    %v870 = vlaneseq
    %v871 = vshrl.u32 %v870, 7
    %v872 = vsub.s32 %v869, %v871
    %v873 = vrot.slane %v859, %v872
    %v874 = vcombine.low %v841, %v857
    %v875 = vcombine.high %v841, %v857
    %v877 = vunpack.c.l.s4 1934713408
    %v878 = vunpack.c.0.s8 %v877
    %v879 = vlaneseq
    %v880 = vshrl.u32 %v879, 7
    %v881 = vsub.s32 %v878, %v880
    %v882 = vrot.slane %v874, %v881
    %v884 = vunpack.c.l.s4 1934713408
    %v885 = vunpack.c.0.s8 %v884
    %v886 = vlaneseq
    %v887 = vshrl.u32 %v886, 7
    %v888 = vsub.s32 %v885, %v887
    %v889 = vrot.slane %v875, %v888
    %v890 = vcombine.high %v866, 0.0
    %v891 = vcombine.high %v873, 0.0
    %v892 = vcombine.high %v882, 0.0
    %v893 = vcombine.high %v889, 0.0
    %v894 = vcombine.low %v805, %v813
    %v895 = vcombine.high %v805, %v813
    %v897 = vunpack.c.l.s4 1983009808
    %v898 = vunpack.c.0.s8 %v897
    %v899 = vlaneseq
    %v900 = vshrl.u32 %v899, 7
    %v901 = vsub.s32 %v898, %v900
    %v902 = vrot.slane %v894, %v901
    %v904 = vunpack.c.l.s4 1983009808
    %v905 = vunpack.c.0.s8 %v904
    %v906 = vlaneseq
    %v907 = vshrl.u32 %v906, 7
    %v908 = vsub.s32 %v905, %v907
    %v909 = vrot.slane %v895, %v908
    %v910 = vcombine.low %v809, %v817
    %v911 = vcombine.high %v809, %v817
    %v913 = vunpack.c.l.s4 1983009808
    %v914 = vunpack.c.0.s8 %v913
    %v915 = vlaneseq
    %v916 = vshrl.u32 %v915, 7
    %v917 = vsub.s32 %v914, %v916
    %v918 = vrot.slane %v910, %v917
    %v920 = vunpack.c.l.s4 1983009808
    %v921 = vunpack.c.0.s8 %v920
    %v922 = vlaneseq
    %v923 = vshrl.u32 %v922, 7
    %v924 = vsub.s32 %v921, %v923
    %v925 = vrot.slane %v911, %v924
    %v926 = vcombine.low %v902, %v918
    %v927 = vcombine.high %v902, %v918
    %v929 = vunpack.c.l.s4 1934713408
    %v930 = vunpack.c.0.s8 %v929
    %v931 = vlaneseq
    %v932 = vshrl.u32 %v931, 7
    %v933 = vsub.s32 %v930, %v932
    %v934 = vrot.slane %v926, %v933
    %v936 = vunpack.c.l.s4 1934713408
    %v937 = vunpack.c.0.s8 %v936
    %v938 = vlaneseq
    %v939 = vshrl.u32 %v938, 7
    %v940 = vsub.s32 %v937, %v939
    %v941 = vrot.slane %v927, %v940
    %v942 = vcombine.low %v909, %v925
    %v943 = vcombine.high %v909, %v925
    %v945 = vunpack.c.l.s4 1934713408
    %v946 = vunpack.c.0.s8 %v945
    %v947 = vlaneseq
    %v948 = vshrl.u32 %v947, 7
    %v949 = vsub.s32 %v946, %v948
    %v950 = vrot.slane %v942, %v949
    %v952 = vunpack.c.l.s4 1934713408
    %v953 = vunpack.c.0.s8 %v952
    %v954 = vlaneseq
    %v955 = vshrl.u32 %v954, 7
    %v956 = vsub.s32 %v953, %v955
    %v957 = vrot.slane %v943, %v956
    %v958 = vcombine.high %v934, 0.0
    %v959 = vcombine.high %v941, 0.0
    %v960 = vcombine.high %v950, 0.0
    %v961 = vcombine.high %v957, 0.0
    %v962 = vcombine.low %v866, %v873
    %v964 = vunpack.c.l.s4 1983009808
    %v965 = vunpack.c.0.s8 %v964
    %v966 = vlaneseq
    %v967 = vshrl.u32 %v966, 7
    %v968 = vsub.s32 %v965, %v967
    %v969 = vrot.slane %v962, %v968
    %v970 = vcombine.low %v890, %v891
    %v972 = vunpack.c.l.s4 1983009808
    %v973 = vunpack.c.0.s8 %v972
    %v974 = vlaneseq
    %v975 = vshrl.u32 %v974, 7
    %v976 = vsub.s32 %v973, %v975
    %v977 = vrot.slane %v970, %v976
    %v978 = vcombine.low %v882, %v889
    %v980 = vunpack.c.l.s4 1983009808
    %v981 = vunpack.c.0.s8 %v980
    %v982 = vlaneseq
    %v983 = vshrl.u32 %v982, 7
    %v984 = vsub.s32 %v981, %v983
    %v985 = vrot.slane %v978, %v984
    %v986 = vcombine.low %v892, %v893
    %v988 = vunpack.c.l.s4 1983009808
    %v989 = vunpack.c.0.s8 %v988
    %v990 = vlaneseq
    %v991 = vshrl.u32 %v990, 7
    %v992 = vsub.s32 %v989, %v991
    %v993 = vrot.slane %v986, %v992
    %v994 = vcombine.low %v969, %v977
    %v995 = vcombine.high %v969, %v977
    %v997 = vunpack.c.l.s4 1934713408
    %v998 = vunpack.c.0.s8 %v997
    %v999 = vlaneseq
    %v1000 = vshrl.u32 %v999, 7
    %v1001 = vsub.s32 %v998, %v1000
    %v1002 = vrot.slane %v994, %v1001
    %v1004 = vunpack.c.l.s4 1934713408
    %v1005 = vunpack.c.0.s8 %v1004
    %v1006 = vlaneseq
    %v1007 = vshrl.u32 %v1006, 7
    %v1008 = vsub.s32 %v1005, %v1007
    %v1009 = vrot.slane %v995, %v1008
    %v1010 = vcombine.low %v985, %v993
    %v1011 = vcombine.high %v985, %v993
    %v1013 = vunpack.c.l.s4 1934713408
    %v1014 = vunpack.c.0.s8 %v1013
    %v1015 = vlaneseq
    %v1016 = vshrl.u32 %v1015, 7
    %v1017 = vsub.s32 %v1014, %v1016
    %v1018 = vrot.slane %v1010, %v1017
    %v1020 = vunpack.c.l.s4 1934713408
    %v1021 = vunpack.c.0.s8 %v1020
    %v1022 = vlaneseq
    %v1023 = vshrl.u32 %v1022, 7
    %v1024 = vsub.s32 %v1021, %v1023
    %v1025 = vrot.slane %v1011, %v1024
    %v1026 = vcombine.low %v1002, %v1018
    %v1027 = vcombine.high %v1002, %v1018
    %v1028 = vcombine.low %v1009, %v1025
    %v1029 = vcombine.high %v1009, %v1025
    %v1030 = vcombine.low %v934, %v941
    %v1032 = vunpack.c.l.s4 1983009808
    %v1033 = vunpack.c.0.s8 %v1032
    %v1034 = vlaneseq
    %v1035 = vshrl.u32 %v1034, 7
    %v1036 = vsub.s32 %v1033, %v1035
    %v1037 = vrot.slane %v1030, %v1036
    %v1038 = vcombine.low %v958, %v959
    %v1040 = vunpack.c.l.s4 1983009808
    %v1041 = vunpack.c.0.s8 %v1040
    %v1042 = vlaneseq
    %v1043 = vshrl.u32 %v1042, 7
    %v1044 = vsub.s32 %v1041, %v1043
    %v1045 = vrot.slane %v1038, %v1044
    %v1046 = vcombine.low %v950, %v957
    %v1048 = vunpack.c.l.s4 1983009808
    %v1049 = vunpack.c.0.s8 %v1048
    %v1050 = vlaneseq
    %v1051 = vshrl.u32 %v1050, 7
    %v1052 = vsub.s32 %v1049, %v1051
    %v1053 = vrot.slane %v1046, %v1052
    %v1054 = vcombine.low %v960, %v961
    %v1056 = vunpack.c.l.s4 1983009808
    %v1057 = vunpack.c.0.s8 %v1056
    %v1058 = vlaneseq
    %v1059 = vshrl.u32 %v1058, 7
    %v1060 = vsub.s32 %v1057, %v1059
    %v1061 = vrot.slane %v1054, %v1060
    %v1062 = vcombine.low %v1037, %v1045
    %v1063 = vcombine.high %v1037, %v1045
    %v1065 = vunpack.c.l.s4 1934713408
    %v1066 = vunpack.c.0.s8 %v1065
    %v1067 = vlaneseq
    %v1068 = vshrl.u32 %v1067, 7
    %v1069 = vsub.s32 %v1066, %v1068
    %v1070 = vrot.slane %v1062, %v1069
    %v1072 = vunpack.c.l.s4 1934713408
    %v1073 = vunpack.c.0.s8 %v1072
    %v1074 = vlaneseq
    %v1075 = vshrl.u32 %v1074, 7
    %v1076 = vsub.s32 %v1073, %v1075
    %v1077 = vrot.slane %v1063, %v1076
    %v1078 = vcombine.low %v1053, %v1061
    %v1079 = vcombine.high %v1053, %v1061
    %v1081 = vunpack.c.l.s4 1934713408
    %v1082 = vunpack.c.0.s8 %v1081
    %v1083 = vlaneseq
    %v1084 = vshrl.u32 %v1083, 7
    %v1085 = vsub.s32 %v1082, %v1084
    %v1086 = vrot.slane %v1078, %v1085
    %v1088 = vunpack.c.l.s4 1934713408
    %v1089 = vunpack.c.0.s8 %v1088
    %v1090 = vlaneseq
    %v1091 = vshrl.u32 %v1090, 7
    %v1092 = vsub.s32 %v1089, %v1091
    %v1093 = vrot.slane %v1079, %v1092
    %v1094 = vcombine.low %v1070, %v1086
    %v1095 = vcombine.high %v1070, %v1086
    %v1096 = vcombine.low %v1077, %v1093
    %v1097 = vcombine.high %v1077, %v1093
    %v1098 = vpack.c.bf16 %v1094, %v1026
    %v1099 = vpack.c.bf16 %v1095, %v1027
    %v1100 = vpack.c.bf16 %v1096, %v1028
    %v1101 = vpack.c.bf16 %v1097, %v1029
    %vm1102 = vcmask 64512
    %v1104 = vsel %vm1102, %v484, 0
    %v1107 = vsel %vm1102, %v798, 0
    %1109 = vmatprep.subr.bf16.mxu0 0
    %1110 = vmatpush1.bf16.xpose.msra.mxu0 %v1107
    %1111 = vmatprep.subr.bf16.mxu0 0
    %1112 = vmatpush1.bf16.xpose.msra.mxu0 0
    %1113 = vmatprep.subr.bf16.mxu0 0
    %1114 = vmatpush1.bf16.xpose.msra.mxu0 0
    %1115 = vmatprep.subr.bf16.mxu0 0
    %1116 = vmatpush1.bf16.xpose.msra.mxu0 0
    %1117 = vmatprep.subr.bf16.mxu0 0
    %1118 = vmatpush1.bf16.xpose.msra.mxu0 0
    %1119 = vmatprep.subr.bf16.mxu0 0
    %1120 = vmatpush1.bf16.xpose.msra.mxu0 0
    %1121 = vmatprep.subr.bf16.mxu0 0
    %1122 = vmatpush1.bf16.xpose.msra.mxu0 0
    %1123 = vmatprep.subr.bf16.mxu0 0
    %1124 = vmatpush1.bf16.xpose.msra.mxu0 0
    %1125 = vmatprep.subr.bf16.mxu0 0
    %1126 = vmatpush1.bf16.xpose.msra.mxu0 0
    %1127 = vmatprep.subr.bf16.mxu0 0
    %1128 = vmatpush1.bf16.xpose.msra.mxu0 0
    %1129 = vmatprep.subr.bf16.mxu0 0
    %1130 = vmatpush1.bf16.xpose.msra.mxu0 0
    %1131 = vmatprep.subr.bf16.mxu0 0
    %1132 = vmatpush1.bf16.xpose.msra.mxu0 0
    %1133 = vmatprep.subr.bf16.mxu0 0
    %1134 = vmatpush1.bf16.xpose.msra.mxu0 0
    %1135 = vmatprep.subr.bf16.mxu0 0
    %1136 = vmatpush1.bf16.xpose.msra.mxu0 0
    %1137 = vmatprep.subr.bf16.mxu0 0
    %1138 = vmatpush1.bf16.xpose.msra.mxu0 0
    %1139 = vmatprep.subr.bf16.mxu0 0
    %1140 = vmatpush1.bf16.xpose.msra.mxu0 0
    %1141 = vmatprep.mubr.bf16.mxu0 0
    %1142 = vmatmul.mubr.bf16.gmra.mrb[0].mxu0 %v1104
    %v1143 = vpop.f32.mrb[0].mxu0
    %v1144 = vadd.f32 %v74, %v1143
    %v1145 = vpop.f32.mrb[0].mxu0
    %v1146 = vpop.f32.mrb[0].mxu0
    %v1147 = vadd.f32 %v75, %v1146
    %v1148 = vpop.f32.mrb[0].mxu0
    %1149 = vdwg.mxu0
    %v1151 = vsel %vm1102, %v485, 0
    %v1154 = vsel %vm1102, %v799, 0
    %1156 = vmatprep.subr.bf16.mxu0 0
    %1157 = vmatpush1.bf16.xpose.msra.mxu0 %v1154
    %1158 = vmatprep.subr.bf16.mxu0 0
    %1159 = vmatpush1.bf16.xpose.msra.mxu0 0
    %1160 = vmatprep.subr.bf16.mxu0 0
    %1161 = vmatpush1.bf16.xpose.msra.mxu0 0
    %1162 = vmatprep.subr.bf16.mxu0 0
    %1163 = vmatpush1.bf16.xpose.msra.mxu0 0
    %1164 = vmatprep.subr.bf16.mxu0 0
    %1165 = vmatpush1.bf16.xpose.msra.mxu0 0
    %1166 = vmatprep.subr.bf16.mxu0 0
    %1167 = vmatpush1.bf16.xpose.msra.mxu0 0
    %1168 = vmatprep.subr.bf16.mxu0 0
    %1169 = vmatpush1.bf16.xpose.msra.mxu0 0
    %1170 = vmatprep.subr.bf16.mxu0 0
    %1171 = vmatpush1.bf16.xpose.msra.mxu0 0
    %1172 = vmatprep.subr.bf16.mxu0 0
    %1173 = vmatpush1.bf16.xpose.msra.mxu0 0
    %1174 = vmatprep.subr.bf16.mxu0 0
    %1175 = vmatpush1.bf16.xpose.msra.mxu0 0
    %1176 = vmatprep.subr.bf16.mxu0 0
    %1177 = vmatpush1.bf16.xpose.msra.mxu0 0
    %1178 = vmatprep.subr.bf16.mxu0 0
    %1179 = vmatpush1.bf16.xpose.msra.mxu0 0
    %1180 = vmatprep.subr.bf16.mxu0 0
    %1181 = vmatpush1.bf16.xpose.msra.mxu0 0
    %1182 = vmatprep.subr.bf16.mxu0 0
    %1183 = vmatpush1.bf16.xpose.msra.mxu0 0
    %1184 = vmatprep.subr.bf16.mxu0 0
    %1185 = vmatpush1.bf16.xpose.msra.mxu0 0
    %1186 = vmatprep.subr.bf16.mxu0 0
    %1187 = vmatpush1.bf16.xpose.msra.mxu0 0
    %1188 = vmatprep.mubr.bf16.mxu0 0
    %1189 = vmatmul.mubr.bf16.gmra.mrb[0].mxu0 %v1151
    %v1190 = vpop.f32.mrb[0].mxu0
    %v1191 = vadd.f32 %v74, %v1190
    %v1192 = vpop.f32.mrb[0].mxu0
    %v1193 = vpop.f32.mrb[0].mxu0
    %v1194 = vadd.f32 %v75, %v1193
    %v1195 = vpop.f32.mrb[0].mxu0
    %1196 = vdwg.mxu0
    %v1198 = vsel %vm1102, %v486, 0
    %v1201 = vsel %vm1102, %v800, 0
    %1203 = vmatprep.subr.bf16.mxu0 0
    %1204 = vmatpush1.bf16.xpose.msra.mxu0 %v1201
    %1205 = vmatprep.subr.bf16.mxu0 0
    %1206 = vmatpush1.bf16.xpose.msra.mxu0 0
    %1207 = vmatprep.subr.bf16.mxu0 0
    %1208 = vmatpush1.bf16.xpose.msra.mxu0 0
    %1209 = vmatprep.subr.bf16.mxu0 0
    %1210 = vmatpush1.bf16.xpose.msra.mxu0 0
    %1211 = vmatprep.subr.bf16.mxu0 0
    %1212 = vmatpush1.bf16.xpose.msra.mxu0 0
    %1213 = vmatprep.subr.bf16.mxu0 0
    %1214 = vmatpush1.bf16.xpose.msra.mxu0 0
    %1215 = vmatprep.subr.bf16.mxu0 0
    %1216 = vmatpush1.bf16.xpose.msra.mxu0 0
    %1217 = vmatprep.subr.bf16.mxu0 0
    %1218 = vmatpush1.bf16.xpose.msra.mxu0 0
    %1219 = vmatprep.subr.bf16.mxu0 0
    %1220 = vmatpush1.bf16.xpose.msra.mxu0 0
    %1221 = vmatprep.subr.bf16.mxu0 0
    %1222 = vmatpush1.bf16.xpose.msra.mxu0 0
    %1223 = vmatprep.subr.bf16.mxu0 0
    %1224 = vmatpush1.bf16.xpose.msra.mxu0 0
    %1225 = vmatprep.subr.bf16.mxu0 0
    %1226 = vmatpush1.bf16.xpose.msra.mxu0 0
    %1227 = vmatprep.subr.bf16.mxu0 0
    %1228 = vmatpush1.bf16.xpose.msra.mxu0 0
    %1229 = vmatprep.subr.bf16.mxu0 0
    %1230 = vmatpush1.bf16.xpose.msra.mxu0 0
    %1231 = vmatprep.subr.bf16.mxu0 0
    %1232 = vmatpush1.bf16.xpose.msra.mxu0 0
    %1233 = vmatprep.subr.bf16.mxu0 0
    %1234 = vmatpush1.bf16.xpose.msra.mxu0 0
    %1235 = vmatprep.mubr.bf16.mxu0 0
    %1236 = vmatmul.mubr.bf16.gmra.mrb[0].mxu0 %v1198
    %v1237 = vpop.f32.mrb[0].mxu0
    %v1238 = vadd.f32 %v74, %v1237
    %v1239 = vpop.f32.mrb[0].mxu0
    %v1240 = vpop.f32.mrb[0].mxu0
    %v1241 = vadd.f32 %v75, %v1240
    %v1242 = vpop.f32.mrb[0].mxu0
    %1243 = vdwg.mxu0
    %v1245 = vsel %vm1102, %v487, 0
    %v1248 = vsel %vm1102, %v801, 0
    %1250 = vmatprep.subr.bf16.mxu0 0
    %1251 = vmatpush1.bf16.xpose.msra.mxu0 %v1248
    %1252 = vmatprep.subr.bf16.mxu0 0
    %1253 = vmatpush1.bf16.xpose.msra.mxu0 0
    %1254 = vmatprep.subr.bf16.mxu0 0
    %1255 = vmatpush1.bf16.xpose.msra.mxu0 0
    %1256 = vmatprep.subr.bf16.mxu0 0
    %1257 = vmatpush1.bf16.xpose.msra.mxu0 0
    %1258 = vmatprep.subr.bf16.mxu0 0
    %1259 = vmatpush1.bf16.xpose.msra.mxu0 0
    %1260 = vmatprep.subr.bf16.mxu0 0
    %1261 = vmatpush1.bf16.xpose.msra.mxu0 0
    %1262 = vmatprep.subr.bf16.mxu0 0
    %1263 = vmatpush1.bf16.xpose.msra.mxu0 0
    %1264 = vmatprep.subr.bf16.mxu0 0
    %1265 = vmatpush1.bf16.xpose.msra.mxu0 0
    %1266 = vmatprep.subr.bf16.mxu0 0
    %1267 = vmatpush1.bf16.xpose.msra.mxu0 0
    %1268 = vmatprep.subr.bf16.mxu0 0
    %1269 = vmatpush1.bf16.xpose.msra.mxu0 0
    %1270 = vmatprep.subr.bf16.mxu0 0
    %1271 = vmatpush1.bf16.xpose.msra.mxu0 0
    %1272 = vmatprep.subr.bf16.mxu0 0
    %1273 = vmatpush1.bf16.xpose.msra.mxu0 0
    %1274 = vmatprep.subr.bf16.mxu0 0
    %1275 = vmatpush1.bf16.xpose.msra.mxu0 0
    %1276 = vmatprep.subr.bf16.mxu0 0
    %1277 = vmatpush1.bf16.xpose.msra.mxu0 0
    %1278 = vmatprep.subr.bf16.mxu0 0
    %1279 = vmatpush1.bf16.xpose.msra.mxu0 0
    %1280 = vmatprep.subr.bf16.mxu0 0
    %1281 = vmatpush1.bf16.xpose.msra.mxu0 0
    %1282 = vmatprep.mubr.bf16.mxu0 0
    %1283 = vmatmul.mubr.bf16.gmra.mrb[0].mxu0 %v1245
    %v1284 = vpop.f32.mrb[0].mxu0
    %v1285 = vadd.f32 %v74, %v1284
    %v1286 = vpop.f32.mrb[0].mxu0
    %v1287 = vpop.f32.mrb[0].mxu0
    %v1288 = vadd.f32 %v75, %v1287
    %v1289 = vpop.f32.mrb[0].mxu0
    %1290 = vdwg.mxu0
    %vm1291 = vcmask 130048
    %v1292 = vsel %vm1291, %v1144, -inf
    %1293 = vmax.xlane.f32.xlu0 %v1292
    %v1294 = vpop.xlane.xlu0 %1293
    %v1295 = vsel %vm1291, %v1147, -inf
    %1296 = vmax.xlane.f32.xlu0 %v1295
    %v1297 = vpop.xlane.xlu0 %1296
    %v1298 = vsel %vm1291, %v1191, -inf
    %1299 = vmax.xlane.f32.xlu0 %v1298
    %v1300 = vpop.xlane.xlu0 %1299
    %v1301 = vsel %vm1291, %v1194, -inf
    %1302 = vmax.xlane.f32.xlu0 %v1301
    %v1303 = vpop.xlane.xlu0 %1302
    %v1304 = vsel %vm1291, %v1238, -inf
    %1305 = vmax.xlane.f32.xlu0 %v1304
    %v1306 = vpop.xlane.xlu0 %1305
    %v1307 = vsel %vm1291, %v1241, -inf
    %1308 = vmax.xlane.f32.xlu0 %v1307
    %v1309 = vpop.xlane.xlu0 %1308
    %v1310 = vsel %vm1291, %v1285, -inf
    %1311 = vmax.xlane.f32.xlu0 %v1310
    %v1312 = vpop.xlane.xlu0 %1311
    %v1313 = vsel %vm1291, %v1288, -inf
    %1314 = vmax.xlane.f32.xlu0 %v1313
    %v1315 = vpop.xlane.xlu0 %1314
    %v1316 = vsub.f32 %v1144, %v1294
    %v1317 = vsub.f32 %v1147, %v1297
    %v1318 = vsub.f32 %v1191, %v1300
    %v1319 = vsub.f32 %v1194, %v1303
    %v1320 = vsub.f32 %v1238, %v1306
    %v1321 = vsub.f32 %v1241, %v1309
    %v1322 = vsub.f32 %v1285, %v1312
    %v1323 = vsub.f32 %v1288, %v1315
    %v1324 = vmul.f32 %v1316, 1.442695
    %v1325 = vpow.pop %v1324
    %v1326 = vmul.f32 %v1317, 1.442695
    %v1327 = vpow.pop %v1326
    %v1328 = vmul.f32 %v1318, 1.442695
    %v1329 = vpow.pop %v1328
    %v1330 = vmul.f32 %v1319, 1.442695
    %v1331 = vpow.pop %v1330
    %v1332 = vmul.f32 %v1320, 1.442695
    %v1333 = vpow.pop %v1332
    %v1334 = vmul.f32 %v1321, 1.442695
    %v1335 = vpow.pop %v1334
    %v1336 = vmul.f32 %v1322, 1.442695
    %v1337 = vpow.pop %v1336
    %v1338 = vmul.f32 %v1323, 1.442695
    %v1339 = vpow.pop %v1338
    %v1340 = vsel %vm1291, %v1325, 0.0
    %1341 = vadd.xlane.f32.xlu0 %v1340
    %v1342 = vpop.xlane.xlu0 %1341
    %v1343 = vsel %vm1291, %v1327, 0.0
    %1344 = vadd.xlane.f32.xlu0 %v1343
    %v1345 = vpop.xlane.xlu0 %1344
    %v1346 = vsel %vm1291, %v1329, 0.0
    %1347 = vadd.xlane.f32.xlu0 %v1346
    %v1348 = vpop.xlane.xlu0 %1347
    %v1349 = vsel %vm1291, %v1331, 0.0
    %1350 = vadd.xlane.f32.xlu0 %v1349
    %v1351 = vpop.xlane.xlu0 %1350
    %v1352 = vsel %vm1291, %v1333, 0.0
    %1353 = vadd.xlane.f32.xlu0 %v1352
    %v1354 = vpop.xlane.xlu0 %1353
    %v1355 = vsel %vm1291, %v1335, 0.0
    %1356 = vadd.xlane.f32.xlu0 %v1355
    %v1357 = vpop.xlane.xlu0 %1356
    %v1358 = vsel %vm1291, %v1337, 0.0
    %1359 = vadd.xlane.f32.xlu0 %v1358
    %v1360 = vpop.xlane.xlu0 %1359
    %v1361 = vsel %vm1291, %v1339, 0.0
    %1362 = vadd.xlane.f32.xlu0 %v1361
    %v1363 = vpop.xlane.xlu0 %1362
    %v1364 = vrcp.pop %v1342
    %v1365 = vrcp.pop %v1345
    %v1366 = vrcp.pop %v1348
    %v1367 = vrcp.pop %v1351
    %v1368 = vrcp.pop %v1354
    %v1369 = vrcp.pop %v1357
    %v1370 = vrcp.pop %v1360
    %v1371 = vrcp.pop %v1363
    %v1372 = vmul.f32 %v1325, %v1364
    %v1373 = vmul.f32 %v1327, %v1365
    %v1374 = vmul.f32 %v1329, %v1366
    %v1375 = vmul.f32 %v1331, %v1367
    %v1376 = vmul.f32 %v1333, %v1368
    %v1377 = vmul.f32 %v1335, %v1369
    %v1378 = vmul.f32 %v1337, %v1370
    %v1379 = vmul.f32 %v1339, %v1371
    %v1380 = vpack.c.bf16 %v1373, %v1372
    %v1381 = vpack.c.bf16 %v1375, %v1374
    %v1382 = vpack.c.bf16 %v1377, %v1376
    %v1383 = vpack.c.bf16 %v1379, %v1378
    %v1385 = vsel %vm1291, %v1380, 0
    %1387 = vmatprep.subr.bf16.mxu0 0
    %1388 = vmatpush1.bf16.msra.mxu0 %v1098
    %1389 = vmatprep.subr.bf16.mxu0 0
    %1390 = vmatpush1.bf16.msra.mxu0 0
    %1391 = vmatprep.subr.bf16.mxu0 0
    %1392 = vmatpush1.bf16.msra.mxu0 0
    %1393 = vmatprep.subr.bf16.mxu0 0
    %1394 = vmatpush1.bf16.msra.mxu0 0
    %1395 = vmatprep.subr.bf16.mxu0 0
    %1396 = vmatpush1.bf16.msra.mxu0 0
    %1397 = vmatprep.subr.bf16.mxu0 0
    %1398 = vmatpush1.bf16.msra.mxu0 0
    %1399 = vmatprep.subr.bf16.mxu0 0
    %1400 = vmatpush1.bf16.msra.mxu0 0
    %1401 = vmatprep.subr.bf16.mxu0 0
    %1402 = vmatpush1.bf16.msra.mxu0 0
    %1403 = vmatprep.subr.bf16.mxu0 0
    %1404 = vmatpush1.bf16.msra.mxu0 0
    %1405 = vmatprep.subr.bf16.mxu0 0
    %1406 = vmatpush1.bf16.msra.mxu0 0
    %1407 = vmatprep.subr.bf16.mxu0 0
    %1408 = vmatpush1.bf16.msra.mxu0 0
    %1409 = vmatprep.subr.bf16.mxu0 0
    %1410 = vmatpush1.bf16.msra.mxu0 0
    %1411 = vmatprep.subr.bf16.mxu0 0
    %1412 = vmatpush1.bf16.msra.mxu0 0
    %1413 = vmatprep.subr.bf16.mxu0 0
    %1414 = vmatpush1.bf16.msra.mxu0 0
    %1415 = vmatprep.subr.bf16.mxu0 0
    %1416 = vmatpush1.bf16.msra.mxu0 0
    %1417 = vmatprep.subr.bf16.mxu0 0
    %1418 = vmatpush1.bf16.msra.mxu0 0
    %1419 = vmatprep.mubr.bf16.mxu0 0
    %1420 = vmatmul.mubr.bf16.gmra.mrb[0].mxu0 %v1385
    %v1421 = vpop.f32.mrb[0].mxu0
    %v1422 = vadd.f32 0.0, %v1421
    %v1423 = vpop.f32.mrb[0].mxu0
    %v1424 = vpop.f32.mrb[0].mxu0
    %v1425 = vadd.f32 0.0, %v1424
    %v1426 = vpop.f32.mrb[0].mxu0
    %1427 = vdwg.mxu0
    %v1429 = vsel %vm1291, %v1381, 0
    %1431 = vmatprep.subr.bf16.mxu0 0
    %1432 = vmatpush1.bf16.msra.mxu0 %v1099
    %1433 = vmatprep.subr.bf16.mxu0 0
    %1434 = vmatpush1.bf16.msra.mxu0 0
    %1435 = vmatprep.subr.bf16.mxu0 0
    %1436 = vmatpush1.bf16.msra.mxu0 0
    %1437 = vmatprep.subr.bf16.mxu0 0
    %1438 = vmatpush1.bf16.msra.mxu0 0
    %1439 = vmatprep.subr.bf16.mxu0 0
    %1440 = vmatpush1.bf16.msra.mxu0 0
    %1441 = vmatprep.subr.bf16.mxu0 0
    %1442 = vmatpush1.bf16.msra.mxu0 0
    %1443 = vmatprep.subr.bf16.mxu0 0
    %1444 = vmatpush1.bf16.msra.mxu0 0
    %1445 = vmatprep.subr.bf16.mxu0 0
    %1446 = vmatpush1.bf16.msra.mxu0 0
    %1447 = vmatprep.subr.bf16.mxu0 0
    %1448 = vmatpush1.bf16.msra.mxu0 0
    %1449 = vmatprep.subr.bf16.mxu0 0
    %1450 = vmatpush1.bf16.msra.mxu0 0
    %1451 = vmatprep.subr.bf16.mxu0 0
    %1452 = vmatpush1.bf16.msra.mxu0 0
    %1453 = vmatprep.subr.bf16.mxu0 0
    %1454 = vmatpush1.bf16.msra.mxu0 0
    %1455 = vmatprep.subr.bf16.mxu0 0
    %1456 = vmatpush1.bf16.msra.mxu0 0
    %1457 = vmatprep.subr.bf16.mxu0 0
    %1458 = vmatpush1.bf16.msra.mxu0 0
    %1459 = vmatprep.subr.bf16.mxu0 0
    %1460 = vmatpush1.bf16.msra.mxu0 0
    %1461 = vmatprep.subr.bf16.mxu0 0
    %1462 = vmatpush1.bf16.msra.mxu0 0
    %1463 = vmatprep.mubr.bf16.mxu0 0
    %1464 = vmatmul.mubr.bf16.gmra.mrb[0].mxu0 %v1429
    %v1465 = vpop.f32.mrb[0].mxu0
    %v1466 = vadd.f32 0.0, %v1465
    %v1467 = vpop.f32.mrb[0].mxu0
    %v1468 = vpop.f32.mrb[0].mxu0
    %v1469 = vadd.f32 0.0, %v1468
    %v1470 = vpop.f32.mrb[0].mxu0
    %1471 = vdwg.mxu0
    %v1473 = vsel %vm1291, %v1382, 0
    %1475 = vmatprep.subr.bf16.mxu0 0
    %1476 = vmatpush1.bf16.msra.mxu0 %v1100
    %1477 = vmatprep.subr.bf16.mxu0 0
    %1478 = vmatpush1.bf16.msra.mxu0 0
    %1479 = vmatprep.subr.bf16.mxu0 0
    %1480 = vmatpush1.bf16.msra.mxu0 0
    %1481 = vmatprep.subr.bf16.mxu0 0
    %1482 = vmatpush1.bf16.msra.mxu0 0
    %1483 = vmatprep.subr.bf16.mxu0 0
    %1484 = vmatpush1.bf16.msra.mxu0 0
    %1485 = vmatprep.subr.bf16.mxu0 0
    %1486 = vmatpush1.bf16.msra.mxu0 0
    %1487 = vmatprep.subr.bf16.mxu0 0
    %1488 = vmatpush1.bf16.msra.mxu0 0
    %1489 = vmatprep.subr.bf16.mxu0 0
    %1490 = vmatpush1.bf16.msra.mxu0 0
    %1491 = vmatprep.subr.bf16.mxu0 0
    %1492 = vmatpush1.bf16.msra.mxu0 0
    %1493 = vmatprep.subr.bf16.mxu0 0
    %1494 = vmatpush1.bf16.msra.mxu0 0
    %1495 = vmatprep.subr.bf16.mxu0 0
    %1496 = vmatpush1.bf16.msra.mxu0 0
    %1497 = vmatprep.subr.bf16.mxu0 0
    %1498 = vmatpush1.bf16.msra.mxu0 0
    %1499 = vmatprep.subr.bf16.mxu0 0
    %1500 = vmatpush1.bf16.msra.mxu0 0
    %1501 = vmatprep.subr.bf16.mxu0 0
    %1502 = vmatpush1.bf16.msra.mxu0 0
    %1503 = vmatprep.subr.bf16.mxu0 0
    %1504 = vmatpush1.bf16.msra.mxu0 0
    %1505 = vmatprep.subr.bf16.mxu0 0
    %1506 = vmatpush1.bf16.msra.mxu0 0
    %1507 = vmatprep.mubr.bf16.mxu0 0
    %1508 = vmatmul.mubr.bf16.gmra.mrb[0].mxu0 %v1473
    %v1509 = vpop.f32.mrb[0].mxu0
    %v1510 = vadd.f32 0.0, %v1509
    %v1511 = vpop.f32.mrb[0].mxu0
    %v1512 = vpop.f32.mrb[0].mxu0
    %v1513 = vadd.f32 0.0, %v1512
    %v1514 = vpop.f32.mrb[0].mxu0
    %1515 = vdwg.mxu0
    %v1517 = vsel %vm1291, %v1383, 0
    %1519 = vmatprep.subr.bf16.mxu0 0
    %1520 = vmatpush1.bf16.msra.mxu0 %v1101
    %1521 = vmatprep.subr.bf16.mxu0 0
    %1522 = vmatpush1.bf16.msra.mxu0 0
    %1523 = vmatprep.subr.bf16.mxu0 0
    %1524 = vmatpush1.bf16.msra.mxu0 0
    %1525 = vmatprep.subr.bf16.mxu0 0
    %1526 = vmatpush1.bf16.msra.mxu0 0
    %1527 = vmatprep.subr.bf16.mxu0 0
    %1528 = vmatpush1.bf16.msra.mxu0 0
    %1529 = vmatprep.subr.bf16.mxu0 0
    %1530 = vmatpush1.bf16.msra.mxu0 0
    %1531 = vmatprep.subr.bf16.mxu0 0
    %1532 = vmatpush1.bf16.msra.mxu0 0
    %1533 = vmatprep.subr.bf16.mxu0 0
    %1534 = vmatpush1.bf16.msra.mxu0 0
    %1535 = vmatprep.subr.bf16.mxu0 0
    %1536 = vmatpush1.bf16.msra.mxu0 0
    %1537 = vmatprep.subr.bf16.mxu0 0
    %1538 = vmatpush1.bf16.msra.mxu0 0
    %1539 = vmatprep.subr.bf16.mxu0 0
    %1540 = vmatpush1.bf16.msra.mxu0 0
    %1541 = vmatprep.subr.bf16.mxu0 0
    %1542 = vmatpush1.bf16.msra.mxu0 0
    %1543 = vmatprep.subr.bf16.mxu0 0
    %1544 = vmatpush1.bf16.msra.mxu0 0
    %1545 = vmatprep.subr.bf16.mxu0 0
    %1546 = vmatpush1.bf16.msra.mxu0 0
    %1547 = vmatprep.subr.bf16.mxu0 0
    %1548 = vmatpush1.bf16.msra.mxu0 0
    %1549 = vmatprep.subr.bf16.mxu0 0
    %1550 = vmatpush1.bf16.msra.mxu0 0
    %1551 = vmatprep.mubr.bf16.mxu0 0
    %1552 = vmatmul.mubr.bf16.gmra.mrb[0].mxu0 %v1517
    %v1553 = vpop.f32.mrb[0].mxu0
    %v1554 = vadd.f32 0.0, %v1553
    %v1555 = vpop.f32.mrb[0].mxu0
    %v1556 = vpop.f32.mrb[0].mxu0
    %v1557 = vadd.f32 0.0, %v1556
    %v1558 = vpop.f32.mrb[0].mxu0
    %1559 = vdwg.mxu0
    %v1560 = vcombine.low %v1422, %v1510
    %v1561 = vcombine.high %v1422, %v1510
    %v1563 = vunpack.c.l.s4 1983009808
    %v1564 = vunpack.c.0.s8 %v1563
    %v1565 = vlaneseq
    %v1566 = vshrl.u32 %v1565, 7
    %v1567 = vsub.s32 %v1564, %v1566
    %v1568 = vrot.slane %v1560, %v1567
    %v1570 = vunpack.c.l.s4 1983009808
    %v1571 = vunpack.c.0.s8 %v1570
    %v1572 = vlaneseq
    %v1573 = vshrl.u32 %v1572, 7
    %v1574 = vsub.s32 %v1571, %v1573
    %v1575 = vrot.slane %v1561, %v1574
    %v1576 = vcombine.low %v1466, %v1554
    %v1577 = vcombine.high %v1466, %v1554
    %v1579 = vunpack.c.l.s4 1983009808
    %v1580 = vunpack.c.0.s8 %v1579
    %v1581 = vlaneseq
    %v1582 = vshrl.u32 %v1581, 7
    %v1583 = vsub.s32 %v1580, %v1582
    %v1584 = vrot.slane %v1576, %v1583
    %v1586 = vunpack.c.l.s4 1983009808
    %v1587 = vunpack.c.0.s8 %v1586
    %v1588 = vlaneseq
    %v1589 = vshrl.u32 %v1588, 7
    %v1590 = vsub.s32 %v1587, %v1589
    %v1591 = vrot.slane %v1577, %v1590
    %v1592 = vcombine.low %v1568, %v1584
    %v1593 = vcombine.high %v1568, %v1584
    %v1595 = vunpack.c.l.s4 1934713408
    %v1596 = vunpack.c.0.s8 %v1595
    %v1597 = vlaneseq
    %v1598 = vshrl.u32 %v1597, 7
    %v1599 = vsub.s32 %v1596, %v1598
    %v1600 = vrot.slane %v1592, %v1599
    %v1602 = vunpack.c.l.s4 1934713408
    %v1603 = vunpack.c.0.s8 %v1602
    %v1604 = vlaneseq
    %v1605 = vshrl.u32 %v1604, 7
    %v1606 = vsub.s32 %v1603, %v1605
    %v1607 = vrot.slane %v1593, %v1606
    %v1608 = vcombine.low %v1575, %v1591
    %v1609 = vcombine.high %v1575, %v1591
    %v1611 = vunpack.c.l.s4 1934713408
    %v1612 = vunpack.c.0.s8 %v1611
    %v1613 = vlaneseq
    %v1614 = vshrl.u32 %v1613, 7
    %v1615 = vsub.s32 %v1612, %v1614
    %v1616 = vrot.slane %v1608, %v1615
    %v1618 = vunpack.c.l.s4 1934713408
    %v1619 = vunpack.c.0.s8 %v1618
    %v1620 = vlaneseq
    %v1621 = vshrl.u32 %v1620, 7
    %v1622 = vsub.s32 %v1619, %v1621
    %v1623 = vrot.slane %v1609, %v1622
    %v1624 = vcombine.high %v1600, 0.0
    %v1625 = vcombine.high %v1607, 0.0
    %v1626 = vcombine.high %v1616, 0.0
    %v1627 = vcombine.high %v1623, 0.0
    %v1628 = vcombine.low %v1425, %v1513
    %v1629 = vcombine.high %v1425, %v1513
    %v1631 = vunpack.c.l.s4 1983009808
    %v1632 = vunpack.c.0.s8 %v1631
    %v1633 = vlaneseq
    %v1634 = vshrl.u32 %v1633, 7
    %v1635 = vsub.s32 %v1632, %v1634
    %v1636 = vrot.slane %v1628, %v1635
    %v1638 = vunpack.c.l.s4 1983009808
    %v1639 = vunpack.c.0.s8 %v1638
    %v1640 = vlaneseq
    %v1641 = vshrl.u32 %v1640, 7
    %v1642 = vsub.s32 %v1639, %v1641
    %v1643 = vrot.slane %v1629, %v1642
    %v1644 = vcombine.low %v1469, %v1557
    %v1645 = vcombine.high %v1469, %v1557
    %v1647 = vunpack.c.l.s4 1983009808
    %v1648 = vunpack.c.0.s8 %v1647
    %v1649 = vlaneseq
    %v1650 = vshrl.u32 %v1649, 7
    %v1651 = vsub.s32 %v1648, %v1650
    %v1652 = vrot.slane %v1644, %v1651
    %v1654 = vunpack.c.l.s4 1983009808
    %v1655 = vunpack.c.0.s8 %v1654
    %v1656 = vlaneseq
    %v1657 = vshrl.u32 %v1656, 7
    %v1658 = vsub.s32 %v1655, %v1657
    %v1659 = vrot.slane %v1645, %v1658
    %v1660 = vcombine.low %v1636, %v1652
    %v1661 = vcombine.high %v1636, %v1652
    %v1663 = vunpack.c.l.s4 1934713408
    %v1664 = vunpack.c.0.s8 %v1663
    %v1665 = vlaneseq
    %v1666 = vshrl.u32 %v1665, 7
    %v1667 = vsub.s32 %v1664, %v1666
    %v1668 = vrot.slane %v1660, %v1667
    %v1670 = vunpack.c.l.s4 1934713408
    %v1671 = vunpack.c.0.s8 %v1670
    %v1672 = vlaneseq
    %v1673 = vshrl.u32 %v1672, 7
    %v1674 = vsub.s32 %v1671, %v1673
    %v1675 = vrot.slane %v1661, %v1674
    %v1676 = vcombine.low %v1643, %v1659
    %v1677 = vcombine.high %v1643, %v1659
    %v1679 = vunpack.c.l.s4 1934713408
    %v1680 = vunpack.c.0.s8 %v1679
    %v1681 = vlaneseq
    %v1682 = vshrl.u32 %v1681, 7
    %v1683 = vsub.s32 %v1680, %v1682
    %v1684 = vrot.slane %v1676, %v1683
    %v1686 = vunpack.c.l.s4 1934713408
    %v1687 = vunpack.c.0.s8 %v1686
    %v1688 = vlaneseq
    %v1689 = vshrl.u32 %v1688, 7
    %v1690 = vsub.s32 %v1687, %v1689
    %v1691 = vrot.slane %v1677, %v1690
    %v1692 = vcombine.high %v1668, 0.0
    %v1693 = vcombine.high %v1675, 0.0
    %v1694 = vcombine.high %v1684, 0.0
    %v1695 = vcombine.high %v1691, 0.0
    %v1696 = vcombine.low %v1600, %v1607
    %v1698 = vunpack.c.l.s4 1983009808
    %v1699 = vunpack.c.0.s8 %v1698
    %v1700 = vlaneseq
    %v1701 = vshrl.u32 %v1700, 7
    %v1702 = vsub.s32 %v1699, %v1701
    %v1703 = vrot.slane %v1696, %v1702
    %v1704 = vcombine.low %v1624, %v1625
    %v1706 = vunpack.c.l.s4 1983009808
    %v1707 = vunpack.c.0.s8 %v1706
    %v1708 = vlaneseq
    %v1709 = vshrl.u32 %v1708, 7
    %v1710 = vsub.s32 %v1707, %v1709
    %v1711 = vrot.slane %v1704, %v1710
    %v1712 = vcombine.low %v1616, %v1623
    %v1714 = vunpack.c.l.s4 1983009808
    %v1715 = vunpack.c.0.s8 %v1714
    %v1716 = vlaneseq
    %v1717 = vshrl.u32 %v1716, 7
    %v1718 = vsub.s32 %v1715, %v1717
    %v1719 = vrot.slane %v1712, %v1718
    %v1720 = vcombine.low %v1626, %v1627
    %v1722 = vunpack.c.l.s4 1983009808
    %v1723 = vunpack.c.0.s8 %v1722
    %v1724 = vlaneseq
    %v1725 = vshrl.u32 %v1724, 7
    %v1726 = vsub.s32 %v1723, %v1725
    %v1727 = vrot.slane %v1720, %v1726
    %v1728 = vcombine.low %v1703, %v1711
    %v1729 = vcombine.high %v1703, %v1711
    %v1731 = vunpack.c.l.s4 1934713408
    %v1732 = vunpack.c.0.s8 %v1731
    %v1733 = vlaneseq
    %v1734 = vshrl.u32 %v1733, 7
    %v1735 = vsub.s32 %v1732, %v1734
    %v1736 = vrot.slane %v1728, %v1735
    %v1738 = vunpack.c.l.s4 1934713408
    %v1739 = vunpack.c.0.s8 %v1738
    %v1740 = vlaneseq
    %v1741 = vshrl.u32 %v1740, 7
    %v1742 = vsub.s32 %v1739, %v1741
    %v1743 = vrot.slane %v1729, %v1742
    %v1744 = vcombine.low %v1719, %v1727
    %v1745 = vcombine.high %v1719, %v1727
    %v1747 = vunpack.c.l.s4 1934713408
    %v1748 = vunpack.c.0.s8 %v1747
    %v1749 = vlaneseq
    %v1750 = vshrl.u32 %v1749, 7
    %v1751 = vsub.s32 %v1748, %v1750
    %v1752 = vrot.slane %v1744, %v1751
    %v1754 = vunpack.c.l.s4 1934713408
    %v1755 = vunpack.c.0.s8 %v1754
    %v1756 = vlaneseq
    %v1757 = vshrl.u32 %v1756, 7
    %v1758 = vsub.s32 %v1755, %v1757
    %v1759 = vrot.slane %v1745, %v1758
    %v1760 = vcombine.low %v1736, %v1752
    %v1761 = vcombine.high %v1736, %v1752
    %v1762 = vcombine.low %v1743, %v1759
    %v1763 = vcombine.high %v1743, %v1759
    %v1764 = vcombine.low %v1668, %v1675
    %v1766 = vunpack.c.l.s4 1983009808
    %v1767 = vunpack.c.0.s8 %v1766
    %v1768 = vlaneseq
    %v1769 = vshrl.u32 %v1768, 7
    %v1770 = vsub.s32 %v1767, %v1769
    %v1771 = vrot.slane %v1764, %v1770
    %v1772 = vcombine.low %v1692, %v1693
    %v1774 = vunpack.c.l.s4 1983009808
    %v1775 = vunpack.c.0.s8 %v1774
    %v1776 = vlaneseq
    %v1777 = vshrl.u32 %v1776, 7
    %v1778 = vsub.s32 %v1775, %v1777
    %v1779 = vrot.slane %v1772, %v1778
    %v1780 = vcombine.low %v1684, %v1691
    %v1782 = vunpack.c.l.s4 1983009808
    %v1783 = vunpack.c.0.s8 %v1782
    %v1784 = vlaneseq
    %v1785 = vshrl.u32 %v1784, 7
    %v1786 = vsub.s32 %v1783, %v1785
    %v1787 = vrot.slane %v1780, %v1786
    %v1788 = vcombine.low %v1694, %v1695
    %v1790 = vunpack.c.l.s4 1983009808
    %v1791 = vunpack.c.0.s8 %v1790
    %v1792 = vlaneseq
    %v1793 = vshrl.u32 %v1792, 7
    %v1794 = vsub.s32 %v1791, %v1793
    %v1795 = vrot.slane %v1788, %v1794
    %v1796 = vcombine.low %v1771, %v1779
    %v1797 = vcombine.high %v1771, %v1779
    %v1799 = vunpack.c.l.s4 1934713408
    %v1800 = vunpack.c.0.s8 %v1799
    %v1801 = vlaneseq
    %v1802 = vshrl.u32 %v1801, 7
    %v1803 = vsub.s32 %v1800, %v1802
    %v1804 = vrot.slane %v1796, %v1803
    %v1806 = vunpack.c.l.s4 1934713408
    %v1807 = vunpack.c.0.s8 %v1806
    %v1808 = vlaneseq
    %v1809 = vshrl.u32 %v1808, 7
    %v1810 = vsub.s32 %v1807, %v1809
    %v1811 = vrot.slane %v1797, %v1810
    %v1812 = vcombine.low %v1787, %v1795
    %v1813 = vcombine.high %v1787, %v1795
    %v1815 = vunpack.c.l.s4 1934713408
    %v1816 = vunpack.c.0.s8 %v1815
    %v1817 = vlaneseq
    %v1818 = vshrl.u32 %v1817, 7
    %v1819 = vsub.s32 %v1816, %v1818
    %v1820 = vrot.slane %v1812, %v1819
    %v1822 = vunpack.c.l.s4 1934713408
    %v1823 = vunpack.c.0.s8 %v1822
    %v1824 = vlaneseq
    %v1825 = vshrl.u32 %v1824, 7
    %v1826 = vsub.s32 %v1823, %v1825
    %v1827 = vrot.slane %v1813, %v1826
    %v1828 = vcombine.low %v1804, %v1820
    %v1829 = vcombine.high %v1804, %v1820
    %v1830 = vcombine.low %v1811, %v1827
    %v1831 = vcombine.high %v1811, %v1827
    %1834 = vrot.lane.b32.xlu0 %v1761, 8
    %v1835 = vpop.permute.xlu0 %1834
    %1836 = vrot.lane.b32.xlu0 %v1829, 8
    %v1837 = vpop.permute.xlu0 %1836
    %1842 = vrot.lane.b32.xlu0 %v1762, 16
    %v1843 = vpop.permute.xlu0 %1842
    %1844 = vrot.lane.b32.xlu0 %v1830, 16
    %v1845 = vpop.permute.xlu0 %1844
    %1850 = vrot.lane.b32.xlu0 %v1763, 24
    %v1851 = vpop.permute.xlu0 %1850
    %1852 = vrot.lane.b32.xlu0 %v1831, 24
    %v1853 = vpop.permute.xlu0 %1852
    %v1856 = vsel %vm1102, %v1760, %v1835
    %v1857 = vsel %vm1102, %v1828, %v1837
    %v1858 = vsel %vm1291, %v1856, %v1843
    %v1859 = vsel %vm1291, %v1857, %v1845
    %vm1860 = vcmask 195584
    %v1861 = vsel %vm1860, %v1858, %v1851
    %v1862 = vsel %vm1860, %v1859, %v1853
    %v1863 = vpack.c.bf16 %v1862, %v1861
    %v1864 = vld [vmem:[%s7] sm:$0xf]
    %v1865 = vld [vmem:[%s7 + $0x4] sm:$0xf]
    %v1866 = vld [vmem:[%s7 + $0x8] sm:$0xf]
    %v1867 = vld [vmem:[%s7 + $0xc] sm:$0xf]
    %v1868 = vld [vmem:[%s8] sm:$0x1]
    %v1870 = vlaneseq
    %v1871 = vshrl.u32 %v1870, 7
    %v1872 = vsub.s32 0, %v1871
    %v1873 = vrot.slane %v1868, %v1872
    %v1879 = vunpack.c.l.b16 %v1864
    %v1880 = vunpack.c.l.b16 %v1865
    %v1881 = vunpack.c.l.b16 %v1866
    %v1882 = vunpack.c.l.b16 %v1867
    %v1883 = vpack.c.b16 %v1880, %v1879
    %v1884 = vpack.c.b16 %v1882, %v1881
    %v1888 = vsel %vm78, %v1863, 0
    %1890 = vmatprep.subr.bf16.mxu0 0
    %1891 = vmatpush1.bf16.msra.mxu0 %v1883
    %1892 = vmatprep.subr.bf16.mxu0 0
    %1893 = vmatpush1.bf16.msra.mxu0 %v1884
    %1894 = vmatprep.subr.bf16.mxu0 0
    %1895 = vmatpush1.bf16.msra.mxu0 0
    %1896 = vmatprep.subr.bf16.mxu0 0
    %1897 = vmatpush1.bf16.msra.mxu0 0
    %1898 = vmatprep.subr.bf16.mxu0 0
    %1899 = vmatpush1.bf16.msra.mxu0 0
    %1900 = vmatprep.subr.bf16.mxu0 0
    %1901 = vmatpush1.bf16.msra.mxu0 0
    %1902 = vmatprep.subr.bf16.mxu0 0
    %1903 = vmatpush1.bf16.msra.mxu0 0
    %1904 = vmatprep.subr.bf16.mxu0 0
    %1905 = vmatpush1.bf16.msra.mxu0 0
    %1906 = vmatprep.subr.bf16.mxu0 0
    %1907 = vmatpush1.bf16.msra.mxu0 0
    %1908 = vmatprep.subr.bf16.mxu0 0
    %1909 = vmatpush1.bf16.msra.mxu0 0
    %1910 = vmatprep.subr.bf16.mxu0 0
    %1911 = vmatpush1.bf16.msra.mxu0 0
    %1912 = vmatprep.subr.bf16.mxu0 0
    %1913 = vmatpush1.bf16.msra.mxu0 0
    %1914 = vmatprep.subr.bf16.mxu0 0
    %1915 = vmatpush1.bf16.msra.mxu0 0
    %1916 = vmatprep.subr.bf16.mxu0 0
    %1917 = vmatpush1.bf16.msra.mxu0 0
    %1918 = vmatprep.subr.bf16.mxu0 0
    %1919 = vmatpush1.bf16.msra.mxu0 0
    %1920 = vmatprep.subr.bf16.mxu0 0
    %1921 = vmatpush1.bf16.msra.mxu0 0
    %1922 = vmatprep.mubr.bf16.mxu0 0
    %1923 = vmatmul.mubr.bf16.gmra.mrb[0].mxu0 %v1888
    %v1924 = vpop.f32.mrb[0].mxu0
    %v1925 = vadd.f32 %v1873, %v1924
    %v1926 = vpop.f32.mrb[0].mxu0
    %v1927 = vpop.f32.mrb[0].mxu0
    %v1928 = vadd.f32 %v1873, %v1927
    %v1929 = vpop.f32.mrb[0].mxu0
    %1930 = vdwg.mxu0
    %v1931 = vadd.f32 %v72, %v1925
    %v1932 = vadd.f32 %v73, %v1928
    %v1933 = vld [vmem:[%s9] sm:$0x1]
    %v1934 = vld [vmem:[%s10] sm:$0x1]
    %v1935 = vsel %vm78, %v1931, 0.0
    %1936 = vadd.xlane.f32.xlu0 %v1935
    %v1937 = vpop.xlane.xlu0 %1936
    %v1938 = vsel %vm78, %v1932, 0.0
    %1939 = vadd.xlane.f32.xlu0 %v1938
    %v1940 = vpop.xlane.xlu0 %1939
    %v1941 = vmul.f32 %v1937, %v85
    %v1942 = vmul.f32 %v1940, %v85
    %v1943 = vsub.f32 %v1931, %v1941
    %v1944 = vsub.f32 %v1932, %v1942
    %v1945 = vmul.f32 %v1943, %v1943
    %v1946 = vmul.f32 %v1944, %v1944
    %v1947 = vsel %vm78, %v1945, 0.0
    %1948 = vadd.xlane.f32.xlu0 %v1947
    %v1949 = vpop.xlane.xlu0 %1948
    %v1950 = vsel %vm78, %v1946, 0.0
    %1951 = vadd.xlane.f32.xlu0 %v1950
    %v1952 = vpop.xlane.xlu0 %1951
    %v1953 = vmul.f32 %v1949, %v85
    %v1954 = vmul.f32 %v1952, %v85
    %v1955 = vadd.f32 %v1953, 1e-05
    %v1956 = vadd.f32 %v1954, 1e-05
    %v1957 = vrsqrt.pop %v1955
    %v1958 = vrsqrt.pop %v1956
    %v1959 = vmul.f32 %v1943, %v1957
    %v1960 = vmul.f32 %v1944, %v1958
    %v1962 = vlaneseq
    %v1963 = vshrl.u32 %v1962, 7
    %v1964 = vsub.s32 0, %v1963
    %v1965 = vrot.slane %v1933, %v1964
    %v1967 = vmul.f32 %v1959, %v1965
    %v1968 = vmul.f32 %v1960, %v1965
    %v1970 = vlaneseq
    %v1971 = vshrl.u32 %v1970, 7
    %v1972 = vsub.s32 0, %v1971
    %v1973 = vrot.slane %v1934, %v1972
    %v1975 = vadd.f32 %v1967, %v1973
    %v1976 = vadd.f32 %v1968, %v1973
    %v1977 = vpack.c.bf16 %v1976, %v1975
    %v1978 = vld [vmem:[%s11] sm:$0xf]
    %v1979 = vld [vmem:[%s11 + $0x4] sm:$0xf]
    %v1980 = vld [vmem:[%s11 + $0x8] sm:$0xf]
    %v1981 = vld [vmem:[%s11 + $0xc] sm:$0xf]
    %v1982 = vld [vmem:[%s12] sm:$0x1]
    %v1984 = vlaneseq
    %v1985 = vshrl.u32 %v1984, 7
    %v1986 = vsub.s32 0, %v1985
    %v1987 = vrot.slane %v1982, %v1986
    %v1993 = vunpack.c.l.b16 %v1978
    %v1994 = vunpack.c.l.b16 %v1979
    %v1995 = vunpack.c.l.b16 %v1980
    %v1996 = vunpack.c.l.b16 %v1981
    %v1997 = vpack.c.b16 %v1994, %v1993
    %v1998 = vpack.c.b16 %v1996, %v1995
    %v2002 = vsel %vm78, %v1977, 0
    %2004 = vmatprep.subr.bf16.mxu0 0
    %2005 = vmatpush1.bf16.msra.mxu0 %v1997
    %2006 = vmatprep.subr.bf16.mxu0 0
    %2007 = vmatpush1.bf16.msra.mxu0 %v1998
    %2008 = vmatprep.subr.bf16.mxu0 0
    %2009 = vmatpush1.bf16.msra.mxu0 0
    %2010 = vmatprep.subr.bf16.mxu0 0
    %2011 = vmatpush1.bf16.msra.mxu0 0
    %2012 = vmatprep.subr.bf16.mxu0 0
    %2013 = vmatpush1.bf16.msra.mxu0 0
    %2014 = vmatprep.subr.bf16.mxu0 0
    %2015 = vmatpush1.bf16.msra.mxu0 0
    %2016 = vmatprep.subr.bf16.mxu0 0
    %2017 = vmatpush1.bf16.msra.mxu0 0
    %2018 = vmatprep.subr.bf16.mxu0 0
    %2019 = vmatpush1.bf16.msra.mxu0 0
    %2020 = vmatprep.subr.bf16.mxu0 0
    %2021 = vmatpush1.bf16.msra.mxu0 0
    %2022 = vmatprep.subr.bf16.mxu0 0
    %2023 = vmatpush1.bf16.msra.mxu0 0
    %2024 = vmatprep.subr.bf16.mxu0 0
    %2025 = vmatpush1.bf16.msra.mxu0 0
    %2026 = vmatprep.subr.bf16.mxu0 0
    %2027 = vmatpush1.bf16.msra.mxu0 0
    %2028 = vmatprep.subr.bf16.mxu0 0
    %2029 = vmatpush1.bf16.msra.mxu0 0
    %2030 = vmatprep.subr.bf16.mxu0 0
    %2031 = vmatpush1.bf16.msra.mxu0 0
    %2032 = vmatprep.subr.bf16.mxu0 0
    %2033 = vmatpush1.bf16.msra.mxu0 0
    %2034 = vmatprep.subr.bf16.mxu0 0
    %2035 = vmatpush1.bf16.msra.mxu0 0
    %2036 = vmatprep.mubr.bf16.mxu0 0
    %2037 = vmatmul.mubr.bf16.gmra.mrb[0].mxu0 %v2002
    %v2038 = vpop.f32.mrb[0].mxu0
    %v2039 = vadd.f32 %v1987, %v2038
    %v2040 = vpop.f32.mrb[0].mxu0
    %v2041 = vpop.f32.mrb[0].mxu0
    %v2042 = vadd.f32 %v1987, %v2041
    %v2043 = vpop.f32.mrb[0].mxu0
    %2044 = vdwg.mxu0
    %v2045 = vmul.f32 %v2039, 0.5
    %v2046 = vmul.f32 %v2042, 0.5
    %v2047 = vmul.f32 %v2039, 0.70710677
    %v2048 = vmul.f32 %v2042, 0.70710677
    %v2049 = verf.f32.pop %v2047
    %v2050 = verf.f32.pop %v2048
    %v2051 = vadd.f32 %v2049, 1.0
    %v2052 = vadd.f32 %v2050, 1.0
    %v2053 = vmul.f32 %v2045, %v2051
    %v2054 = vmul.f32 %v2046, %v2052
    %v2055 = vpack.c.bf16 %v2054, %v2053
    %v2056 = vld [vmem:[%s13] sm:$0xf]
    %v2057 = vld [vmem:[%s13 + $0x4] sm:$0xf]
    %v2058 = vld [vmem:[%s13 + $0x8] sm:$0xf]
    %v2059 = vld [vmem:[%s13 + $0xc] sm:$0xf]
    %v2060 = vld [vmem:[%s13 + $0x10] sm:$0xf]
    %v2061 = vld [vmem:[%s13 + $0x14] sm:$0xf]
    %v2062 = vld [vmem:[%s13 + $0x18] sm:$0xf]
    %v2063 = vld [vmem:[%s13 + $0x1c] sm:$0xf]
    %v2072 = vunpack.c.l.b16 %v2056
    %v2073 = vunpack.c.l.b16 %v2057
    %v2074 = vunpack.c.l.b16 %v2058
    %v2075 = vunpack.c.l.b16 %v2059
    %v2076 = vunpack.c.l.b16 %v2060
    %v2077 = vunpack.c.l.b16 %v2061
    %v2078 = vunpack.c.l.b16 %v2062
    %v2079 = vunpack.c.l.b16 %v2063
    %v2080 = vpack.c.b16 %v2073, %v2072
    %v2081 = vpack.c.b16 %v2075, %v2074
    %v2082 = vpack.c.b16 %v2077, %v2076
    %v2083 = vpack.c.b16 %v2079, %v2078
    %vm2088 = vcmask 523264
    %v2090 = vsel %vm2088, %v2055, 0
    %2092 = vmatprep.subr.bf16.mxu0 0
    %2093 = vmatpush1.bf16.msra.mxu0 %v2080
    %2094 = vmatprep.subr.bf16.mxu0 0
    %2095 = vmatpush1.bf16.msra.mxu0 %v2081
    %2096 = vmatprep.subr.bf16.mxu0 0
    %2097 = vmatpush1.bf16.msra.mxu0 %v2082
    %2098 = vmatprep.subr.bf16.mxu0 0
    %2099 = vmatpush1.bf16.msra.mxu0 %v2083
    %2100 = vmatprep.subr.bf16.mxu0 0
    %2101 = vmatpush1.bf16.msra.mxu0 0
    %2102 = vmatprep.subr.bf16.mxu0 0
    %2103 = vmatpush1.bf16.msra.mxu0 0
    %2104 = vmatprep.subr.bf16.mxu0 0
    %2105 = vmatpush1.bf16.msra.mxu0 0
    %2106 = vmatprep.subr.bf16.mxu0 0
    %2107 = vmatpush1.bf16.msra.mxu0 0
    %2108 = vmatprep.subr.bf16.mxu0 0
    %2109 = vmatpush1.bf16.msra.mxu0 0
    %2110 = vmatprep.subr.bf16.mxu0 0
    %2111 = vmatpush1.bf16.msra.mxu0 0
    %2112 = vmatprep.subr.bf16.mxu0 0
    %2113 = vmatpush1.bf16.msra.mxu0 0
    %2114 = vmatprep.subr.bf16.mxu0 0
    %2115 = vmatpush1.bf16.msra.mxu0 0
    %2116 = vmatprep.subr.bf16.mxu0 0
    %2117 = vmatpush1.bf16.msra.mxu0 0
    %2118 = vmatprep.subr.bf16.mxu0 0
    %2119 = vmatpush1.bf16.msra.mxu0 0
    %2120 = vmatprep.subr.bf16.mxu0 0
    %2121 = vmatpush1.bf16.msra.mxu0 0
    %2122 = vmatprep.subr.bf16.mxu0 0
    %2123 = vmatpush1.bf16.msra.mxu0 0
    %2124 = vmatprep.mubr.bf16.mxu0 0
    %2125 = vmatmul.mubr.bf16.gmra.mrb[0].mxu0 %v2090
    %v2126 = vpop.f32.mrb[0].mxu0
    %v2127 = vadd.f32 0.0, %v2126
    %v2128 = vpop.f32.mrb[0].mxu0
    %v2129 = vpop.f32.mrb[0].mxu0
    %v2130 = vadd.f32 0.0, %v2129
    %v2131 = vpop.f32.mrb[0].mxu0
    %2132 = vdwg.mxu0
    %v2133 = vadd.f32 %v1931, %v2127
    %v2134 = vadd.f32 %v1932, %v2130
    %v2135 = vld [vmem:[%s14] sm:$0x1]
    %v2137 = vlaneseq
    %v2138 = vshrl.u32 %v2137, 7
    %v2139 = vsub.s32 0, %v2138
    %v2140 = vrot.slane %v2135, %v2139
    %v2142 = vadd.f32 %v2133, %v2140
    %v2143 = vadd.f32 %v2134, %v2140
    %s2144 = scalar_lea.vmem %s3, 1
    %v2145 = vld [vmem:[%s2144] sm:$0x1]
    %s2146 = scalar_lea.vmem %s4, 1
    %v2147 = vld [vmem:[%s2146] sm:$0x1]
    %v2148 = vsel %vm78, %v2142, 0.0
    %2149 = vadd.xlane.f32.xlu0 %v2148
    %v2150 = vpop.xlane.xlu0 %2149
    %v2151 = vsel %vm78, %v2143, 0.0
    %2152 = vadd.xlane.f32.xlu0 %v2151
    %v2153 = vpop.xlane.xlu0 %2152
    %v2154 = vmul.f32 %v2150, %v85
    %v2155 = vmul.f32 %v2153, %v85
    %v2156 = vsub.f32 %v2142, %v2154
    %v2157 = vsub.f32 %v2143, %v2155
    %v2158 = vmul.f32 %v2156, %v2156
    %v2159 = vmul.f32 %v2157, %v2157
    %v2160 = vsel %vm78, %v2158, 0.0
    %2161 = vadd.xlane.f32.xlu0 %v2160
    %v2162 = vpop.xlane.xlu0 %2161
    %v2163 = vsel %vm78, %v2159, 0.0
    %2164 = vadd.xlane.f32.xlu0 %v2163
    %v2165 = vpop.xlane.xlu0 %2164
    %v2166 = vmul.f32 %v2162, %v85
    %v2167 = vmul.f32 %v2165, %v85
    %v2168 = vadd.f32 %v2166, 1e-05
    %v2169 = vadd.f32 %v2167, 1e-05
    %v2170 = vrsqrt.pop %v2168
    %v2171 = vrsqrt.pop %v2169
    %v2172 = vmul.f32 %v2156, %v2170
    %v2173 = vmul.f32 %v2157, %v2171
    %v2175 = vlaneseq
    %v2176 = vshrl.u32 %v2175, 7
    %v2177 = vsub.s32 0, %v2176
    %v2178 = vrot.slane %v2145, %v2177
    %v2180 = vmul.f32 %v2172, %v2178
    %v2181 = vmul.f32 %v2173, %v2178
    %v2183 = vlaneseq
    %v2184 = vshrl.u32 %v2183, 7
    %v2185 = vsub.s32 0, %v2184
    %v2186 = vrot.slane %v2147, %v2185
    %v2188 = vadd.f32 %v2180, %v2186
    %v2189 = vadd.f32 %v2181, %v2186
    %v2190 = vpack.c.bf16 %v2189, %v2188
    %s2191 = scalar_lea.vmem %s5, 16
    %v2192 = vld [vmem:[%s2191] sm:$0xf]
    %v2193 = vld [vmem:[%s2191 + $0x4] sm:$0xf]
    %v2194 = vld [vmem:[%s2191 + $0x8] sm:$0xf]
    %v2195 = vld [vmem:[%s2191 + $0xc] sm:$0xf]
    %s2196 = scalar_lea.vmem %s6, 1
    %v2197 = vld [vmem:[%s2196] sm:$0x1]
    %v2199 = vlaneseq
    %v2200 = vshrl.u32 %v2199, 7
    %v2201 = vsub.s32 0, %v2200
    %v2202 = vrot.slane %v2197, %v2201
    %v2208 = vunpack.c.l.b16 %v2192
    %v2209 = vunpack.c.l.b16 %v2193
    %v2210 = vunpack.c.l.b16 %v2194
    %v2211 = vunpack.c.l.b16 %v2195
    %v2212 = vpack.c.b16 %v2209, %v2208
    %v2213 = vpack.c.b16 %v2211, %v2210
    %v2217 = vsel %vm78, %v2190, 0
    %2219 = vmatprep.subr.bf16.mxu0 0
    %2220 = vmatpush1.bf16.msra.mxu0 %v2212
    %2221 = vmatprep.subr.bf16.mxu0 0
    %2222 = vmatpush1.bf16.msra.mxu0 %v2213
    %2223 = vmatprep.subr.bf16.mxu0 0
    %2224 = vmatpush1.bf16.msra.mxu0 0
    %2225 = vmatprep.subr.bf16.mxu0 0
    %2226 = vmatpush1.bf16.msra.mxu0 0
    %2227 = vmatprep.subr.bf16.mxu0 0
    %2228 = vmatpush1.bf16.msra.mxu0 0
    %2229 = vmatprep.subr.bf16.mxu0 0
    %2230 = vmatpush1.bf16.msra.mxu0 0
    %2231 = vmatprep.subr.bf16.mxu0 0
    %2232 = vmatpush1.bf16.msra.mxu0 0
    %2233 = vmatprep.subr.bf16.mxu0 0
    %2234 = vmatpush1.bf16.msra.mxu0 0
    %2235 = vmatprep.subr.bf16.mxu0 0
    %2236 = vmatpush1.bf16.msra.mxu0 0
    %2237 = vmatprep.subr.bf16.mxu0 0
    %2238 = vmatpush1.bf16.msra.mxu0 0
    %2239 = vmatprep.subr.bf16.mxu0 0
    %2240 = vmatpush1.bf16.msra.mxu0 0
    %2241 = vmatprep.subr.bf16.mxu0 0
    %2242 = vmatpush1.bf16.msra.mxu0 0
    %2243 = vmatprep.subr.bf16.mxu0 0
    %2244 = vmatpush1.bf16.msra.mxu0 0
    %2245 = vmatprep.subr.bf16.mxu0 0
    %2246 = vmatpush1.bf16.msra.mxu0 0
    %2247 = vmatprep.subr.bf16.mxu0 0
    %2248 = vmatpush1.bf16.msra.mxu0 0
    %2249 = vmatprep.subr.bf16.mxu0 0
    %2250 = vmatpush1.bf16.msra.mxu0 0
    %2251 = vmatprep.mubr.bf16.mxu0 0
    %2252 = vmatmul.mubr.bf16.gmra.mrb[0].mxu0 %v2217
    %v2253 = vpop.f32.mrb[0].mxu0
    %v2254 = vadd.f32 %v2202, %v2253
    %v2255 = vpop.f32.mrb[0].mxu0
    %v2256 = vpop.f32.mrb[0].mxu0
    %v2257 = vadd.f32 %v2202, %v2256
    %v2258 = vpop.f32.mrb[0].mxu0
    %2259 = vdwg.mxu0
    %v2260 = vmul.f32 %v2254, 0.35355338
    %v2261 = vmul.f32 %v2257, 0.35355338
    %2264 = vrot.lane.b32.xlu0 %v2260, 120
    %v2265 = vpop.permute.xlu0 %2264
    %2266 = vrot.lane.b32.xlu0 %v2261, 120
    %v2267 = vpop.permute.xlu0 %2266
    %2270 = vrot.lane.b32.xlu0 %v2260, 112
    %v2271 = vpop.permute.xlu0 %2270
    %2272 = vrot.lane.b32.xlu0 %v2261, 112
    %v2273 = vpop.permute.xlu0 %2272
    %2276 = vrot.lane.b32.xlu0 %v2260, 104
    %v2277 = vpop.permute.xlu0 %2276
    %2278 = vrot.lane.b32.xlu0 %v2261, 104
    %v2279 = vpop.permute.xlu0 %2278
    %v2282 = vcombine.low %v2260, %v2271
    %v2283 = vcombine.high %v2260, %v2271
    %v2285 = vunpack.c.l.s4 1983009808
    %v2286 = vunpack.c.0.s8 %v2285
    %v2287 = vlaneseq
    %v2288 = vshrl.u32 %v2287, 7
    %v2289 = vsub.s32 %v2286, %v2288
    %v2290 = vrot.slane %v2282, %v2289
    %v2292 = vunpack.c.l.s4 1983009808
    %v2293 = vunpack.c.0.s8 %v2292
    %v2294 = vlaneseq
    %v2295 = vshrl.u32 %v2294, 7
    %v2296 = vsub.s32 %v2293, %v2295
    %v2297 = vrot.slane %v2283, %v2296
    %v2298 = vcombine.low %v2265, %v2277
    %v2299 = vcombine.high %v2265, %v2277
    %v2301 = vunpack.c.l.s4 1983009808
    %v2302 = vunpack.c.0.s8 %v2301
    %v2303 = vlaneseq
    %v2304 = vshrl.u32 %v2303, 7
    %v2305 = vsub.s32 %v2302, %v2304
    %v2306 = vrot.slane %v2298, %v2305
    %v2308 = vunpack.c.l.s4 1983009808
    %v2309 = vunpack.c.0.s8 %v2308
    %v2310 = vlaneseq
    %v2311 = vshrl.u32 %v2310, 7
    %v2312 = vsub.s32 %v2309, %v2311
    %v2313 = vrot.slane %v2299, %v2312
    %v2314 = vcombine.low %v2290, %v2306
    %v2315 = vcombine.high %v2290, %v2306
    %v2317 = vunpack.c.l.s4 1934713408
    %v2318 = vunpack.c.0.s8 %v2317
    %v2319 = vlaneseq
    %v2320 = vshrl.u32 %v2319, 7
    %v2321 = vsub.s32 %v2318, %v2320
    %v2322 = vrot.slane %v2314, %v2321
    %v2324 = vunpack.c.l.s4 1934713408
    %v2325 = vunpack.c.0.s8 %v2324
    %v2326 = vlaneseq
    %v2327 = vshrl.u32 %v2326, 7
    %v2328 = vsub.s32 %v2325, %v2327
    %v2329 = vrot.slane %v2315, %v2328
    %v2330 = vcombine.low %v2297, %v2313
    %v2331 = vcombine.high %v2297, %v2313
    %v2333 = vunpack.c.l.s4 1934713408
    %v2334 = vunpack.c.0.s8 %v2333
    %v2335 = vlaneseq
    %v2336 = vshrl.u32 %v2335, 7
    %v2337 = vsub.s32 %v2334, %v2336
    %v2338 = vrot.slane %v2330, %v2337
    %v2340 = vunpack.c.l.s4 1934713408
    %v2341 = vunpack.c.0.s8 %v2340
    %v2342 = vlaneseq
    %v2343 = vshrl.u32 %v2342, 7
    %v2344 = vsub.s32 %v2341, %v2343
    %v2345 = vrot.slane %v2331, %v2344
    %v2346 = vcombine.high %v2322, 0.0
    %v2347 = vcombine.high %v2329, 0.0
    %v2348 = vcombine.high %v2338, 0.0
    %v2349 = vcombine.high %v2345, 0.0
    %v2350 = vcombine.low %v2261, %v2273
    %v2351 = vcombine.high %v2261, %v2273
    %v2353 = vunpack.c.l.s4 1983009808
    %v2354 = vunpack.c.0.s8 %v2353
    %v2355 = vlaneseq
    %v2356 = vshrl.u32 %v2355, 7
    %v2357 = vsub.s32 %v2354, %v2356
    %v2358 = vrot.slane %v2350, %v2357
    %v2360 = vunpack.c.l.s4 1983009808
    %v2361 = vunpack.c.0.s8 %v2360
    %v2362 = vlaneseq
    %v2363 = vshrl.u32 %v2362, 7
    %v2364 = vsub.s32 %v2361, %v2363
    %v2365 = vrot.slane %v2351, %v2364
    %v2366 = vcombine.low %v2267, %v2279
    %v2367 = vcombine.high %v2267, %v2279
    %v2369 = vunpack.c.l.s4 1983009808
    %v2370 = vunpack.c.0.s8 %v2369
    %v2371 = vlaneseq
    %v2372 = vshrl.u32 %v2371, 7
    %v2373 = vsub.s32 %v2370, %v2372
    %v2374 = vrot.slane %v2366, %v2373
    %v2376 = vunpack.c.l.s4 1983009808
    %v2377 = vunpack.c.0.s8 %v2376
    %v2378 = vlaneseq
    %v2379 = vshrl.u32 %v2378, 7
    %v2380 = vsub.s32 %v2377, %v2379
    %v2381 = vrot.slane %v2367, %v2380
    %v2382 = vcombine.low %v2358, %v2374
    %v2383 = vcombine.high %v2358, %v2374
    %v2385 = vunpack.c.l.s4 1934713408
    %v2386 = vunpack.c.0.s8 %v2385
    %v2387 = vlaneseq
    %v2388 = vshrl.u32 %v2387, 7
    %v2389 = vsub.s32 %v2386, %v2388
    %v2390 = vrot.slane %v2382, %v2389
    %v2392 = vunpack.c.l.s4 1934713408
    %v2393 = vunpack.c.0.s8 %v2392
    %v2394 = vlaneseq
    %v2395 = vshrl.u32 %v2394, 7
    %v2396 = vsub.s32 %v2393, %v2395
    %v2397 = vrot.slane %v2383, %v2396
    %v2398 = vcombine.low %v2365, %v2381
    %v2399 = vcombine.high %v2365, %v2381
    %v2401 = vunpack.c.l.s4 1934713408
    %v2402 = vunpack.c.0.s8 %v2401
    %v2403 = vlaneseq
    %v2404 = vshrl.u32 %v2403, 7
    %v2405 = vsub.s32 %v2402, %v2404
    %v2406 = vrot.slane %v2398, %v2405
    %v2408 = vunpack.c.l.s4 1934713408
    %v2409 = vunpack.c.0.s8 %v2408
    %v2410 = vlaneseq
    %v2411 = vshrl.u32 %v2410, 7
    %v2412 = vsub.s32 %v2409, %v2411
    %v2413 = vrot.slane %v2399, %v2412
    %v2414 = vcombine.high %v2390, 0.0
    %v2415 = vcombine.high %v2397, 0.0
    %v2416 = vcombine.high %v2406, 0.0
    %v2417 = vcombine.high %v2413, 0.0
    %v2418 = vcombine.low %v2322, %v2329
    %v2420 = vunpack.c.l.s4 1983009808
    %v2421 = vunpack.c.0.s8 %v2420
    %v2422 = vlaneseq
    %v2423 = vshrl.u32 %v2422, 7
    %v2424 = vsub.s32 %v2421, %v2423
    %v2425 = vrot.slane %v2418, %v2424
    %v2426 = vcombine.low %v2346, %v2347
    %v2428 = vunpack.c.l.s4 1983009808
    %v2429 = vunpack.c.0.s8 %v2428
    %v2430 = vlaneseq
    %v2431 = vshrl.u32 %v2430, 7
    %v2432 = vsub.s32 %v2429, %v2431
    %v2433 = vrot.slane %v2426, %v2432
    %v2434 = vcombine.low %v2338, %v2345
    %v2436 = vunpack.c.l.s4 1983009808
    %v2437 = vunpack.c.0.s8 %v2436
    %v2438 = vlaneseq
    %v2439 = vshrl.u32 %v2438, 7
    %v2440 = vsub.s32 %v2437, %v2439
    %v2441 = vrot.slane %v2434, %v2440
    %v2442 = vcombine.low %v2348, %v2349
    %v2444 = vunpack.c.l.s4 1983009808
    %v2445 = vunpack.c.0.s8 %v2444
    %v2446 = vlaneseq
    %v2447 = vshrl.u32 %v2446, 7
    %v2448 = vsub.s32 %v2445, %v2447
    %v2449 = vrot.slane %v2442, %v2448
    %v2450 = vcombine.low %v2425, %v2433
    %v2451 = vcombine.high %v2425, %v2433
    %v2453 = vunpack.c.l.s4 1934713408
    %v2454 = vunpack.c.0.s8 %v2453
    %v2455 = vlaneseq
    %v2456 = vshrl.u32 %v2455, 7
    %v2457 = vsub.s32 %v2454, %v2456
    %v2458 = vrot.slane %v2450, %v2457
    %v2460 = vunpack.c.l.s4 1934713408
    %v2461 = vunpack.c.0.s8 %v2460
    %v2462 = vlaneseq
    %v2463 = vshrl.u32 %v2462, 7
    %v2464 = vsub.s32 %v2461, %v2463
    %v2465 = vrot.slane %v2451, %v2464
    %v2466 = vcombine.low %v2441, %v2449
    %v2467 = vcombine.high %v2441, %v2449
    %v2469 = vunpack.c.l.s4 1934713408
    %v2470 = vunpack.c.0.s8 %v2469
    %v2471 = vlaneseq
    %v2472 = vshrl.u32 %v2471, 7
    %v2473 = vsub.s32 %v2470, %v2472
    %v2474 = vrot.slane %v2466, %v2473
    %v2476 = vunpack.c.l.s4 1934713408
    %v2477 = vunpack.c.0.s8 %v2476
    %v2478 = vlaneseq
    %v2479 = vshrl.u32 %v2478, 7
    %v2480 = vsub.s32 %v2477, %v2479
    %v2481 = vrot.slane %v2467, %v2480
    %v2482 = vcombine.low %v2458, %v2474
    %v2483 = vcombine.high %v2458, %v2474
    %v2484 = vcombine.low %v2465, %v2481
    %v2485 = vcombine.high %v2465, %v2481
    %v2486 = vcombine.low %v2390, %v2397
    %v2488 = vunpack.c.l.s4 1983009808
    %v2489 = vunpack.c.0.s8 %v2488
    %v2490 = vlaneseq
    %v2491 = vshrl.u32 %v2490, 7
    %v2492 = vsub.s32 %v2489, %v2491
    %v2493 = vrot.slane %v2486, %v2492
    %v2494 = vcombine.low %v2414, %v2415
    %v2496 = vunpack.c.l.s4 1983009808
    %v2497 = vunpack.c.0.s8 %v2496
    %v2498 = vlaneseq
    %v2499 = vshrl.u32 %v2498, 7
    %v2500 = vsub.s32 %v2497, %v2499
    %v2501 = vrot.slane %v2494, %v2500
    %v2502 = vcombine.low %v2406, %v2413
    %v2504 = vunpack.c.l.s4 1983009808
    %v2505 = vunpack.c.0.s8 %v2504
    %v2506 = vlaneseq
    %v2507 = vshrl.u32 %v2506, 7
    %v2508 = vsub.s32 %v2505, %v2507
    %v2509 = vrot.slane %v2502, %v2508
    %v2510 = vcombine.low %v2416, %v2417
    %v2512 = vunpack.c.l.s4 1983009808
    %v2513 = vunpack.c.0.s8 %v2512
    %v2514 = vlaneseq
    %v2515 = vshrl.u32 %v2514, 7
    %v2516 = vsub.s32 %v2513, %v2515
    %v2517 = vrot.slane %v2510, %v2516
    %v2518 = vcombine.low %v2493, %v2501
    %v2519 = vcombine.high %v2493, %v2501
    %v2521 = vunpack.c.l.s4 1934713408
    %v2522 = vunpack.c.0.s8 %v2521
    %v2523 = vlaneseq
    %v2524 = vshrl.u32 %v2523, 7
    %v2525 = vsub.s32 %v2522, %v2524
    %v2526 = vrot.slane %v2518, %v2525
    %v2528 = vunpack.c.l.s4 1934713408
    %v2529 = vunpack.c.0.s8 %v2528
    %v2530 = vlaneseq
    %v2531 = vshrl.u32 %v2530, 7
    %v2532 = vsub.s32 %v2529, %v2531
    %v2533 = vrot.slane %v2519, %v2532
    %v2534 = vcombine.low %v2509, %v2517
    %v2535 = vcombine.high %v2509, %v2517
    %v2537 = vunpack.c.l.s4 1934713408
    %v2538 = vunpack.c.0.s8 %v2537
    %v2539 = vlaneseq
    %v2540 = vshrl.u32 %v2539, 7
    %v2541 = vsub.s32 %v2538, %v2540
    %v2542 = vrot.slane %v2534, %v2541
    %v2544 = vunpack.c.l.s4 1934713408
    %v2545 = vunpack.c.0.s8 %v2544
    %v2546 = vlaneseq
    %v2547 = vshrl.u32 %v2546, 7
    %v2548 = vsub.s32 %v2545, %v2547
    %v2549 = vrot.slane %v2535, %v2548
    %v2550 = vcombine.low %v2526, %v2542
    %v2551 = vcombine.high %v2526, %v2542
    %v2552 = vcombine.low %v2533, %v2549
    %v2553 = vcombine.high %v2533, %v2549
    %v2554 = vpack.c.bf16 %v2550, %v2482
    %v2555 = vpack.c.bf16 %v2551, %v2483
    %v2556 = vpack.c.bf16 %v2552, %v2484
    %v2557 = vpack.c.bf16 %v2553, %v2485
    %2560 = vrot.lane.b32.xlu0 %v2254, 120
    %v2561 = vpop.permute.xlu0 %2560
    %2562 = vrot.lane.b32.xlu0 %v2257, 120
    %v2563 = vpop.permute.xlu0 %2562
    %2564 = vrot.lane.b32.xlu0 %v2254, 112
    %v2565 = vpop.permute.xlu0 %2564
    %2566 = vrot.lane.b32.xlu0 %v2257, 112
    %v2567 = vpop.permute.xlu0 %2566
    %2568 = vrot.lane.b32.xlu0 %v2254, 104
    %v2569 = vpop.permute.xlu0 %2568
    %2570 = vrot.lane.b32.xlu0 %v2257, 104
    %v2571 = vpop.permute.xlu0 %2570
    %2572 = vrot.lane.b32.xlu0 %v2254, 96
    %v2573 = vpop.permute.xlu0 %2572
    %2574 = vrot.lane.b32.xlu0 %v2257, 96
    %v2575 = vpop.permute.xlu0 %2574
    %2576 = vrot.lane.b32.xlu0 %v2561, 96
    %v2577 = vpop.permute.xlu0 %2576
    %2578 = vrot.lane.b32.xlu0 %v2563, 96
    %v2579 = vpop.permute.xlu0 %2578
    %2580 = vrot.lane.b32.xlu0 %v2565, 96
    %v2581 = vpop.permute.xlu0 %2580
    %2582 = vrot.lane.b32.xlu0 %v2567, 96
    %v2583 = vpop.permute.xlu0 %2582
    %2584 = vrot.lane.b32.xlu0 %v2569, 96
    %v2585 = vpop.permute.xlu0 %2584
    %2586 = vrot.lane.b32.xlu0 %v2571, 96
    %v2587 = vpop.permute.xlu0 %2586
    %v2596 = vcombine.low %v2573, %v2581
    %v2597 = vcombine.high %v2573, %v2581
    %v2599 = vunpack.c.l.s4 1983009808
    %v2600 = vunpack.c.0.s8 %v2599
    %v2601 = vlaneseq
    %v2602 = vshrl.u32 %v2601, 7
    %v2603 = vsub.s32 %v2600, %v2602
    %v2604 = vrot.slane %v2596, %v2603
    %v2606 = vunpack.c.l.s4 1983009808
    %v2607 = vunpack.c.0.s8 %v2606
    %v2608 = vlaneseq
    %v2609 = vshrl.u32 %v2608, 7
    %v2610 = vsub.s32 %v2607, %v2609
    %v2611 = vrot.slane %v2597, %v2610
    %v2612 = vcombine.low %v2577, %v2585
    %v2613 = vcombine.high %v2577, %v2585
    %v2615 = vunpack.c.l.s4 1983009808
    %v2616 = vunpack.c.0.s8 %v2615
    %v2617 = vlaneseq
    %v2618 = vshrl.u32 %v2617, 7
    %v2619 = vsub.s32 %v2616, %v2618
    %v2620 = vrot.slane %v2612, %v2619
    %v2622 = vunpack.c.l.s4 1983009808
    %v2623 = vunpack.c.0.s8 %v2622
    %v2624 = vlaneseq
    %v2625 = vshrl.u32 %v2624, 7
    %v2626 = vsub.s32 %v2623, %v2625
    %v2627 = vrot.slane %v2613, %v2626
    %v2628 = vcombine.low %v2604, %v2620
    %v2629 = vcombine.high %v2604, %v2620
    %v2631 = vunpack.c.l.s4 1934713408
    %v2632 = vunpack.c.0.s8 %v2631
    %v2633 = vlaneseq
    %v2634 = vshrl.u32 %v2633, 7
    %v2635 = vsub.s32 %v2632, %v2634
    %v2636 = vrot.slane %v2628, %v2635
    %v2638 = vunpack.c.l.s4 1934713408
    %v2639 = vunpack.c.0.s8 %v2638
    %v2640 = vlaneseq
    %v2641 = vshrl.u32 %v2640, 7
    %v2642 = vsub.s32 %v2639, %v2641
    %v2643 = vrot.slane %v2629, %v2642
    %v2644 = vcombine.low %v2611, %v2627
    %v2645 = vcombine.high %v2611, %v2627
    %v2647 = vunpack.c.l.s4 1934713408
    %v2648 = vunpack.c.0.s8 %v2647
    %v2649 = vlaneseq
    %v2650 = vshrl.u32 %v2649, 7
    %v2651 = vsub.s32 %v2648, %v2650
    %v2652 = vrot.slane %v2644, %v2651
    %v2654 = vunpack.c.l.s4 1934713408
    %v2655 = vunpack.c.0.s8 %v2654
    %v2656 = vlaneseq
    %v2657 = vshrl.u32 %v2656, 7
    %v2658 = vsub.s32 %v2655, %v2657
    %v2659 = vrot.slane %v2645, %v2658
    %v2660 = vcombine.high %v2636, 0.0
    %v2661 = vcombine.high %v2643, 0.0
    %v2662 = vcombine.high %v2652, 0.0
    %v2663 = vcombine.high %v2659, 0.0
    %v2664 = vcombine.low %v2575, %v2583
    %v2665 = vcombine.high %v2575, %v2583
    %v2667 = vunpack.c.l.s4 1983009808
    %v2668 = vunpack.c.0.s8 %v2667
    %v2669 = vlaneseq
    %v2670 = vshrl.u32 %v2669, 7
    %v2671 = vsub.s32 %v2668, %v2670
    %v2672 = vrot.slane %v2664, %v2671
    %v2674 = vunpack.c.l.s4 1983009808
    %v2675 = vunpack.c.0.s8 %v2674
    %v2676 = vlaneseq
    %v2677 = vshrl.u32 %v2676, 7
    %v2678 = vsub.s32 %v2675, %v2677
    %v2679 = vrot.slane %v2665, %v2678
    %v2680 = vcombine.low %v2579, %v2587
    %v2681 = vcombine.high %v2579, %v2587
    %v2683 = vunpack.c.l.s4 1983009808
    %v2684 = vunpack.c.0.s8 %v2683
    %v2685 = vlaneseq
    %v2686 = vshrl.u32 %v2685, 7
    %v2687 = vsub.s32 %v2684, %v2686
    %v2688 = vrot.slane %v2680, %v2687
    %v2690 = vunpack.c.l.s4 1983009808
    %v2691 = vunpack.c.0.s8 %v2690
    %v2692 = vlaneseq
    %v2693 = vshrl.u32 %v2692, 7
    %v2694 = vsub.s32 %v2691, %v2693
    %v2695 = vrot.slane %v2681, %v2694
    %v2696 = vcombine.low %v2672, %v2688
    %v2697 = vcombine.high %v2672, %v2688
    %v2699 = vunpack.c.l.s4 1934713408
    %v2700 = vunpack.c.0.s8 %v2699
    %v2701 = vlaneseq
    %v2702 = vshrl.u32 %v2701, 7
    %v2703 = vsub.s32 %v2700, %v2702
    %v2704 = vrot.slane %v2696, %v2703
    %v2706 = vunpack.c.l.s4 1934713408
    %v2707 = vunpack.c.0.s8 %v2706
    %v2708 = vlaneseq
    %v2709 = vshrl.u32 %v2708, 7
    %v2710 = vsub.s32 %v2707, %v2709
    %v2711 = vrot.slane %v2697, %v2710
    %v2712 = vcombine.low %v2679, %v2695
    %v2713 = vcombine.high %v2679, %v2695
    %v2715 = vunpack.c.l.s4 1934713408
    %v2716 = vunpack.c.0.s8 %v2715
    %v2717 = vlaneseq
    %v2718 = vshrl.u32 %v2717, 7
    %v2719 = vsub.s32 %v2716, %v2718
    %v2720 = vrot.slane %v2712, %v2719
    %v2722 = vunpack.c.l.s4 1934713408
    %v2723 = vunpack.c.0.s8 %v2722
    %v2724 = vlaneseq
    %v2725 = vshrl.u32 %v2724, 7
    %v2726 = vsub.s32 %v2723, %v2725
    %v2727 = vrot.slane %v2713, %v2726
    %v2728 = vcombine.high %v2704, 0.0
    %v2729 = vcombine.high %v2711, 0.0
    %v2730 = vcombine.high %v2720, 0.0
    %v2731 = vcombine.high %v2727, 0.0
    %v2732 = vcombine.low %v2636, %v2643
    %v2734 = vunpack.c.l.s4 1983009808
    %v2735 = vunpack.c.0.s8 %v2734
    %v2736 = vlaneseq
    %v2737 = vshrl.u32 %v2736, 7
    %v2738 = vsub.s32 %v2735, %v2737
    %v2739 = vrot.slane %v2732, %v2738
    %v2740 = vcombine.low %v2660, %v2661
    %v2742 = vunpack.c.l.s4 1983009808
    %v2743 = vunpack.c.0.s8 %v2742
    %v2744 = vlaneseq
    %v2745 = vshrl.u32 %v2744, 7
    %v2746 = vsub.s32 %v2743, %v2745
    %v2747 = vrot.slane %v2740, %v2746
    %v2748 = vcombine.low %v2652, %v2659
    %v2750 = vunpack.c.l.s4 1983009808
    %v2751 = vunpack.c.0.s8 %v2750
    %v2752 = vlaneseq
    %v2753 = vshrl.u32 %v2752, 7
    %v2754 = vsub.s32 %v2751, %v2753
    %v2755 = vrot.slane %v2748, %v2754
    %v2756 = vcombine.low %v2662, %v2663
    %v2758 = vunpack.c.l.s4 1983009808
    %v2759 = vunpack.c.0.s8 %v2758
    %v2760 = vlaneseq
    %v2761 = vshrl.u32 %v2760, 7
    %v2762 = vsub.s32 %v2759, %v2761
    %v2763 = vrot.slane %v2756, %v2762
    %v2764 = vcombine.low %v2739, %v2747
    %v2765 = vcombine.high %v2739, %v2747
    %v2767 = vunpack.c.l.s4 1934713408
    %v2768 = vunpack.c.0.s8 %v2767
    %v2769 = vlaneseq
    %v2770 = vshrl.u32 %v2769, 7
    %v2771 = vsub.s32 %v2768, %v2770
    %v2772 = vrot.slane %v2764, %v2771
    %v2774 = vunpack.c.l.s4 1934713408
    %v2775 = vunpack.c.0.s8 %v2774
    %v2776 = vlaneseq
    %v2777 = vshrl.u32 %v2776, 7
    %v2778 = vsub.s32 %v2775, %v2777
    %v2779 = vrot.slane %v2765, %v2778
    %v2780 = vcombine.low %v2755, %v2763
    %v2781 = vcombine.high %v2755, %v2763
    %v2783 = vunpack.c.l.s4 1934713408
    %v2784 = vunpack.c.0.s8 %v2783
    %v2785 = vlaneseq
    %v2786 = vshrl.u32 %v2785, 7
    %v2787 = vsub.s32 %v2784, %v2786
    %v2788 = vrot.slane %v2780, %v2787
    %v2790 = vunpack.c.l.s4 1934713408
    %v2791 = vunpack.c.0.s8 %v2790
    %v2792 = vlaneseq
    %v2793 = vshrl.u32 %v2792, 7
    %v2794 = vsub.s32 %v2791, %v2793
    %v2795 = vrot.slane %v2781, %v2794
    %v2796 = vcombine.low %v2772, %v2788
    %v2797 = vcombine.high %v2772, %v2788
    %v2798 = vcombine.low %v2779, %v2795
    %v2799 = vcombine.high %v2779, %v2795
    %v2800 = vcombine.low %v2704, %v2711
    %v2802 = vunpack.c.l.s4 1983009808
    %v2803 = vunpack.c.0.s8 %v2802
    %v2804 = vlaneseq
    %v2805 = vshrl.u32 %v2804, 7
    %v2806 = vsub.s32 %v2803, %v2805
    %v2807 = vrot.slane %v2800, %v2806
    %v2808 = vcombine.low %v2728, %v2729
    %v2810 = vunpack.c.l.s4 1983009808
    %v2811 = vunpack.c.0.s8 %v2810
    %v2812 = vlaneseq
    %v2813 = vshrl.u32 %v2812, 7
    %v2814 = vsub.s32 %v2811, %v2813
    %v2815 = vrot.slane %v2808, %v2814
    %v2816 = vcombine.low %v2720, %v2727
    %v2818 = vunpack.c.l.s4 1983009808
    %v2819 = vunpack.c.0.s8 %v2818
    %v2820 = vlaneseq
    %v2821 = vshrl.u32 %v2820, 7
    %v2822 = vsub.s32 %v2819, %v2821
    %v2823 = vrot.slane %v2816, %v2822
    %v2824 = vcombine.low %v2730, %v2731
    %v2826 = vunpack.c.l.s4 1983009808
    %v2827 = vunpack.c.0.s8 %v2826
    %v2828 = vlaneseq
    %v2829 = vshrl.u32 %v2828, 7
    %v2830 = vsub.s32 %v2827, %v2829
    %v2831 = vrot.slane %v2824, %v2830
    %v2832 = vcombine.low %v2807, %v2815
    %v2833 = vcombine.high %v2807, %v2815
    %v2835 = vunpack.c.l.s4 1934713408
    %v2836 = vunpack.c.0.s8 %v2835
    %v2837 = vlaneseq
    %v2838 = vshrl.u32 %v2837, 7
    %v2839 = vsub.s32 %v2836, %v2838
    %v2840 = vrot.slane %v2832, %v2839
    %v2842 = vunpack.c.l.s4 1934713408
    %v2843 = vunpack.c.0.s8 %v2842
    %v2844 = vlaneseq
    %v2845 = vshrl.u32 %v2844, 7
    %v2846 = vsub.s32 %v2843, %v2845
    %v2847 = vrot.slane %v2833, %v2846
    %v2848 = vcombine.low %v2823, %v2831
    %v2849 = vcombine.high %v2823, %v2831
    %v2851 = vunpack.c.l.s4 1934713408
    %v2852 = vunpack.c.0.s8 %v2851
    %v2853 = vlaneseq
    %v2854 = vshrl.u32 %v2853, 7
    %v2855 = vsub.s32 %v2852, %v2854
    %v2856 = vrot.slane %v2848, %v2855
    %v2858 = vunpack.c.l.s4 1934713408
    %v2859 = vunpack.c.0.s8 %v2858
    %v2860 = vlaneseq
    %v2861 = vshrl.u32 %v2860, 7
    %v2862 = vsub.s32 %v2859, %v2861
    %v2863 = vrot.slane %v2849, %v2862
    %v2864 = vcombine.low %v2840, %v2856
    %v2865 = vcombine.high %v2840, %v2856
    %v2866 = vcombine.low %v2847, %v2863
    %v2867 = vcombine.high %v2847, %v2863
    %v2868 = vpack.c.bf16 %v2864, %v2796
    %v2869 = vpack.c.bf16 %v2865, %v2797
    %v2870 = vpack.c.bf16 %v2866, %v2798
    %v2871 = vpack.c.bf16 %v2867, %v2799
    %2872 = vrot.lane.b32.xlu0 %v2254, 64
    %v2873 = vpop.permute.xlu0 %2872
    %2874 = vrot.lane.b32.xlu0 %v2257, 64
    %v2875 = vpop.permute.xlu0 %2874
    %2876 = vrot.lane.b32.xlu0 %v2561, 64
    %v2877 = vpop.permute.xlu0 %2876
    %2878 = vrot.lane.b32.xlu0 %v2563, 64
    %v2879 = vpop.permute.xlu0 %2878
    %2880 = vrot.lane.b32.xlu0 %v2565, 64
    %v2881 = vpop.permute.xlu0 %2880
    %2882 = vrot.lane.b32.xlu0 %v2567, 64
    %v2883 = vpop.permute.xlu0 %2882
    %2884 = vrot.lane.b32.xlu0 %v2569, 64
    %v2885 = vpop.permute.xlu0 %2884
    %2886 = vrot.lane.b32.xlu0 %v2571, 64
    %v2887 = vpop.permute.xlu0 %2886
    %v2896 = vcombine.low %v2873, %v2881
    %v2897 = vcombine.high %v2873, %v2881
    %v2899 = vunpack.c.l.s4 1983009808
    %v2900 = vunpack.c.0.s8 %v2899
    %v2901 = vlaneseq
    %v2902 = vshrl.u32 %v2901, 7
    %v2903 = vsub.s32 %v2900, %v2902
    %v2904 = vrot.slane %v2896, %v2903
    %v2906 = vunpack.c.l.s4 1983009808
    %v2907 = vunpack.c.0.s8 %v2906
    %v2908 = vlaneseq
    %v2909 = vshrl.u32 %v2908, 7
    %v2910 = vsub.s32 %v2907, %v2909
    %v2911 = vrot.slane %v2897, %v2910
    %v2912 = vcombine.low %v2877, %v2885
    %v2913 = vcombine.high %v2877, %v2885
    %v2915 = vunpack.c.l.s4 1983009808
    %v2916 = vunpack.c.0.s8 %v2915
    %v2917 = vlaneseq
    %v2918 = vshrl.u32 %v2917, 7
    %v2919 = vsub.s32 %v2916, %v2918
    %v2920 = vrot.slane %v2912, %v2919
    %v2922 = vunpack.c.l.s4 1983009808
    %v2923 = vunpack.c.0.s8 %v2922
    %v2924 = vlaneseq
    %v2925 = vshrl.u32 %v2924, 7
    %v2926 = vsub.s32 %v2923, %v2925
    %v2927 = vrot.slane %v2913, %v2926
    %v2928 = vcombine.low %v2904, %v2920
    %v2929 = vcombine.high %v2904, %v2920
    %v2931 = vunpack.c.l.s4 1934713408
    %v2932 = vunpack.c.0.s8 %v2931
    %v2933 = vlaneseq
    %v2934 = vshrl.u32 %v2933, 7
    %v2935 = vsub.s32 %v2932, %v2934
    %v2936 = vrot.slane %v2928, %v2935
    %v2938 = vunpack.c.l.s4 1934713408
    %v2939 = vunpack.c.0.s8 %v2938
    %v2940 = vlaneseq
    %v2941 = vshrl.u32 %v2940, 7
    %v2942 = vsub.s32 %v2939, %v2941
    %v2943 = vrot.slane %v2929, %v2942
    %v2944 = vcombine.low %v2911, %v2927
    %v2945 = vcombine.high %v2911, %v2927
    %v2947 = vunpack.c.l.s4 1934713408
    %v2948 = vunpack.c.0.s8 %v2947
    %v2949 = vlaneseq
    %v2950 = vshrl.u32 %v2949, 7
    %v2951 = vsub.s32 %v2948, %v2950
    %v2952 = vrot.slane %v2944, %v2951
    %v2954 = vunpack.c.l.s4 1934713408
    %v2955 = vunpack.c.0.s8 %v2954
    %v2956 = vlaneseq
    %v2957 = vshrl.u32 %v2956, 7
    %v2958 = vsub.s32 %v2955, %v2957
    %v2959 = vrot.slane %v2945, %v2958
    %v2960 = vcombine.high %v2936, 0.0
    %v2961 = vcombine.high %v2943, 0.0
    %v2962 = vcombine.high %v2952, 0.0
    %v2963 = vcombine.high %v2959, 0.0
    %v2964 = vcombine.low %v2875, %v2883
    %v2965 = vcombine.high %v2875, %v2883
    %v2967 = vunpack.c.l.s4 1983009808
    %v2968 = vunpack.c.0.s8 %v2967
    %v2969 = vlaneseq
    %v2970 = vshrl.u32 %v2969, 7
    %v2971 = vsub.s32 %v2968, %v2970
    %v2972 = vrot.slane %v2964, %v2971
    %v2974 = vunpack.c.l.s4 1983009808
    %v2975 = vunpack.c.0.s8 %v2974
    %v2976 = vlaneseq
    %v2977 = vshrl.u32 %v2976, 7
    %v2978 = vsub.s32 %v2975, %v2977
    %v2979 = vrot.slane %v2965, %v2978
    %v2980 = vcombine.low %v2879, %v2887
    %v2981 = vcombine.high %v2879, %v2887
    %v2983 = vunpack.c.l.s4 1983009808
    %v2984 = vunpack.c.0.s8 %v2983
    %v2985 = vlaneseq
    %v2986 = vshrl.u32 %v2985, 7
    %v2987 = vsub.s32 %v2984, %v2986
    %v2988 = vrot.slane %v2980, %v2987
    %v2990 = vunpack.c.l.s4 1983009808
    %v2991 = vunpack.c.0.s8 %v2990
    %v2992 = vlaneseq
    %v2993 = vshrl.u32 %v2992, 7
    %v2994 = vsub.s32 %v2991, %v2993
    %v2995 = vrot.slane %v2981, %v2994
    %v2996 = vcombine.low %v2972, %v2988
    %v2997 = vcombine.high %v2972, %v2988
    %v2999 = vunpack.c.l.s4 1934713408
    %v3000 = vunpack.c.0.s8 %v2999
    %v3001 = vlaneseq
    %v3002 = vshrl.u32 %v3001, 7
    %v3003 = vsub.s32 %v3000, %v3002
    %v3004 = vrot.slane %v2996, %v3003
    %v3006 = vunpack.c.l.s4 1934713408
    %v3007 = vunpack.c.0.s8 %v3006
    %v3008 = vlaneseq
    %v3009 = vshrl.u32 %v3008, 7
    %v3010 = vsub.s32 %v3007, %v3009
    %v3011 = vrot.slane %v2997, %v3010
    %v3012 = vcombine.low %v2979, %v2995
    %v3013 = vcombine.high %v2979, %v2995
    %v3015 = vunpack.c.l.s4 1934713408
    %v3016 = vunpack.c.0.s8 %v3015
    %v3017 = vlaneseq
    %v3018 = vshrl.u32 %v3017, 7
    %v3019 = vsub.s32 %v3016, %v3018
    %v3020 = vrot.slane %v3012, %v3019
    %v3022 = vunpack.c.l.s4 1934713408
    %v3023 = vunpack.c.0.s8 %v3022
    %v3024 = vlaneseq
    %v3025 = vshrl.u32 %v3024, 7
    %v3026 = vsub.s32 %v3023, %v3025
    %v3027 = vrot.slane %v3013, %v3026
    %v3028 = vcombine.high %v3004, 0.0
    %v3029 = vcombine.high %v3011, 0.0
    %v3030 = vcombine.high %v3020, 0.0
    %v3031 = vcombine.high %v3027, 0.0
    %v3032 = vcombine.low %v2936, %v2943
    %v3034 = vunpack.c.l.s4 1983009808
    %v3035 = vunpack.c.0.s8 %v3034
    %v3036 = vlaneseq
    %v3037 = vshrl.u32 %v3036, 7
    %v3038 = vsub.s32 %v3035, %v3037
    %v3039 = vrot.slane %v3032, %v3038
    %v3040 = vcombine.low %v2960, %v2961
    %v3042 = vunpack.c.l.s4 1983009808
    %v3043 = vunpack.c.0.s8 %v3042
    %v3044 = vlaneseq
    %v3045 = vshrl.u32 %v3044, 7
    %v3046 = vsub.s32 %v3043, %v3045
    %v3047 = vrot.slane %v3040, %v3046
    %v3048 = vcombine.low %v2952, %v2959
    %v3050 = vunpack.c.l.s4 1983009808
    %v3051 = vunpack.c.0.s8 %v3050
    %v3052 = vlaneseq
    %v3053 = vshrl.u32 %v3052, 7
    %v3054 = vsub.s32 %v3051, %v3053
    %v3055 = vrot.slane %v3048, %v3054
    %v3056 = vcombine.low %v2962, %v2963
    %v3058 = vunpack.c.l.s4 1983009808
    %v3059 = vunpack.c.0.s8 %v3058
    %v3060 = vlaneseq
    %v3061 = vshrl.u32 %v3060, 7
    %v3062 = vsub.s32 %v3059, %v3061
    %v3063 = vrot.slane %v3056, %v3062
    %v3064 = vcombine.low %v3039, %v3047
    %v3065 = vcombine.high %v3039, %v3047
    %v3067 = vunpack.c.l.s4 1934713408
    %v3068 = vunpack.c.0.s8 %v3067
    %v3069 = vlaneseq
    %v3070 = vshrl.u32 %v3069, 7
    %v3071 = vsub.s32 %v3068, %v3070
    %v3072 = vrot.slane %v3064, %v3071
    %v3074 = vunpack.c.l.s4 1934713408
    %v3075 = vunpack.c.0.s8 %v3074
    %v3076 = vlaneseq
    %v3077 = vshrl.u32 %v3076, 7
    %v3078 = vsub.s32 %v3075, %v3077
    %v3079 = vrot.slane %v3065, %v3078
    %v3080 = vcombine.low %v3055, %v3063
    %v3081 = vcombine.high %v3055, %v3063
    %v3083 = vunpack.c.l.s4 1934713408
    %v3084 = vunpack.c.0.s8 %v3083
    %v3085 = vlaneseq
    %v3086 = vshrl.u32 %v3085, 7
    %v3087 = vsub.s32 %v3084, %v3086
    %v3088 = vrot.slane %v3080, %v3087
    %v3090 = vunpack.c.l.s4 1934713408
    %v3091 = vunpack.c.0.s8 %v3090
    %v3092 = vlaneseq
    %v3093 = vshrl.u32 %v3092, 7
    %v3094 = vsub.s32 %v3091, %v3093
    %v3095 = vrot.slane %v3081, %v3094
    %v3096 = vcombine.low %v3072, %v3088
    %v3097 = vcombine.high %v3072, %v3088
    %v3098 = vcombine.low %v3079, %v3095
    %v3099 = vcombine.high %v3079, %v3095
    %v3100 = vcombine.low %v3004, %v3011
    %v3102 = vunpack.c.l.s4 1983009808
    %v3103 = vunpack.c.0.s8 %v3102
    %v3104 = vlaneseq
    %v3105 = vshrl.u32 %v3104, 7
    %v3106 = vsub.s32 %v3103, %v3105
    %v3107 = vrot.slane %v3100, %v3106
    %v3108 = vcombine.low %v3028, %v3029
    %v3110 = vunpack.c.l.s4 1983009808
    %v3111 = vunpack.c.0.s8 %v3110
    %v3112 = vlaneseq
    %v3113 = vshrl.u32 %v3112, 7
    %v3114 = vsub.s32 %v3111, %v3113
    %v3115 = vrot.slane %v3108, %v3114
    %v3116 = vcombine.low %v3020, %v3027
    %v3118 = vunpack.c.l.s4 1983009808
    %v3119 = vunpack.c.0.s8 %v3118
    %v3120 = vlaneseq
    %v3121 = vshrl.u32 %v3120, 7
    %v3122 = vsub.s32 %v3119, %v3121
    %v3123 = vrot.slane %v3116, %v3122
    %v3124 = vcombine.low %v3030, %v3031
    %v3126 = vunpack.c.l.s4 1983009808
    %v3127 = vunpack.c.0.s8 %v3126
    %v3128 = vlaneseq
    %v3129 = vshrl.u32 %v3128, 7
    %v3130 = vsub.s32 %v3127, %v3129
    %v3131 = vrot.slane %v3124, %v3130
    %v3132 = vcombine.low %v3107, %v3115
    %v3133 = vcombine.high %v3107, %v3115
    %v3135 = vunpack.c.l.s4 1934713408
    %v3136 = vunpack.c.0.s8 %v3135
    %v3137 = vlaneseq
    %v3138 = vshrl.u32 %v3137, 7
    %v3139 = vsub.s32 %v3136, %v3138
    %v3140 = vrot.slane %v3132, %v3139
    %v3142 = vunpack.c.l.s4 1934713408
    %v3143 = vunpack.c.0.s8 %v3142
    %v3144 = vlaneseq
    %v3145 = vshrl.u32 %v3144, 7
    %v3146 = vsub.s32 %v3143, %v3145
    %v3147 = vrot.slane %v3133, %v3146
    %v3148 = vcombine.low %v3123, %v3131
    %v3149 = vcombine.high %v3123, %v3131
    %v3151 = vunpack.c.l.s4 1934713408
    %v3152 = vunpack.c.0.s8 %v3151
    %v3153 = vlaneseq
    %v3154 = vshrl.u32 %v3153, 7
    %v3155 = vsub.s32 %v3152, %v3154
    %v3156 = vrot.slane %v3148, %v3155
    %v3158 = vunpack.c.l.s4 1934713408
    %v3159 = vunpack.c.0.s8 %v3158
    %v3160 = vlaneseq
    %v3161 = vshrl.u32 %v3160, 7
    %v3162 = vsub.s32 %v3159, %v3161
    %v3163 = vrot.slane %v3149, %v3162
    %v3164 = vcombine.low %v3140, %v3156
    %v3165 = vcombine.high %v3140, %v3156
    %v3166 = vcombine.low %v3147, %v3163
    %v3167 = vcombine.high %v3147, %v3163
    %v3168 = vpack.c.bf16 %v3164, %v3096
    %v3169 = vpack.c.bf16 %v3165, %v3097
    %v3170 = vpack.c.bf16 %v3166, %v3098
    %v3171 = vpack.c.bf16 %v3167, %v3099
    %v3173 = vsel %vm1102, %v2554, 0
    %v3176 = vsel %vm1102, %v2868, 0
    %3178 = vmatprep.subr.bf16.mxu0 0
    %3179 = vmatpush1.bf16.xpose.msra.mxu0 %v3176
    %3180 = vmatprep.subr.bf16.mxu0 0
    %3181 = vmatpush1.bf16.xpose.msra.mxu0 0
    %3182 = vmatprep.subr.bf16.mxu0 0
    %3183 = vmatpush1.bf16.xpose.msra.mxu0 0
    %3184 = vmatprep.subr.bf16.mxu0 0
    %3185 = vmatpush1.bf16.xpose.msra.mxu0 0
    %3186 = vmatprep.subr.bf16.mxu0 0
    %3187 = vmatpush1.bf16.xpose.msra.mxu0 0
    %3188 = vmatprep.subr.bf16.mxu0 0
    %3189 = vmatpush1.bf16.xpose.msra.mxu0 0
    %3190 = vmatprep.subr.bf16.mxu0 0
    %3191 = vmatpush1.bf16.xpose.msra.mxu0 0
    %3192 = vmatprep.subr.bf16.mxu0 0
    %3193 = vmatpush1.bf16.xpose.msra.mxu0 0
    %3194 = vmatprep.subr.bf16.mxu0 0
    %3195 = vmatpush1.bf16.xpose.msra.mxu0 0
    %3196 = vmatprep.subr.bf16.mxu0 0
    %3197 = vmatpush1.bf16.xpose.msra.mxu0 0
    %3198 = vmatprep.subr.bf16.mxu0 0
    %3199 = vmatpush1.bf16.xpose.msra.mxu0 0
    %3200 = vmatprep.subr.bf16.mxu0 0
    %3201 = vmatpush1.bf16.xpose.msra.mxu0 0
    %3202 = vmatprep.subr.bf16.mxu0 0
    %3203 = vmatpush1.bf16.xpose.msra.mxu0 0
    %3204 = vmatprep.subr.bf16.mxu0 0
    %3205 = vmatpush1.bf16.xpose.msra.mxu0 0
    %3206 = vmatprep.subr.bf16.mxu0 0
    %3207 = vmatpush1.bf16.xpose.msra.mxu0 0
    %3208 = vmatprep.subr.bf16.mxu0 0
    %3209 = vmatpush1.bf16.xpose.msra.mxu0 0
    %3210 = vmatprep.mubr.bf16.mxu0 0
    %3211 = vmatmul.mubr.bf16.gmra.mrb[0].mxu0 %v3173
    %v3212 = vpop.f32.mrb[0].mxu0
    %v3213 = vadd.f32 %v74, %v3212
    %v3214 = vpop.f32.mrb[0].mxu0
    %v3215 = vpop.f32.mrb[0].mxu0
    %v3216 = vadd.f32 %v75, %v3215
    %v3217 = vpop.f32.mrb[0].mxu0
    %3218 = vdwg.mxu0
    %v3220 = vsel %vm1102, %v2555, 0
    %v3223 = vsel %vm1102, %v2869, 0
    %3225 = vmatprep.subr.bf16.mxu0 0
    %3226 = vmatpush1.bf16.xpose.msra.mxu0 %v3223
    %3227 = vmatprep.subr.bf16.mxu0 0
    %3228 = vmatpush1.bf16.xpose.msra.mxu0 0
    %3229 = vmatprep.subr.bf16.mxu0 0
    %3230 = vmatpush1.bf16.xpose.msra.mxu0 0
    %3231 = vmatprep.subr.bf16.mxu0 0
    %3232 = vmatpush1.bf16.xpose.msra.mxu0 0
    %3233 = vmatprep.subr.bf16.mxu0 0
    %3234 = vmatpush1.bf16.xpose.msra.mxu0 0
    %3235 = vmatprep.subr.bf16.mxu0 0
    %3236 = vmatpush1.bf16.xpose.msra.mxu0 0
    %3237 = vmatprep.subr.bf16.mxu0 0
    %3238 = vmatpush1.bf16.xpose.msra.mxu0 0
    %3239 = vmatprep.subr.bf16.mxu0 0
    %3240 = vmatpush1.bf16.xpose.msra.mxu0 0
    %3241 = vmatprep.subr.bf16.mxu0 0
    %3242 = vmatpush1.bf16.xpose.msra.mxu0 0
    %3243 = vmatprep.subr.bf16.mxu0 0
    %3244 = vmatpush1.bf16.xpose.msra.mxu0 0
    %3245 = vmatprep.subr.bf16.mxu0 0
    %3246 = vmatpush1.bf16.xpose.msra.mxu0 0
    %3247 = vmatprep.subr.bf16.mxu0 0
    %3248 = vmatpush1.bf16.xpose.msra.mxu0 0
    %3249 = vmatprep.subr.bf16.mxu0 0
    %3250 = vmatpush1.bf16.xpose.msra.mxu0 0
    %3251 = vmatprep.subr.bf16.mxu0 0
    %3252 = vmatpush1.bf16.xpose.msra.mxu0 0
    %3253 = vmatprep.subr.bf16.mxu0 0
    %3254 = vmatpush1.bf16.xpose.msra.mxu0 0
    %3255 = vmatprep.subr.bf16.mxu0 0
    %3256 = vmatpush1.bf16.xpose.msra.mxu0 0
    %3257 = vmatprep.mubr.bf16.mxu0 0
    %3258 = vmatmul.mubr.bf16.gmra.mrb[0].mxu0 %v3220
    %v3259 = vpop.f32.mrb[0].mxu0
    %v3260 = vadd.f32 %v74, %v3259
    %v3261 = vpop.f32.mrb[0].mxu0
    %v3262 = vpop.f32.mrb[0].mxu0
    %v3263 = vadd.f32 %v75, %v3262
    %v3264 = vpop.f32.mrb[0].mxu0
    %3265 = vdwg.mxu0
    %v3267 = vsel %vm1102, %v2556, 0
    %v3270 = vsel %vm1102, %v2870, 0
    %3272 = vmatprep.subr.bf16.mxu0 0
    %3273 = vmatpush1.bf16.xpose.msra.mxu0 %v3270
    %3274 = vmatprep.subr.bf16.mxu0 0
    %3275 = vmatpush1.bf16.xpose.msra.mxu0 0
    %3276 = vmatprep.subr.bf16.mxu0 0
    %3277 = vmatpush1.bf16.xpose.msra.mxu0 0
    %3278 = vmatprep.subr.bf16.mxu0 0
    %3279 = vmatpush1.bf16.xpose.msra.mxu0 0
    %3280 = vmatprep.subr.bf16.mxu0 0
    %3281 = vmatpush1.bf16.xpose.msra.mxu0 0
    %3282 = vmatprep.subr.bf16.mxu0 0
    %3283 = vmatpush1.bf16.xpose.msra.mxu0 0
    %3284 = vmatprep.subr.bf16.mxu0 0
    %3285 = vmatpush1.bf16.xpose.msra.mxu0 0
    %3286 = vmatprep.subr.bf16.mxu0 0
    %3287 = vmatpush1.bf16.xpose.msra.mxu0 0
    %3288 = vmatprep.subr.bf16.mxu0 0
    %3289 = vmatpush1.bf16.xpose.msra.mxu0 0
    %3290 = vmatprep.subr.bf16.mxu0 0
    %3291 = vmatpush1.bf16.xpose.msra.mxu0 0
    %3292 = vmatprep.subr.bf16.mxu0 0
    %3293 = vmatpush1.bf16.xpose.msra.mxu0 0
    %3294 = vmatprep.subr.bf16.mxu0 0
    %3295 = vmatpush1.bf16.xpose.msra.mxu0 0
    %3296 = vmatprep.subr.bf16.mxu0 0
    %3297 = vmatpush1.bf16.xpose.msra.mxu0 0
    %3298 = vmatprep.subr.bf16.mxu0 0
    %3299 = vmatpush1.bf16.xpose.msra.mxu0 0
    %3300 = vmatprep.subr.bf16.mxu0 0
    %3301 = vmatpush1.bf16.xpose.msra.mxu0 0
    %3302 = vmatprep.subr.bf16.mxu0 0
    %3303 = vmatpush1.bf16.xpose.msra.mxu0 0
    %3304 = vmatprep.mubr.bf16.mxu0 0
    %3305 = vmatmul.mubr.bf16.gmra.mrb[0].mxu0 %v3267
    %v3306 = vpop.f32.mrb[0].mxu0
    %v3307 = vadd.f32 %v74, %v3306
    %v3308 = vpop.f32.mrb[0].mxu0
    %v3309 = vpop.f32.mrb[0].mxu0
    %v3310 = vadd.f32 %v75, %v3309
    %v3311 = vpop.f32.mrb[0].mxu0
    %3312 = vdwg.mxu0
    %v3314 = vsel %vm1102, %v2557, 0
    %v3317 = vsel %vm1102, %v2871, 0
    %3319 = vmatprep.subr.bf16.mxu0 0
    %3320 = vmatpush1.bf16.xpose.msra.mxu0 %v3317
    %3321 = vmatprep.subr.bf16.mxu0 0
    %3322 = vmatpush1.bf16.xpose.msra.mxu0 0
    %3323 = vmatprep.subr.bf16.mxu0 0
    %3324 = vmatpush1.bf16.xpose.msra.mxu0 0
    %3325 = vmatprep.subr.bf16.mxu0 0
    %3326 = vmatpush1.bf16.xpose.msra.mxu0 0
    %3327 = vmatprep.subr.bf16.mxu0 0
    %3328 = vmatpush1.bf16.xpose.msra.mxu0 0
    %3329 = vmatprep.subr.bf16.mxu0 0
    %3330 = vmatpush1.bf16.xpose.msra.mxu0 0
    %3331 = vmatprep.subr.bf16.mxu0 0
    %3332 = vmatpush1.bf16.xpose.msra.mxu0 0
    %3333 = vmatprep.subr.bf16.mxu0 0
    %3334 = vmatpush1.bf16.xpose.msra.mxu0 0
    %3335 = vmatprep.subr.bf16.mxu0 0
    %3336 = vmatpush1.bf16.xpose.msra.mxu0 0
    %3337 = vmatprep.subr.bf16.mxu0 0
    %3338 = vmatpush1.bf16.xpose.msra.mxu0 0
    %3339 = vmatprep.subr.bf16.mxu0 0
    %3340 = vmatpush1.bf16.xpose.msra.mxu0 0
    %3341 = vmatprep.subr.bf16.mxu0 0
    %3342 = vmatpush1.bf16.xpose.msra.mxu0 0
    %3343 = vmatprep.subr.bf16.mxu0 0
    %3344 = vmatpush1.bf16.xpose.msra.mxu0 0
    %3345 = vmatprep.subr.bf16.mxu0 0
    %3346 = vmatpush1.bf16.xpose.msra.mxu0 0
    %3347 = vmatprep.subr.bf16.mxu0 0
    %3348 = vmatpush1.bf16.xpose.msra.mxu0 0
    %3349 = vmatprep.subr.bf16.mxu0 0
    %3350 = vmatpush1.bf16.xpose.msra.mxu0 0
    %3351 = vmatprep.mubr.bf16.mxu0 0
    %3352 = vmatmul.mubr.bf16.gmra.mrb[0].mxu0 %v3314
    %v3353 = vpop.f32.mrb[0].mxu0
    %v3354 = vadd.f32 %v74, %v3353
    %v3355 = vpop.f32.mrb[0].mxu0
    %v3356 = vpop.f32.mrb[0].mxu0
    %v3357 = vadd.f32 %v75, %v3356
    %v3358 = vpop.f32.mrb[0].mxu0
    %3359 = vdwg.mxu0
    %v3360 = vsel %vm1291, %v3213, -inf
    %3361 = vmax.xlane.f32.xlu0 %v3360
    %v3362 = vpop.xlane.xlu0 %3361
    %v3363 = vsel %vm1291, %v3216, -inf
    %3364 = vmax.xlane.f32.xlu0 %v3363
    %v3365 = vpop.xlane.xlu0 %3364
    %v3366 = vsel %vm1291, %v3260, -inf
    %3367 = vmax.xlane.f32.xlu0 %v3366
    %v3368 = vpop.xlane.xlu0 %3367
    %v3369 = vsel %vm1291, %v3263, -inf
    %3370 = vmax.xlane.f32.xlu0 %v3369
    %v3371 = vpop.xlane.xlu0 %3370
    %v3372 = vsel %vm1291, %v3307, -inf
    %3373 = vmax.xlane.f32.xlu0 %v3372
    %v3374 = vpop.xlane.xlu0 %3373
    %v3375 = vsel %vm1291, %v3310, -inf
    %3376 = vmax.xlane.f32.xlu0 %v3375
    %v3377 = vpop.xlane.xlu0 %3376
    %v3378 = vsel %vm1291, %v3354, -inf
    %3379 = vmax.xlane.f32.xlu0 %v3378
    %v3380 = vpop.xlane.xlu0 %3379
    %v3381 = vsel %vm1291, %v3357, -inf
    %3382 = vmax.xlane.f32.xlu0 %v3381
    %v3383 = vpop.xlane.xlu0 %3382
    %v3384 = vsub.f32 %v3213, %v3362
    %v3385 = vsub.f32 %v3216, %v3365
    %v3386 = vsub.f32 %v3260, %v3368
    %v3387 = vsub.f32 %v3263, %v3371
    %v3388 = vsub.f32 %v3307, %v3374
    %v3389 = vsub.f32 %v3310, %v3377
    %v3390 = vsub.f32 %v3354, %v3380
    %v3391 = vsub.f32 %v3357, %v3383
    %v3392 = vmul.f32 %v3384, 1.442695
    %v3393 = vpow.pop %v3392
    %v3394 = vmul.f32 %v3385, 1.442695
    %v3395 = vpow.pop %v3394
    %v3396 = vmul.f32 %v3386, 1.442695
    %v3397 = vpow.pop %v3396
    %v3398 = vmul.f32 %v3387, 1.442695
    %v3399 = vpow.pop %v3398
    %v3400 = vmul.f32 %v3388, 1.442695
    %v3401 = vpow.pop %v3400
    %v3402 = vmul.f32 %v3389, 1.442695
    %v3403 = vpow.pop %v3402
    %v3404 = vmul.f32 %v3390, 1.442695
    %v3405 = vpow.pop %v3404
    %v3406 = vmul.f32 %v3391, 1.442695
    %v3407 = vpow.pop %v3406
    %v3408 = vsel %vm1291, %v3393, 0.0
    %3409 = vadd.xlane.f32.xlu0 %v3408
    %v3410 = vpop.xlane.xlu0 %3409
    %v3411 = vsel %vm1291, %v3395, 0.0
    %3412 = vadd.xlane.f32.xlu0 %v3411
    %v3413 = vpop.xlane.xlu0 %3412
    %v3414 = vsel %vm1291, %v3397, 0.0
    %3415 = vadd.xlane.f32.xlu0 %v3414
    %v3416 = vpop.xlane.xlu0 %3415
    %v3417 = vsel %vm1291, %v3399, 0.0
    %3418 = vadd.xlane.f32.xlu0 %v3417
    %v3419 = vpop.xlane.xlu0 %3418
    %v3420 = vsel %vm1291, %v3401, 0.0
    %3421 = vadd.xlane.f32.xlu0 %v3420
    %v3422 = vpop.xlane.xlu0 %3421
    %v3423 = vsel %vm1291, %v3403, 0.0
    %3424 = vadd.xlane.f32.xlu0 %v3423
    %v3425 = vpop.xlane.xlu0 %3424
    %v3426 = vsel %vm1291, %v3405, 0.0
    %3427 = vadd.xlane.f32.xlu0 %v3426
    %v3428 = vpop.xlane.xlu0 %3427
    %v3429 = vsel %vm1291, %v3407, 0.0
    %3430 = vadd.xlane.f32.xlu0 %v3429
    %v3431 = vpop.xlane.xlu0 %3430
    %v3432 = vrcp.pop %v3410
    %v3433 = vrcp.pop %v3413
    %v3434 = vrcp.pop %v3416
    %v3435 = vrcp.pop %v3419
    %v3436 = vrcp.pop %v3422
    %v3437 = vrcp.pop %v3425
    %v3438 = vrcp.pop %v3428
    %v3439 = vrcp.pop %v3431
    %v3440 = vmul.f32 %v3393, %v3432
    %v3441 = vmul.f32 %v3395, %v3433
    %v3442 = vmul.f32 %v3397, %v3434
    %v3443 = vmul.f32 %v3399, %v3435
    %v3444 = vmul.f32 %v3401, %v3436
    %v3445 = vmul.f32 %v3403, %v3437
    %v3446 = vmul.f32 %v3405, %v3438
    %v3447 = vmul.f32 %v3407, %v3439
    %v3448 = vpack.c.bf16 %v3441, %v3440
    %v3449 = vpack.c.bf16 %v3443, %v3442
    %v3450 = vpack.c.bf16 %v3445, %v3444
    %v3451 = vpack.c.bf16 %v3447, %v3446
    %v3453 = vsel %vm1291, %v3448, 0
    %3455 = vmatprep.subr.bf16.mxu0 0
    %3456 = vmatpush1.bf16.msra.mxu0 %v3168
    %3457 = vmatprep.subr.bf16.mxu0 0
    %3458 = vmatpush1.bf16.msra.mxu0 0
    %3459 = vmatprep.subr.bf16.mxu0 0
    %3460 = vmatpush1.bf16.msra.mxu0 0
    %3461 = vmatprep.subr.bf16.mxu0 0
    %3462 = vmatpush1.bf16.msra.mxu0 0
    %3463 = vmatprep.subr.bf16.mxu0 0
    %3464 = vmatpush1.bf16.msra.mxu0 0
    %3465 = vmatprep.subr.bf16.mxu0 0
    %3466 = vmatpush1.bf16.msra.mxu0 0
    %3467 = vmatprep.subr.bf16.mxu0 0
    %3468 = vmatpush1.bf16.msra.mxu0 0
    %3469 = vmatprep.subr.bf16.mxu0 0
    %3470 = vmatpush1.bf16.msra.mxu0 0
    %3471 = vmatprep.subr.bf16.mxu0 0
    %3472 = vmatpush1.bf16.msra.mxu0 0
    %3473 = vmatprep.subr.bf16.mxu0 0
    %3474 = vmatpush1.bf16.msra.mxu0 0
    %3475 = vmatprep.subr.bf16.mxu0 0
    %3476 = vmatpush1.bf16.msra.mxu0 0
    %3477 = vmatprep.subr.bf16.mxu0 0
    %3478 = vmatpush1.bf16.msra.mxu0 0
    %3479 = vmatprep.subr.bf16.mxu0 0
    %3480 = vmatpush1.bf16.msra.mxu0 0
    %3481 = vmatprep.subr.bf16.mxu0 0
    %3482 = vmatpush1.bf16.msra.mxu0 0
    %3483 = vmatprep.subr.bf16.mxu0 0
    %3484 = vmatpush1.bf16.msra.mxu0 0
    %3485 = vmatprep.subr.bf16.mxu0 0
    %3486 = vmatpush1.bf16.msra.mxu0 0
    %3487 = vmatprep.mubr.bf16.mxu0 0
    %3488 = vmatmul.mubr.bf16.gmra.mrb[0].mxu0 %v3453
    %v3489 = vpop.f32.mrb[0].mxu0
    %v3490 = vadd.f32 0.0, %v3489
    %v3491 = vpop.f32.mrb[0].mxu0
    %v3492 = vpop.f32.mrb[0].mxu0
    %v3493 = vadd.f32 0.0, %v3492
    %v3494 = vpop.f32.mrb[0].mxu0
    %3495 = vdwg.mxu0
    %v3497 = vsel %vm1291, %v3449, 0
    %3499 = vmatprep.subr.bf16.mxu0 0
    %3500 = vmatpush1.bf16.msra.mxu0 %v3169
    %3501 = vmatprep.subr.bf16.mxu0 0
    %3502 = vmatpush1.bf16.msra.mxu0 0
    %3503 = vmatprep.subr.bf16.mxu0 0
    %3504 = vmatpush1.bf16.msra.mxu0 0
    %3505 = vmatprep.subr.bf16.mxu0 0
    %3506 = vmatpush1.bf16.msra.mxu0 0
    %3507 = vmatprep.subr.bf16.mxu0 0
    %3508 = vmatpush1.bf16.msra.mxu0 0
    %3509 = vmatprep.subr.bf16.mxu0 0
    %3510 = vmatpush1.bf16.msra.mxu0 0
    %3511 = vmatprep.subr.bf16.mxu0 0
    %3512 = vmatpush1.bf16.msra.mxu0 0
    %3513 = vmatprep.subr.bf16.mxu0 0
    %3514 = vmatpush1.bf16.msra.mxu0 0
    %3515 = vmatprep.subr.bf16.mxu0 0
    %3516 = vmatpush1.bf16.msra.mxu0 0
    %3517 = vmatprep.subr.bf16.mxu0 0
    %3518 = vmatpush1.bf16.msra.mxu0 0
    %3519 = vmatprep.subr.bf16.mxu0 0
    %3520 = vmatpush1.bf16.msra.mxu0 0
    %3521 = vmatprep.subr.bf16.mxu0 0
    %3522 = vmatpush1.bf16.msra.mxu0 0
    %3523 = vmatprep.subr.bf16.mxu0 0
    %3524 = vmatpush1.bf16.msra.mxu0 0
    %3525 = vmatprep.subr.bf16.mxu0 0
    %3526 = vmatpush1.bf16.msra.mxu0 0
    %3527 = vmatprep.subr.bf16.mxu0 0
    %3528 = vmatpush1.bf16.msra.mxu0 0
    %3529 = vmatprep.subr.bf16.mxu0 0
    %3530 = vmatpush1.bf16.msra.mxu0 0
    %3531 = vmatprep.mubr.bf16.mxu0 0
    %3532 = vmatmul.mubr.bf16.gmra.mrb[0].mxu0 %v3497
    %v3533 = vpop.f32.mrb[0].mxu0
    %v3534 = vadd.f32 0.0, %v3533
    %v3535 = vpop.f32.mrb[0].mxu0
    %v3536 = vpop.f32.mrb[0].mxu0
    %v3537 = vadd.f32 0.0, %v3536
    %v3538 = vpop.f32.mrb[0].mxu0
    %3539 = vdwg.mxu0
    %v3541 = vsel %vm1291, %v3450, 0
    %3543 = vmatprep.subr.bf16.mxu0 0
    %3544 = vmatpush1.bf16.msra.mxu0 %v3170
    %3545 = vmatprep.subr.bf16.mxu0 0
    %3546 = vmatpush1.bf16.msra.mxu0 0
    %3547 = vmatprep.subr.bf16.mxu0 0
    %3548 = vmatpush1.bf16.msra.mxu0 0
    %3549 = vmatprep.subr.bf16.mxu0 0
    %3550 = vmatpush1.bf16.msra.mxu0 0
    %3551 = vmatprep.subr.bf16.mxu0 0
    %3552 = vmatpush1.bf16.msra.mxu0 0
    %3553 = vmatprep.subr.bf16.mxu0 0
    %3554 = vmatpush1.bf16.msra.mxu0 0
    %3555 = vmatprep.subr.bf16.mxu0 0
    %3556 = vmatpush1.bf16.msra.mxu0 0
    %3557 = vmatprep.subr.bf16.mxu0 0
    %3558 = vmatpush1.bf16.msra.mxu0 0
    %3559 = vmatprep.subr.bf16.mxu0 0
    %3560 = vmatpush1.bf16.msra.mxu0 0
    %3561 = vmatprep.subr.bf16.mxu0 0
    %3562 = vmatpush1.bf16.msra.mxu0 0
    %3563 = vmatprep.subr.bf16.mxu0 0
    %3564 = vmatpush1.bf16.msra.mxu0 0
    %3565 = vmatprep.subr.bf16.mxu0 0
    %3566 = vmatpush1.bf16.msra.mxu0 0
    %3567 = vmatprep.subr.bf16.mxu0 0
    %3568 = vmatpush1.bf16.msra.mxu0 0
    %3569 = vmatprep.subr.bf16.mxu0 0
    %3570 = vmatpush1.bf16.msra.mxu0 0
    %3571 = vmatprep.subr.bf16.mxu0 0
    %3572 = vmatpush1.bf16.msra.mxu0 0
    %3573 = vmatprep.subr.bf16.mxu0 0
    %3574 = vmatpush1.bf16.msra.mxu0 0
    %3575 = vmatprep.mubr.bf16.mxu0 0
    %3576 = vmatmul.mubr.bf16.gmra.mrb[0].mxu0 %v3541
    %v3577 = vpop.f32.mrb[0].mxu0
    %v3578 = vadd.f32 0.0, %v3577
    %v3579 = vpop.f32.mrb[0].mxu0
    %v3580 = vpop.f32.mrb[0].mxu0
    %v3581 = vadd.f32 0.0, %v3580
    %v3582 = vpop.f32.mrb[0].mxu0
    %3583 = vdwg.mxu0
    %v3585 = vsel %vm1291, %v3451, 0
    %3587 = vmatprep.subr.bf16.mxu0 0
    %3588 = vmatpush1.bf16.msra.mxu0 %v3171
    %3589 = vmatprep.subr.bf16.mxu0 0
    %3590 = vmatpush1.bf16.msra.mxu0 0
    %3591 = vmatprep.subr.bf16.mxu0 0
    %3592 = vmatpush1.bf16.msra.mxu0 0
    %3593 = vmatprep.subr.bf16.mxu0 0
    %3594 = vmatpush1.bf16.msra.mxu0 0
    %3595 = vmatprep.subr.bf16.mxu0 0
    %3596 = vmatpush1.bf16.msra.mxu0 0
    %3597 = vmatprep.subr.bf16.mxu0 0
    %3598 = vmatpush1.bf16.msra.mxu0 0
    %3599 = vmatprep.subr.bf16.mxu0 0
    %3600 = vmatpush1.bf16.msra.mxu0 0
    %3601 = vmatprep.subr.bf16.mxu0 0
    %3602 = vmatpush1.bf16.msra.mxu0 0
    %3603 = vmatprep.subr.bf16.mxu0 0
    %3604 = vmatpush1.bf16.msra.mxu0 0
    %3605 = vmatprep.subr.bf16.mxu0 0
    %3606 = vmatpush1.bf16.msra.mxu0 0
    %3607 = vmatprep.subr.bf16.mxu0 0
    %3608 = vmatpush1.bf16.msra.mxu0 0
    %3609 = vmatprep.subr.bf16.mxu0 0
    %3610 = vmatpush1.bf16.msra.mxu0 0
    %3611 = vmatprep.subr.bf16.mxu0 0
    %3612 = vmatpush1.bf16.msra.mxu0 0
    %3613 = vmatprep.subr.bf16.mxu0 0
    %3614 = vmatpush1.bf16.msra.mxu0 0
    %3615 = vmatprep.subr.bf16.mxu0 0
    %3616 = vmatpush1.bf16.msra.mxu0 0
    %3617 = vmatprep.subr.bf16.mxu0 0
    %3618 = vmatpush1.bf16.msra.mxu0 0
    %3619 = vmatprep.mubr.bf16.mxu0 0
    %3620 = vmatmul.mubr.bf16.gmra.mrb[0].mxu0 %v3585
    %v3621 = vpop.f32.mrb[0].mxu0
    %v3622 = vadd.f32 0.0, %v3621
    %v3623 = vpop.f32.mrb[0].mxu0
    %v3624 = vpop.f32.mrb[0].mxu0
    %v3625 = vadd.f32 0.0, %v3624
    %v3626 = vpop.f32.mrb[0].mxu0
    %3627 = vdwg.mxu0
    %v3628 = vcombine.low %v3490, %v3578
    %v3629 = vcombine.high %v3490, %v3578
    %v3631 = vunpack.c.l.s4 1983009808
    %v3632 = vunpack.c.0.s8 %v3631
    %v3633 = vlaneseq
    %v3634 = vshrl.u32 %v3633, 7
    %v3635 = vsub.s32 %v3632, %v3634
    %v3636 = vrot.slane %v3628, %v3635
    %v3638 = vunpack.c.l.s4 1983009808
    %v3639 = vunpack.c.0.s8 %v3638
    %v3640 = vlaneseq
    %v3641 = vshrl.u32 %v3640, 7
    %v3642 = vsub.s32 %v3639, %v3641
    %v3643 = vrot.slane %v3629, %v3642
    %v3644 = vcombine.low %v3534, %v3622
    %v3645 = vcombine.high %v3534, %v3622
    %v3647 = vunpack.c.l.s4 1983009808
    %v3648 = vunpack.c.0.s8 %v3647
    %v3649 = vlaneseq
    %v3650 = vshrl.u32 %v3649, 7
    %v3651 = vsub.s32 %v3648, %v3650
    %v3652 = vrot.slane %v3644, %v3651
    %v3654 = vunpack.c.l.s4 1983009808
    %v3655 = vunpack.c.0.s8 %v3654
    %v3656 = vlaneseq
    %v3657 = vshrl.u32 %v3656, 7
    %v3658 = vsub.s32 %v3655, %v3657
    %v3659 = vrot.slane %v3645, %v3658
    %v3660 = vcombine.low %v3636, %v3652
    %v3661 = vcombine.high %v3636, %v3652
    %v3663 = vunpack.c.l.s4 1934713408
    %v3664 = vunpack.c.0.s8 %v3663
    %v3665 = vlaneseq
    %v3666 = vshrl.u32 %v3665, 7
    %v3667 = vsub.s32 %v3664, %v3666
    %v3668 = vrot.slane %v3660, %v3667
    %v3670 = vunpack.c.l.s4 1934713408
    %v3671 = vunpack.c.0.s8 %v3670
    %v3672 = vlaneseq
    %v3673 = vshrl.u32 %v3672, 7
    %v3674 = vsub.s32 %v3671, %v3673
    %v3675 = vrot.slane %v3661, %v3674
    %v3676 = vcombine.low %v3643, %v3659
    %v3677 = vcombine.high %v3643, %v3659
    %v3679 = vunpack.c.l.s4 1934713408
    %v3680 = vunpack.c.0.s8 %v3679
    %v3681 = vlaneseq
    %v3682 = vshrl.u32 %v3681, 7
    %v3683 = vsub.s32 %v3680, %v3682
    %v3684 = vrot.slane %v3676, %v3683
    %v3686 = vunpack.c.l.s4 1934713408
    %v3687 = vunpack.c.0.s8 %v3686
    %v3688 = vlaneseq
    %v3689 = vshrl.u32 %v3688, 7
    %v3690 = vsub.s32 %v3687, %v3689
    %v3691 = vrot.slane %v3677, %v3690
    %v3692 = vcombine.high %v3668, 0.0
    %v3693 = vcombine.high %v3675, 0.0
    %v3694 = vcombine.high %v3684, 0.0
    %v3695 = vcombine.high %v3691, 0.0
    %v3696 = vcombine.low %v3493, %v3581
    %v3697 = vcombine.high %v3493, %v3581
    %v3699 = vunpack.c.l.s4 1983009808
    %v3700 = vunpack.c.0.s8 %v3699
    %v3701 = vlaneseq
    %v3702 = vshrl.u32 %v3701, 7
    %v3703 = vsub.s32 %v3700, %v3702
    %v3704 = vrot.slane %v3696, %v3703
    %v3706 = vunpack.c.l.s4 1983009808
    %v3707 = vunpack.c.0.s8 %v3706
    %v3708 = vlaneseq
    %v3709 = vshrl.u32 %v3708, 7
    %v3710 = vsub.s32 %v3707, %v3709
    %v3711 = vrot.slane %v3697, %v3710
    %v3712 = vcombine.low %v3537, %v3625
    %v3713 = vcombine.high %v3537, %v3625
    %v3715 = vunpack.c.l.s4 1983009808
    %v3716 = vunpack.c.0.s8 %v3715
    %v3717 = vlaneseq
    %v3718 = vshrl.u32 %v3717, 7
    %v3719 = vsub.s32 %v3716, %v3718
    %v3720 = vrot.slane %v3712, %v3719
    %v3722 = vunpack.c.l.s4 1983009808
    %v3723 = vunpack.c.0.s8 %v3722
    %v3724 = vlaneseq
    %v3725 = vshrl.u32 %v3724, 7
    %v3726 = vsub.s32 %v3723, %v3725
    %v3727 = vrot.slane %v3713, %v3726
    %v3728 = vcombine.low %v3704, %v3720
    %v3729 = vcombine.high %v3704, %v3720
    %v3731 = vunpack.c.l.s4 1934713408
    %v3732 = vunpack.c.0.s8 %v3731
    %v3733 = vlaneseq
    %v3734 = vshrl.u32 %v3733, 7
    %v3735 = vsub.s32 %v3732, %v3734
    %v3736 = vrot.slane %v3728, %v3735
    %v3738 = vunpack.c.l.s4 1934713408
    %v3739 = vunpack.c.0.s8 %v3738
    %v3740 = vlaneseq
    %v3741 = vshrl.u32 %v3740, 7
    %v3742 = vsub.s32 %v3739, %v3741
    %v3743 = vrot.slane %v3729, %v3742
    %v3744 = vcombine.low %v3711, %v3727
    %v3745 = vcombine.high %v3711, %v3727
    %v3747 = vunpack.c.l.s4 1934713408
    %v3748 = vunpack.c.0.s8 %v3747
    %v3749 = vlaneseq
    %v3750 = vshrl.u32 %v3749, 7
    %v3751 = vsub.s32 %v3748, %v3750
    %v3752 = vrot.slane %v3744, %v3751
    %v3754 = vunpack.c.l.s4 1934713408
    %v3755 = vunpack.c.0.s8 %v3754
    %v3756 = vlaneseq
    %v3757 = vshrl.u32 %v3756, 7
    %v3758 = vsub.s32 %v3755, %v3757
    %v3759 = vrot.slane %v3745, %v3758
    %v3760 = vcombine.high %v3736, 0.0
    %v3761 = vcombine.high %v3743, 0.0
    %v3762 = vcombine.high %v3752, 0.0
    %v3763 = vcombine.high %v3759, 0.0
    %v3764 = vcombine.low %v3668, %v3675
    %v3766 = vunpack.c.l.s4 1983009808
    %v3767 = vunpack.c.0.s8 %v3766
    %v3768 = vlaneseq
    %v3769 = vshrl.u32 %v3768, 7
    %v3770 = vsub.s32 %v3767, %v3769
    %v3771 = vrot.slane %v3764, %v3770
    %v3772 = vcombine.low %v3692, %v3693
    %v3774 = vunpack.c.l.s4 1983009808
    %v3775 = vunpack.c.0.s8 %v3774
    %v3776 = vlaneseq
    %v3777 = vshrl.u32 %v3776, 7
    %v3778 = vsub.s32 %v3775, %v3777
    %v3779 = vrot.slane %v3772, %v3778
    %v3780 = vcombine.low %v3684, %v3691
    %v3782 = vunpack.c.l.s4 1983009808
    %v3783 = vunpack.c.0.s8 %v3782
    %v3784 = vlaneseq
    %v3785 = vshrl.u32 %v3784, 7
    %v3786 = vsub.s32 %v3783, %v3785
    %v3787 = vrot.slane %v3780, %v3786
    %v3788 = vcombine.low %v3694, %v3695
    %v3790 = vunpack.c.l.s4 1983009808
    %v3791 = vunpack.c.0.s8 %v3790
    %v3792 = vlaneseq
    %v3793 = vshrl.u32 %v3792, 7
    %v3794 = vsub.s32 %v3791, %v3793
    %v3795 = vrot.slane %v3788, %v3794
    %v3796 = vcombine.low %v3771, %v3779
    %v3797 = vcombine.high %v3771, %v3779
    %v3799 = vunpack.c.l.s4 1934713408
    %v3800 = vunpack.c.0.s8 %v3799
    %v3801 = vlaneseq
    %v3802 = vshrl.u32 %v3801, 7
    %v3803 = vsub.s32 %v3800, %v3802
    %v3804 = vrot.slane %v3796, %v3803
    %v3806 = vunpack.c.l.s4 1934713408
    %v3807 = vunpack.c.0.s8 %v3806
    %v3808 = vlaneseq
    %v3809 = vshrl.u32 %v3808, 7
    %v3810 = vsub.s32 %v3807, %v3809
    %v3811 = vrot.slane %v3797, %v3810
    %v3812 = vcombine.low %v3787, %v3795
    %v3813 = vcombine.high %v3787, %v3795
    %v3815 = vunpack.c.l.s4 1934713408
    %v3816 = vunpack.c.0.s8 %v3815
    %v3817 = vlaneseq
    %v3818 = vshrl.u32 %v3817, 7
    %v3819 = vsub.s32 %v3816, %v3818
    %v3820 = vrot.slane %v3812, %v3819
    %v3822 = vunpack.c.l.s4 1934713408
    %v3823 = vunpack.c.0.s8 %v3822
    %v3824 = vlaneseq
    %v3825 = vshrl.u32 %v3824, 7
    %v3826 = vsub.s32 %v3823, %v3825
    %v3827 = vrot.slane %v3813, %v3826
    %v3828 = vcombine.low %v3804, %v3820
    %v3829 = vcombine.high %v3804, %v3820
    %v3830 = vcombine.low %v3811, %v3827
    %v3831 = vcombine.high %v3811, %v3827
    %v3832 = vcombine.low %v3736, %v3743
    %v3834 = vunpack.c.l.s4 1983009808
    %v3835 = vunpack.c.0.s8 %v3834
    %v3836 = vlaneseq
    %v3837 = vshrl.u32 %v3836, 7
    %v3838 = vsub.s32 %v3835, %v3837
    %v3839 = vrot.slane %v3832, %v3838
    %v3840 = vcombine.low %v3760, %v3761
    %v3842 = vunpack.c.l.s4 1983009808
    %v3843 = vunpack.c.0.s8 %v3842
    %v3844 = vlaneseq
    %v3845 = vshrl.u32 %v3844, 7
    %v3846 = vsub.s32 %v3843, %v3845
    %v3847 = vrot.slane %v3840, %v3846
    %v3848 = vcombine.low %v3752, %v3759
    %v3850 = vunpack.c.l.s4 1983009808
    %v3851 = vunpack.c.0.s8 %v3850
    %v3852 = vlaneseq
    %v3853 = vshrl.u32 %v3852, 7
    %v3854 = vsub.s32 %v3851, %v3853
    %v3855 = vrot.slane %v3848, %v3854
    %v3856 = vcombine.low %v3762, %v3763
    %v3858 = vunpack.c.l.s4 1983009808
    %v3859 = vunpack.c.0.s8 %v3858
    %v3860 = vlaneseq
    %v3861 = vshrl.u32 %v3860, 7
    %v3862 = vsub.s32 %v3859, %v3861
    %v3863 = vrot.slane %v3856, %v3862
    %v3864 = vcombine.low %v3839, %v3847
    %v3865 = vcombine.high %v3839, %v3847
    %v3867 = vunpack.c.l.s4 1934713408
    %v3868 = vunpack.c.0.s8 %v3867
    %v3869 = vlaneseq
    %v3870 = vshrl.u32 %v3869, 7
    %v3871 = vsub.s32 %v3868, %v3870
    %v3872 = vrot.slane %v3864, %v3871
    %v3874 = vunpack.c.l.s4 1934713408
    %v3875 = vunpack.c.0.s8 %v3874
    %v3876 = vlaneseq
    %v3877 = vshrl.u32 %v3876, 7
    %v3878 = vsub.s32 %v3875, %v3877
    %v3879 = vrot.slane %v3865, %v3878
    %v3880 = vcombine.low %v3855, %v3863
    %v3881 = vcombine.high %v3855, %v3863
    %v3883 = vunpack.c.l.s4 1934713408
    %v3884 = vunpack.c.0.s8 %v3883
    %v3885 = vlaneseq
    %v3886 = vshrl.u32 %v3885, 7
    %v3887 = vsub.s32 %v3884, %v3886
    %v3888 = vrot.slane %v3880, %v3887
    %v3890 = vunpack.c.l.s4 1934713408
    %v3891 = vunpack.c.0.s8 %v3890
    %v3892 = vlaneseq
    %v3893 = vshrl.u32 %v3892, 7
    %v3894 = vsub.s32 %v3891, %v3893
    %v3895 = vrot.slane %v3881, %v3894
    %v3896 = vcombine.low %v3872, %v3888
    %v3897 = vcombine.high %v3872, %v3888
    %v3898 = vcombine.low %v3879, %v3895
    %v3899 = vcombine.high %v3879, %v3895
    %3902 = vrot.lane.b32.xlu0 %v3829, 8
    %v3903 = vpop.permute.xlu0 %3902
    %3904 = vrot.lane.b32.xlu0 %v3897, 8
    %v3905 = vpop.permute.xlu0 %3904
    %3910 = vrot.lane.b32.xlu0 %v3830, 16
    %v3911 = vpop.permute.xlu0 %3910
    %3912 = vrot.lane.b32.xlu0 %v3898, 16
    %v3913 = vpop.permute.xlu0 %3912
    %3918 = vrot.lane.b32.xlu0 %v3831, 24
    %v3919 = vpop.permute.xlu0 %3918
    %3920 = vrot.lane.b32.xlu0 %v3899, 24
    %v3921 = vpop.permute.xlu0 %3920
    %v3924 = vsel %vm1102, %v3828, %v3903
    %v3925 = vsel %vm1102, %v3896, %v3905
    %v3926 = vsel %vm1291, %v3924, %v3911
    %v3927 = vsel %vm1291, %v3925, %v3913
    %v3928 = vsel %vm1860, %v3926, %v3919
    %v3929 = vsel %vm1860, %v3927, %v3921
    %v3930 = vpack.c.bf16 %v3929, %v3928
    %s3931 = scalar_lea.vmem %s7, 16
    %v3932 = vld [vmem:[%s3931] sm:$0xf]
    %v3933 = vld [vmem:[%s3931 + $0x4] sm:$0xf]
    %v3934 = vld [vmem:[%s3931 + $0x8] sm:$0xf]
    %v3935 = vld [vmem:[%s3931 + $0xc] sm:$0xf]
    %s3936 = scalar_lea.vmem %s8, 1
    %v3937 = vld [vmem:[%s3936] sm:$0x1]
    %v3939 = vlaneseq
    %v3940 = vshrl.u32 %v3939, 7
    %v3941 = vsub.s32 0, %v3940
    %v3942 = vrot.slane %v3937, %v3941
    %v3948 = vunpack.c.l.b16 %v3932
    %v3949 = vunpack.c.l.b16 %v3933
    %v3950 = vunpack.c.l.b16 %v3934
    %v3951 = vunpack.c.l.b16 %v3935
    %v3952 = vpack.c.b16 %v3949, %v3948
    %v3953 = vpack.c.b16 %v3951, %v3950
    %v3957 = vsel %vm78, %v3930, 0
    %3959 = vmatprep.subr.bf16.mxu0 0
    %3960 = vmatpush1.bf16.msra.mxu0 %v3952
    %3961 = vmatprep.subr.bf16.mxu0 0
    %3962 = vmatpush1.bf16.msra.mxu0 %v3953
    %3963 = vmatprep.subr.bf16.mxu0 0
    %3964 = vmatpush1.bf16.msra.mxu0 0
    %3965 = vmatprep.subr.bf16.mxu0 0
    %3966 = vmatpush1.bf16.msra.mxu0 0
    %3967 = vmatprep.subr.bf16.mxu0 0
    %3968 = vmatpush1.bf16.msra.mxu0 0
    %3969 = vmatprep.subr.bf16.mxu0 0
    %3970 = vmatpush1.bf16.msra.mxu0 0
    %3971 = vmatprep.subr.bf16.mxu0 0
    %3972 = vmatpush1.bf16.msra.mxu0 0
    %3973 = vmatprep.subr.bf16.mxu0 0
    %3974 = vmatpush1.bf16.msra.mxu0 0
    %3975 = vmatprep.subr.bf16.mxu0 0
    %3976 = vmatpush1.bf16.msra.mxu0 0
    %3977 = vmatprep.subr.bf16.mxu0 0
    %3978 = vmatpush1.bf16.msra.mxu0 0
    %3979 = vmatprep.subr.bf16.mxu0 0
    %3980 = vmatpush1.bf16.msra.mxu0 0
    %3981 = vmatprep.subr.bf16.mxu0 0
    %3982 = vmatpush1.bf16.msra.mxu0 0
    %3983 = vmatprep.subr.bf16.mxu0 0
    %3984 = vmatpush1.bf16.msra.mxu0 0
    %3985 = vmatprep.subr.bf16.mxu0 0
    %3986 = vmatpush1.bf16.msra.mxu0 0
    %3987 = vmatprep.subr.bf16.mxu0 0
    %3988 = vmatpush1.bf16.msra.mxu0 0
    %3989 = vmatprep.subr.bf16.mxu0 0
    %3990 = vmatpush1.bf16.msra.mxu0 0
    %3991 = vmatprep.mubr.bf16.mxu0 0
    %3992 = vmatmul.mubr.bf16.gmra.mrb[0].mxu0 %v3957
    %v3993 = vpop.f32.mrb[0].mxu0
    %v3994 = vadd.f32 %v3942, %v3993
    %v3995 = vpop.f32.mrb[0].mxu0
    %v3996 = vpop.f32.mrb[0].mxu0
    %v3997 = vadd.f32 %v3942, %v3996
    %v3998 = vpop.f32.mrb[0].mxu0
    %3999 = vdwg.mxu0
    %v4000 = vadd.f32 %v2142, %v3994
    %v4001 = vadd.f32 %v2143, %v3997
    %s4002 = scalar_lea.vmem %s9, 1
    %v4003 = vld [vmem:[%s4002] sm:$0x1]
    %s4004 = scalar_lea.vmem %s10, 1
    %v4005 = vld [vmem:[%s4004] sm:$0x1]
    %v4006 = vsel %vm78, %v4000, 0.0
    %4007 = vadd.xlane.f32.xlu0 %v4006
    %v4008 = vpop.xlane.xlu0 %4007
    %v4009 = vsel %vm78, %v4001, 0.0
    %4010 = vadd.xlane.f32.xlu0 %v4009
    %v4011 = vpop.xlane.xlu0 %4010
    %v4012 = vmul.f32 %v4008, %v85
    %v4013 = vmul.f32 %v4011, %v85
    %v4014 = vsub.f32 %v4000, %v4012
    %v4015 = vsub.f32 %v4001, %v4013
    %v4016 = vmul.f32 %v4014, %v4014
    %v4017 = vmul.f32 %v4015, %v4015
    %v4018 = vsel %vm78, %v4016, 0.0
    %4019 = vadd.xlane.f32.xlu0 %v4018
    %v4020 = vpop.xlane.xlu0 %4019
    %v4021 = vsel %vm78, %v4017, 0.0
    %4022 = vadd.xlane.f32.xlu0 %v4021
    %v4023 = vpop.xlane.xlu0 %4022
    %v4024 = vmul.f32 %v4020, %v85
    %v4025 = vmul.f32 %v4023, %v85
    %v4026 = vadd.f32 %v4024, 1e-05
    %v4027 = vadd.f32 %v4025, 1e-05
    %v4028 = vrsqrt.pop %v4026
    %v4029 = vrsqrt.pop %v4027
    %v4030 = vmul.f32 %v4014, %v4028
    %v4031 = vmul.f32 %v4015, %v4029
    %v4033 = vlaneseq
    %v4034 = vshrl.u32 %v4033, 7
    %v4035 = vsub.s32 0, %v4034
    %v4036 = vrot.slane %v4003, %v4035
    %v4038 = vmul.f32 %v4030, %v4036
    %v4039 = vmul.f32 %v4031, %v4036
    %v4041 = vlaneseq
    %v4042 = vshrl.u32 %v4041, 7
    %v4043 = vsub.s32 0, %v4042
    %v4044 = vrot.slane %v4005, %v4043
    %v4046 = vadd.f32 %v4038, %v4044
    %v4047 = vadd.f32 %v4039, %v4044
    %v4048 = vpack.c.bf16 %v4047, %v4046
    %s4049 = scalar_lea.vmem %s11, 16
    %v4050 = vld [vmem:[%s4049] sm:$0xf]
    %v4051 = vld [vmem:[%s4049 + $0x4] sm:$0xf]
    %v4052 = vld [vmem:[%s4049 + $0x8] sm:$0xf]
    %v4053 = vld [vmem:[%s4049 + $0xc] sm:$0xf]
    %s4054 = scalar_lea.vmem %s12, 1
    %v4055 = vld [vmem:[%s4054] sm:$0x1]
    %v4057 = vlaneseq
    %v4058 = vshrl.u32 %v4057, 7
    %v4059 = vsub.s32 0, %v4058
    %v4060 = vrot.slane %v4055, %v4059
    %v4066 = vunpack.c.l.b16 %v4050
    %v4067 = vunpack.c.l.b16 %v4051
    %v4068 = vunpack.c.l.b16 %v4052
    %v4069 = vunpack.c.l.b16 %v4053
    %v4070 = vpack.c.b16 %v4067, %v4066
    %v4071 = vpack.c.b16 %v4069, %v4068
    %v4075 = vsel %vm78, %v4048, 0
    %4077 = vmatprep.subr.bf16.mxu0 0
    %4078 = vmatpush1.bf16.msra.mxu0 %v4070
    %4079 = vmatprep.subr.bf16.mxu0 0
    %4080 = vmatpush1.bf16.msra.mxu0 %v4071
    %4081 = vmatprep.subr.bf16.mxu0 0
    %4082 = vmatpush1.bf16.msra.mxu0 0
    %4083 = vmatprep.subr.bf16.mxu0 0
    %4084 = vmatpush1.bf16.msra.mxu0 0
    %4085 = vmatprep.subr.bf16.mxu0 0
    %4086 = vmatpush1.bf16.msra.mxu0 0
    %4087 = vmatprep.subr.bf16.mxu0 0
    %4088 = vmatpush1.bf16.msra.mxu0 0
    %4089 = vmatprep.subr.bf16.mxu0 0
    %4090 = vmatpush1.bf16.msra.mxu0 0
    %4091 = vmatprep.subr.bf16.mxu0 0
    %4092 = vmatpush1.bf16.msra.mxu0 0
    %4093 = vmatprep.subr.bf16.mxu0 0
    %4094 = vmatpush1.bf16.msra.mxu0 0
    %4095 = vmatprep.subr.bf16.mxu0 0
    %4096 = vmatpush1.bf16.msra.mxu0 0
    %4097 = vmatprep.subr.bf16.mxu0 0
    %4098 = vmatpush1.bf16.msra.mxu0 0
    %4099 = vmatprep.subr.bf16.mxu0 0
    %4100 = vmatpush1.bf16.msra.mxu0 0
    %4101 = vmatprep.subr.bf16.mxu0 0
    %4102 = vmatpush1.bf16.msra.mxu0 0
    %4103 = vmatprep.subr.bf16.mxu0 0
    %4104 = vmatpush1.bf16.msra.mxu0 0
    %4105 = vmatprep.subr.bf16.mxu0 0
    %4106 = vmatpush1.bf16.msra.mxu0 0
    %4107 = vmatprep.subr.bf16.mxu0 0
    %4108 = vmatpush1.bf16.msra.mxu0 0
    %4109 = vmatprep.mubr.bf16.mxu0 0
    %4110 = vmatmul.mubr.bf16.gmra.mrb[0].mxu0 %v4075
    %v4111 = vpop.f32.mrb[0].mxu0
    %v4112 = vadd.f32 %v4060, %v4111
    %v4113 = vpop.f32.mrb[0].mxu0
    %v4114 = vpop.f32.mrb[0].mxu0
    %v4115 = vadd.f32 %v4060, %v4114
    %v4116 = vpop.f32.mrb[0].mxu0
    %4117 = vdwg.mxu0
    %v4118 = vmul.f32 %v4112, 0.5
    %v4119 = vmul.f32 %v4115, 0.5
    %v4120 = vmul.f32 %v4112, 0.70710677
    %v4121 = vmul.f32 %v4115, 0.70710677
    %v4122 = verf.f32.pop %v4120
    %v4123 = verf.f32.pop %v4121
    %v4124 = vadd.f32 %v4122, 1.0
    %v4125 = vadd.f32 %v4123, 1.0
    %v4126 = vmul.f32 %v4118, %v4124
    %v4127 = vmul.f32 %v4119, %v4125
    %v4128 = vpack.c.bf16 %v4127, %v4126
    %s4129 = scalar_lea.vmem %s13, 32
    %v4130 = vld [vmem:[%s4129] sm:$0xf]
    %v4131 = vld [vmem:[%s4129 + $0x4] sm:$0xf]
    %v4132 = vld [vmem:[%s4129 + $0x8] sm:$0xf]
    %v4133 = vld [vmem:[%s4129 + $0xc] sm:$0xf]
    %v4134 = vld [vmem:[%s4129 + $0x10] sm:$0xf]
    %v4135 = vld [vmem:[%s4129 + $0x14] sm:$0xf]
    %v4136 = vld [vmem:[%s4129 + $0x18] sm:$0xf]
    %v4137 = vld [vmem:[%s4129 + $0x1c] sm:$0xf]
    %v4146 = vunpack.c.l.b16 %v4130
    %v4147 = vunpack.c.l.b16 %v4131
    %v4148 = vunpack.c.l.b16 %v4132
    %v4149 = vunpack.c.l.b16 %v4133
    %v4150 = vunpack.c.l.b16 %v4134
    %v4151 = vunpack.c.l.b16 %v4135
    %v4152 = vunpack.c.l.b16 %v4136
    %v4153 = vunpack.c.l.b16 %v4137
    %v4154 = vpack.c.b16 %v4147, %v4146
    %v4155 = vpack.c.b16 %v4149, %v4148
    %v4156 = vpack.c.b16 %v4151, %v4150
    %v4157 = vpack.c.b16 %v4153, %v4152
    %v4163 = vsel %vm2088, %v4128, 0
    %4165 = vmatprep.subr.bf16.mxu0 0
    %4166 = vmatpush1.bf16.msra.mxu0 %v4154
    %4167 = vmatprep.subr.bf16.mxu0 0
    %4168 = vmatpush1.bf16.msra.mxu0 %v4155
    %4169 = vmatprep.subr.bf16.mxu0 0
    %4170 = vmatpush1.bf16.msra.mxu0 %v4156
    %4171 = vmatprep.subr.bf16.mxu0 0
    %4172 = vmatpush1.bf16.msra.mxu0 %v4157
    %4173 = vmatprep.subr.bf16.mxu0 0
    %4174 = vmatpush1.bf16.msra.mxu0 0
    %4175 = vmatprep.subr.bf16.mxu0 0
    %4176 = vmatpush1.bf16.msra.mxu0 0
    %4177 = vmatprep.subr.bf16.mxu0 0
    %4178 = vmatpush1.bf16.msra.mxu0 0
    %4179 = vmatprep.subr.bf16.mxu0 0
    %4180 = vmatpush1.bf16.msra.mxu0 0
    %4181 = vmatprep.subr.bf16.mxu0 0
    %4182 = vmatpush1.bf16.msra.mxu0 0
    %4183 = vmatprep.subr.bf16.mxu0 0
    %4184 = vmatpush1.bf16.msra.mxu0 0
    %4185 = vmatprep.subr.bf16.mxu0 0
    %4186 = vmatpush1.bf16.msra.mxu0 0
    %4187 = vmatprep.subr.bf16.mxu0 0
    %4188 = vmatpush1.bf16.msra.mxu0 0
    %4189 = vmatprep.subr.bf16.mxu0 0
    %4190 = vmatpush1.bf16.msra.mxu0 0
    %4191 = vmatprep.subr.bf16.mxu0 0
    %4192 = vmatpush1.bf16.msra.mxu0 0
    %4193 = vmatprep.subr.bf16.mxu0 0
    %4194 = vmatpush1.bf16.msra.mxu0 0
    %4195 = vmatprep.subr.bf16.mxu0 0
    %4196 = vmatpush1.bf16.msra.mxu0 0
    %4197 = vmatprep.mubr.bf16.mxu0 0
    %4198 = vmatmul.mubr.bf16.gmra.mrb[0].mxu0 %v4163
    %v4199 = vpop.f32.mrb[0].mxu0
    %v4200 = vadd.f32 0.0, %v4199
    %v4201 = vpop.f32.mrb[0].mxu0
    %v4202 = vpop.f32.mrb[0].mxu0
    %v4203 = vadd.f32 0.0, %v4202
    %v4204 = vpop.f32.mrb[0].mxu0
    %4205 = vdwg.mxu0
    %v4206 = vadd.f32 %v4000, %v4200
    %v4207 = vadd.f32 %v4001, %v4203
    %s4208 = scalar_lea.vmem %s14, 1
    %v4209 = vld [vmem:[%s4208] sm:$0x1]
    %v4211 = vlaneseq
    %v4212 = vshrl.u32 %v4211, 7
    %v4213 = vsub.s32 0, %v4212
    %v4214 = vrot.slane %v4209, %v4213
    %v4216 = vadd.f32 %v4206, %v4214
    %v4217 = vadd.f32 %v4207, %v4214
    %v4218 = vld [vmem:[%s15] sm:$0x1]
    %v4219 = vld [vmem:[%s16] sm:$0x1]
    %v4220 = vsel %vm78, %v4216, 0.0
    %4221 = vadd.xlane.f32.xlu0 %v4220
    %v4222 = vpop.xlane.xlu0 %4221
    %v4223 = vsel %vm78, %v4217, 0.0
    %4224 = vadd.xlane.f32.xlu0 %v4223
    %v4225 = vpop.xlane.xlu0 %4224
    %v4226 = vmul.f32 %v4222, %v85
    %v4227 = vmul.f32 %v4225, %v85
    %v4228 = vsub.f32 %v4216, %v4226
    %v4229 = vsub.f32 %v4217, %v4227
    %v4230 = vmul.f32 %v4228, %v4228
    %v4231 = vmul.f32 %v4229, %v4229
    %v4232 = vsel %vm78, %v4230, 0.0
    %4233 = vadd.xlane.f32.xlu0 %v4232
    %v4234 = vpop.xlane.xlu0 %4233
    %v4235 = vsel %vm78, %v4231, 0.0
    %4236 = vadd.xlane.f32.xlu0 %v4235
    %v4237 = vpop.xlane.xlu0 %4236
    %v4238 = vmul.f32 %v4234, %v85
    %v4239 = vmul.f32 %v4237, %v85
    %v4240 = vadd.f32 %v4238, 1e-05
    %v4241 = vadd.f32 %v4239, 1e-05
    %v4242 = vrsqrt.pop %v4240
    %v4243 = vrsqrt.pop %v4241
    %v4244 = vmul.f32 %v4228, %v4242
    %v4245 = vmul.f32 %v4229, %v4243
    %v4247 = vlaneseq
    %v4248 = vshrl.u32 %v4247, 7
    %v4249 = vsub.s32 0, %v4248
    %v4250 = vrot.slane %v4218, %v4249
    %v4252 = vmul.f32 %v4244, %v4250
    %v4253 = vmul.f32 %v4245, %v4250
    %v4255 = vlaneseq
    %v4256 = vshrl.u32 %v4255, 7
    %v4257 = vsub.s32 0, %v4256
    %v4258 = vrot.slane %v4219, %v4257
    %v4260 = vadd.f32 %v4252, %v4258
    %v4261 = vadd.f32 %v4253, %v4258
    %v4262 = vld [vmem:[%s2] sm:$0xff]
    %v4263 = vld [vmem:[%s2 + $0x8] sm:$0xff]
    %4265 = vset.pattern.permute.xlu0 0
    %4266 = vperm.xlu0 %4265, %v4262
    %v4267 = vpop.permute.xlu0 %4266
    %4270 = vset.pattern.permute.xlu0 0
    %4271 = vperm.xlu0 %4270, %v4263
    %v4272 = vpop.permute.xlu0 %4271
    %v4274 = vmul.f32 %v4260, %v4267
    %v4275 = vmul.f32 %v4261, %v4272
    %4276 = vst.msk [vmem:[#allocation5] sm:$0xff] %vm78, %v4274
    %4277 = vst.msk [vmem:[#allocation5 + $0x8] sm:$0xff] %vm78, %v4275
    // Predicated region
    $region74: #{tpu_custom_call.1} parent=1 // pred_check
      _
    $region75: #{tpu_custom_call.1} parent=1 // pred_check_branch
      %4279 = sbr.rel (0) target = $region77
    $region76: #{tpu_custom_call.1} parent=1 // pred_region
      %s4281 = ssub.s32 256, 256
      %4282 = vsyncadd [#allocation4], %s4281
      %s4283 = sshll.u32 [#allocation5], 4
      %s4284 = int_to_ptr.vmem [resolvable:$true] %s4283
      %4289 = dma.vmem_to_hbm [thread:$0]  %s4284, 256, %s17, [#allocation4], 128, 128, 8
    $region77: #{tpu_custom_call.1} parent=1 // pred_fallthru
      _
    // Predicated region
    $region78: #{tpu_custom_call.1} parent=1 // pred_check
      _
    $region79: #{tpu_custom_call.1} parent=1 // pred_check_branch
      %4291 = sbr.rel (0) target = $region81
    $region80: #{tpu_custom_call.1} parent=1 // pred_region
      %4292 = dma.done [#allocation4], 256
    $region81: #{tpu_custom_call.1} parent=1 // pred_fallthru
      _
    %4293 = vsyncpa [#allocation3], 1
    %4294 = vsyncpa [#allocation4], 1

</llo_original>
